<compile_context>
chip_gen: v7x
topology: tpu7x:2x2x1
jax: 0.10.0
libtpu: 0.0.40
codegen_flags: <defaults>
</compile_context>

<pallas_src>
import functools

import numpy as np

import jax
import jax.numpy as jnp
from jax.experimental import pallas as pl
from jax.experimental.pallas import tpu as pltpu


# ----------------------------- Pallas kernel --------------------------------
def _expansive_block_kernel(x_ref, awt_ref, ah_ref,
                            w1_ref, b1_ref, s1_ref, t1_ref,
                            w2_ref, b2_ref, s2_ref, t2_ref,
                            mask_ref, out_ref, pad0_ref,
                            *, cin, h, hu, wp, halo):
    """Fused bilinear-2x-upsample + (conv3x3 -> ReLU -> BN) x 2 for one image.

    Layouts (spatial flattened on lanes, channels on sublanes):
      x_ref    : (1, Cin*H, W)  bf16  input, rows ordered (channel, src row)
      awt_ref  : (W, Wp)        bf16  W-upsample matrix + L/R zero-pad columns
      ah_ref   : (Hu, H)        bf16  H-upsample matrix
      w1_ref   : (Cmid, 9*Cin)  bf16  conv1 taps, column = (ky*3+kx)*Cin + ci
      b1/s1/t1 : (Cmid, 1)      f32   conv1 bias, BN scale, BN shift
      w2_ref   : (Cout, 9*Cmid) bf16  conv2 taps
      b2/s2/t2 : (Cout, 1)      f32
      mask_ref : (1, W1)        f32   1.0 on interior pixels of conv1's output
      out_ref  : (1, Cout, Npad) f32  conv2 output over the PADDED grid
      pad0_ref : (Cin, W0)      f32   scratch: flattened zero-padded upsample

    Buffer widths "telescope" by 2*halo per conv so each conv's output is
    directly the zero-padded flattened input of the next stage:
      W0 = Npad + 4*halo  ->  W1 = Npad + 2*halo  ->  Npad      (halo = Wp+1)
    """
    # ---- 0. zero the flattened padded upsample buffer (border ring = 0) ----
    pad0_ref[...] = jnp.zeros_like(pad0_ref)

    # ---- 1. bilinear 2x upsample (align_corners=True), separable ----------
    # W direction (+ L/R zero pad) in one lane-acting matmul; H direction with
    # per-channel small matmuls.  No O(H^2*W^2) Kronecker matrix.
    x2 = x_ref[0]                                            # (Cin*H, W) bf16
    u1 = jnp.dot(x2, awt_ref[...],
                 preferred_element_type=jnp.float32)         # (Cin*H, Wp) f32
    u1 = u1.astype(jnp.bfloat16)
    ah = ah_ref[...]                                         # (Hu, H) bf16
    rows = []
    for c in range(cin):                                     # TODO(synk): batch for large Cin
        rows.append(jnp.dot(ah, u1[c * h:(c + 1) * h, :],
                            preferred_element_type=jnp.float32))   # (Hu, Wp)
    u2 = jnp.stack(rows, axis=0)                             # (Cin, Hu, Wp) f32
    # Scatter the Hu upsampled rows into the flattened padded buffer:
    # padded-grid row (i+1) lives at flat offset 2*halo + (i+1)*Wp.
    for i in range(hu):
        off = 2 * halo + (i + 1) * wp
        pad0_ref[:, off:off + wp] = u2[:, i, :]

    # ---- 2. conv3x3 -> ReLU -> BN (x2): im2col + ONE MXU matmul each -------
    def conv3x3_relu_bn(src_bf, wmat, bias, scale, shift, mask=None):
        # src_bf: (C_in, W_in) bf16 flattened padded buffer
        #      -> (C_out, W_in - 2*halo) f32
        w_out = src_bf.shape[1] - 2 * halo
        taps = []
        for ky in range(3):
            for kx in range(3):
                start = ky * wp + kx                       # 0 .. 2*halo
                taps.append(src_bf[:, start:start + w_out])
        col = jnp.concatenate(taps, axis=0)                # (9*C_in, w_out) bf16
        acc = jnp.dot(wmat, col,
                      preferred_element_type=jnp.float32)  # (C_out, w_out) f32
        y = jnp.maximum(acc + bias, 0.0)                   # conv bias + ReLU (f32)
        y = y * scale + shift                              # BatchNorm (inference)
        if mask is not None:
            y = y * mask                                   # zero the border ring
        return y

    src0 = pad0_ref[...].astype(jnp.bfloat16)              # (Cin, W0)
    y1 = conv3x3_relu_bn(src0, w1_ref[...], b1_ref[...], s1_ref[...],
                         t1_ref[...], mask=mask_ref[...])   # (Cmid, W1) f32
    y2 = conv3x3_relu_bn(y1.astype(jnp.bfloat16), w2_ref[...], b2_ref[...],
                         s2_ref[...], t2_ref[...])          # (Cout, Npad) f32

    out_ref[...] = y2.reshape(1, *y2.shape).astype(out_ref.dtype)


# ------------------------- host-side constant setup --------------------------
def _interp_matrix_np(n_in, n_out):
    """1-D bilinear interpolation matrix, align_corners=True, (n_out, n_in)."""
    if n_in == 1:
        return np.ones((n_out, 1), np.float32)
    src = np.arange(n_out, dtype=np.float64) * (n_in - 1) / (n_out - 1)
    lo = np.clip(np.floor(src).astype(np.int64), 0, n_in - 2)
    frac = (src - lo).astype(np.float32)
    A = np.zeros((n_out, n_in), np.float32)
    rows = np.arange(n_out)
    A[rows, lo] += 1.0 - frac
    A[rows, lo + 1] += frac
    return A


@functools.lru_cache(maxsize=None)
def _expansive_constants(H, W):
    """Cached numpy constants: interp matrices, interior mask, dimensions."""
    Hu, Wu = 2 * H, 2 * W
    Hp, Wp = Hu + 2, Wu + 2          # +1 zero-pad ring for the 3x3 convs
    npad = Hp * Wp
    halo = Wp + 1                    # flat offset of the centre conv tap
    w0 = npad + 4 * halo             # conv1 source width
    w1 = npad + 2 * halo             # conv1 output / conv2 source width

    ah = _interp_matrix_np(H, Hu)                    # (Hu, H)
    aw = _interp_matrix_np(W, Wu)                    # (Wu, W)
    awt = np.zeros((W, Wp), np.float32)              # W-upsample + zero-pad cols
    awt[:, 1:1 + Wu] = aw.T

    interior = np.zeros((Hp, Wp), np.float32)
    interior[1:1 + Hu, 1:1 + Wu] = 1.0
    mask1 = np.zeros((1, w1), np.float32)            # interior mask, conv1 output
    mask1[0, halo:halo + npad] = interior.reshape(-1)

    dims = dict(Hu=Hu, Wu=Wu, Hp=Hp, Wp=Wp, npad=npad, halo=halo, w0=w0, w1=w1)
    return ah, aw, awt, mask1, dims


# ------------------------------ forward wrapper -------------------------------
def expansive_block_forward(x_nchw, params):
    """Fused expansive_block forward. Input/output in PyTorch NCHW layout."""
    N, Cin, H, W = x_nchw.shape
    Cmid = params['w1'].shape[-1]
    Cout = params['w2'].shape[-1]

    ah_np, _, awt_np, mask1_np, dims = _expansive_constants(H, W)
    Hu, Wu, Hp, Wp = dims['Hu'], dims['Wu'], dims['Hp'], dims['Wp']
    npad, halo, w0, w1 = dims['npad'], dims['halo'], dims['w0'], dims['w1']

    ah = jnp.asarray(ah_np, jnp.bfloat16)
    awt = jnp.asarray(awt_np, jnp.bfloat16)
    mask1 = jnp.asarray(mask1_np, jnp.float32)

    # Conv taps -> (C_out, 9*C_in), tap-major: column = (ky*3+kx)*C_in + ci.
    w1m = jnp.transpose(params['w1'], (3, 0, 1, 2)).reshape(Cmid, 9 * Cin)
    w2m = jnp.transpose(params['w2'], (3, 0, 1, 2)).reshape(Cout, 9 * Cmid)
    w1m = w1m.astype(jnp.bfloat16)
    w2m = w2m.astype(jnp.bfloat16)
    col = lambda v: v.reshape(-1, 1).astype(jnp.float32)

    # Input as (N, Cin*H, W) bf16 (MXU operand dtype).
    x_in = x_nchw.reshape(N, Cin * H, W).astype(jnp.bfloat16)

    def const_spec(shape):
        # TODO(synk): pipeline_mode=pl.Buffered(1) for these never-changing
        # blocks (halves their VMEM double-buffering) when scaling up.
        return pl.BlockSpec(shape, lambda n: (0,) * len(shape))

    kernel = functools.partial(_expansive_block_kernel,
                               cin=Cin, h=H, hu=Hu, wp=Wp, halo=halo)

    out_pad = pl.pallas_call(
        kernel,
        out_shape=jax.ShapeDtypeStruct((N, Cout, npad), jnp.float32),
        grid=(N,),
        in_specs=[
            pl.BlockSpec((1, Cin * H, W), lambda n: (n, 0, 0)),
            const_spec((W, Wp)),
            const_spec((Hu, H)),
            const_spec((Cmid, 9 * Cin)),
            const_spec((Cmid, 1)), const_spec((Cmid, 1)), const_spec((Cmid, 1)),
            const_spec((Cout, 9 * Cmid)),
            const_spec((Cout, 1)), const_spec((Cout, 1)), const_spec((Cout, 1)),
            const_spec((1, w1)),
        ],
        out_specs=pl.BlockSpec((1, Cout, npad), lambda n: (n, 0, 0)),
        scratch_shapes=[pltpu.VMEM((Cin, w0), jnp.float32)],
        compiler_params=pltpu.CompilerParams(
            dimension_semantics=("parallel",),      # megacore-shardable on v7x
            vmem_limit_bytes=32 * 1024 * 1024),
    )(x_in, awt, ah, w1m,
      col(params['b1']), col(params['scale1']), col(params['shift1']),
      w2m, col(params['b2']), col(params['scale2']), col(params['shift2']),
      mask1)

    # Drop the zero-padding ring: (N, Cout, Hp*Wp) -> (N, Cout, 2H, 2W).
    return out_pad.reshape(N, Cout, Hp, Wp)[:, :, 1:1 + Hu, 1:1 + Wu]


# --------------------------- pure-JAX reference ------------------------------
def _ref_forward(x_nchw, params):
    N, C, H, W = x_nchw.shape
    x = jnp.transpose(x_nchw, (0, 2, 3, 1))                 # NHWC, f32
    Ah = jnp.asarray(_interp_matrix_np(H, 2 * H))
    Aw = jnp.asarray(_interp_matrix_np(W, 2 * W))
    up = jnp.einsum('nhwc,Hh,Ww->nHWc', x, Ah, Aw)          # bilinear 2x, align_corners

    def block(z, w, b, scale, shift):
        y = jax.lax.conv_general_dilated(
            z, w, window_strides=(1, 1), padding='SAME',
            dimension_numbers=('NHWC', 'HWIO', 'NHWC')) + b
        y = jnp.maximum(y, 0.0)
        return y * scale + shift

    y = block(up, params['w1'], params['b1'], params['scale1'], params['shift1'])
    y = block(y, params['w2'], params['b2'], params['scale2'], params['shift2'])
    return jnp.transpose(y, (0, 3, 1, 2))


# ------------------------------ param init -----------------------------------
def init_params(key, cin, cmid, cout):
    ks = jax.random.split(key, 8)
    eps = 1e-5

    def conv_init(kw, kb, ci, co):
        bound = 1.0 / jnp.sqrt(ci * 9.0)
        w = jax.random.uniform(kw, (3, 3, ci, co), jnp.float32, -bound, bound)
        b = jax.random.uniform(kb, (co,), jnp.float32, -bound, bound)
        return w, b

    def bn_init(kg, kb, c):
        gamma = 1.0 + 0.1 * jax.random.normal(kg, (c,), jnp.float32)
        beta = 0.1 * jax.random.normal(kb, (c,), jnp.float32)
        running_mean = jnp.zeros((c,), jnp.float32)
        running_var = jnp.ones((c,), jnp.float32)
        scale = gamma / jnp.sqrt(running_var + eps)
        shift = beta - running_mean * scale
        return scale, shift

    w1, b1 = conv_init(ks[0], ks[1], cin, cmid)
    scale1, shift1 = bn_init(ks[2], ks[3], cmid)
    w2, b2 = conv_init(ks[4], ks[5], cmid, cout)
    scale2, shift2 = bn_init(ks[6], ks[7], cout)
    return dict(w1=w1, b1=b1, scale1=scale1, shift1=shift1,
                w2=w2, b2=b2, scale2=scale2, shift2=shift2)


# --------------------------------- main ---------------------------------------
if __name__ == "__main__":
    key = jax.random.PRNGKey(0)
    k_x, k_p = jax.random.split(key)

    N, Cin, H, W = 2, 4, 16, 16
    Cmid, Cout = 8, 4

    x = jax.random.normal(k_x, (N, Cin, H, W), jnp.float32)
    params = init_params(k_p, Cin, Cmid, Cout)

    out = jax.block_until_ready(expansive_block_forward(x, params))
    ref = jax.block_until_ready(_ref_forward(x, params))

    assert out.shape == (N, Cout, 2 * H, 2 * W), out.shape
    max_err = float(jnp.max(jnp.abs(out - ref)))
    # bf16 MXU operands (per perf review) vs the f32-ish XLA reference: use a
    # bf16-level tolerance.  Observed errors are ~1e-2; 5e-2 gives headroom.
    assert jnp.allclose(out, ref, rtol=5e-2, atol=5e-2), max_err

    print("KERNEL_OK")
</pallas_src>

<mosaic_0001>
module attributes {stable_mosaic.version = 11 : i64} {
  func.func @_expansive_block_kernel(%arg0: i32, %arg1: memref<1x64x16xbf16, #tpu.memory_space<vmem>>, %arg2: memref<16x34xbf16, #tpu.memory_space<vmem>>, %arg3: memref<32x16xbf16, #tpu.memory_space<vmem>>, %arg4: memref<8x36xbf16, #tpu.memory_space<vmem>>, %arg5: memref<8x1xf32, #tpu.memory_space<vmem>>, %arg6: memref<8x1xf32, #tpu.memory_space<vmem>>, %arg7: memref<8x1xf32, #tpu.memory_space<vmem>>, %arg8: memref<4x72xbf16, #tpu.memory_space<vmem>>, %arg9: memref<4x1xf32, #tpu.memory_space<vmem>>, %arg10: memref<4x1xf32, #tpu.memory_space<vmem>>, %arg11: memref<4x1xf32, #tpu.memory_space<vmem>>, %arg12: memref<1x1226xf32, #tpu.memory_space<vmem>>, %arg13: memref<1x4x1156xf32, #tpu.memory_space<vmem>>, %arg14: memref<4x1296xf32, #tpu.memory_space<vmem>>) attributes {dimension_semantics = [#tpu.dimension_semantics<parallel>], iteration_bounds = array<i64: 2>, scalar_prefetch = 0 : i64, scratch_operands = 1 : i64, tpu.core_type = #tpu.core_type<tc>, window_params = [{transform_indices = @transform_0, window_bounds = array<i64: 1, 64, 16>}, {pipeline_mode = #tpu.pipeline_mode<synchronous>, transform_indices = @transform_1, window_bounds = array<i64: 16, 34>}, {pipeline_mode = #tpu.pipeline_mode<synchronous>, transform_indices = @transform_2, window_bounds = array<i64: 32, 16>}, {pipeline_mode = #tpu.pipeline_mode<synchronous>, transform_indices = @transform_3, window_bounds = array<i64: 8, 36>}, {pipeline_mode = #tpu.pipeline_mode<synchronous>, transform_indices = @transform_4, window_bounds = array<i64: 8, 1>}, {pipeline_mode = #tpu.pipeline_mode<synchronous>, transform_indices = @transform_5, window_bounds = array<i64: 8, 1>}, {pipeline_mode = #tpu.pipeline_mode<synchronous>, transform_indices = @transform_6, window_bounds = array<i64: 8, 1>}, {pipeline_mode = #tpu.pipeline_mode<synchronous>, transform_indices = @transform_7, window_bounds = array<i64: 4, 72>}, {pipeline_mode = #tpu.pipeline_mode<synchronous>, transform_indices = @transform_8, window_bounds = array<i64: 4, 1>}, {pipeline_mode = #tpu.pipeline_mode<synchronous>, transform_indices = @transform_9, window_bounds = array<i64: 4, 1>}, {pipeline_mode = #tpu.pipeline_mode<synchronous>, transform_indices = @transform_10, window_bounds = array<i64: 4, 1>}, {pipeline_mode = #tpu.pipeline_mode<synchronous>, transform_indices = @transform_11, window_bounds = array<i64: 1, 1226>}, {transform_indices = @transform_12, window_bounds = array<i64: 1, 4, 1156>}]} {
    %cst = arith.constant 0.000000e+00 : f32
    %0 = vector.broadcast %cst : f32 to vector<4x1296xf32>
    %c0 = arith.constant 0 : index
    %c0_0 = arith.constant 0 : index
    %1 = vector.load %arg14[%c0, %c0_0] : memref<4x1296xf32, #tpu.memory_space<vmem>>, vector<4x1296xf32>
    tpu.vector_store %arg14[%c0, %c0_0], %0 {strides = array<i32>} : memref<4x1296xf32, #tpu.memory_space<vmem>>, vector<4x1296xf32>,
    %c0_1 = arith.constant 0 : index
    %c0_2 = arith.constant 0 : index
    %c0_3 = arith.constant 0 : index
    %2 = vector.load %arg1[%c0_1, %c0_2, %c0_3] : memref<1x64x16xbf16, #tpu.memory_space<vmem>>, vector<1x64x16xbf16>
    %3 = vector.shape_cast %2 : vector<1x64x16xbf16> to vector<64x16xbf16>
    %c0_4 = arith.constant 0 : index
    %c0_5 = arith.constant 0 : index
    %4 = vector.load %arg2[%c0_4, %c0_5] : memref<16x34xbf16, #tpu.memory_space<vmem>>, vector<16x34xbf16>
    %cst_6 = arith.constant dense<0.000000e+00> : vector<64x34xf32>
    %5 = tpu.matmul %3, %4, %cst_6 {dimension_numbers = #tpu.dot_dimension_numbers<[1], [0], [0], [1], [0, 0, 1, 1], [], []>} : vector<64x16xbf16>, vector<16x34xbf16>, vector<64x34xf32> -> vector<64x34xf32>
    %6 = arith.truncf %5 : vector<64x34xf32> to vector<64x34xbf16>
    %c0_7 = arith.constant 0 : index
    %c0_8 = arith.constant 0 : index
    %7 = vector.load %arg3[%c0_7, %c0_8] : memref<32x16xbf16, #tpu.memory_space<vmem>>, vector<32x16xbf16>
    %8 = vector.extract_strided_slice %6 {offsets = [0, 0], sizes = [16, 34], strides = [1, 1]} : vector<64x34xbf16> to vector<16x34xbf16>
    %cst_9 = arith.constant dense<0.000000e+00> : vector<32x34xf32>
    %9 = tpu.matmul %7, %8, %cst_9 {dimension_numbers = #tpu.dot_dimension_numbers<[1], [0], [0], [1], [0, 0, 1, 1], [], []>} : vector<32x16xbf16>, vector<16x34xbf16>, vector<32x34xf32> -> vector<32x34xf32>
    %10 = vector.extract_strided_slice %6 {offsets = [16, 0], sizes = [16, 34], strides = [1, 1]} : vector<64x34xbf16> to vector<16x34xbf16>
    %cst_10 = arith.constant dense<0.000000e+00> : vector<32x34xf32>
    %11 = tpu.matmul %7, %10, %cst_10 {dimension_numbers = #tpu.dot_dimension_numbers<[1], [0], [0], [1], [0, 0, 1, 1], [], []>} : vector<32x16xbf16>, vector<16x34xbf16>, vector<32x34xf32> -> vector<32x34xf32>
    %12 = vector.extract_strided_slice %6 {offsets = [32, 0], sizes = [16, 34], strides = [1, 1]} : vector<64x34xbf16> to vector<16x34xbf16>
    %cst_11 = arith.constant dense<0.000000e+00> : vector<32x34xf32>
    %13 = tpu.matmul %7, %12, %cst_11 {dimension_numbers = #tpu.dot_dimension_numbers<[1], [0], [0], [1], [0, 0, 1, 1], [], []>} : vector<32x16xbf16>, vector<16x34xbf16>, vector<32x34xf32> -> vector<32x34xf32>
    %14 = vector.extract_strided_slice %6 {offsets = [48, 0], sizes = [16, 34], strides = [1, 1]} : vector<64x34xbf16> to vector<16x34xbf16>
    %cst_12 = arith.constant dense<0.000000e+00> : vector<32x34xf32>
    %15 = tpu.matmul %7, %14, %cst_12 {dimension_numbers = #tpu.dot_dimension_numbers<[1], [0], [0], [1], [0, 0, 1, 1], [], []>} : vector<32x16xbf16>, vector<16x34xbf16>, vector<32x34xf32> -> vector<32x34xf32>
    %16 = vector.shape_cast %9 : vector<32x34xf32> to vector<1x32x34xf32>
    %17 = vector.shape_cast %11 : vector<32x34xf32> to vector<1x32x34xf32>
    %18 = vector.shape_cast %13 : vector<32x34xf32> to vector<1x32x34xf32>
    %19 = vector.shape_cast %15 : vector<32x34xf32> to vector<1x32x34xf32>
    %20 = tpu.concatenate %16, %17, %18, %19 in 0 : vector<1x32x34xf32>, vector<1x32x34xf32>, vector<1x32x34xf32>, vector<1x32x34xf32> -> vector<4x32x34xf32>
    %21 = vector.extract_strided_slice %20 {offsets = [0, 0, 0], sizes = [4, 1, 34], strides = [1, 1, 1]} : vector<4x32x34xf32> to vector<4x1x34xf32>
    %22 = vector.shape_cast %21 : vector<4x1x34xf32> to vector<4x34xf32>
    %c0_13 = arith.constant 0 : index
    %c104 = arith.constant 104 : index
    %23 = vector.load %arg14[%c0_13, %c104] : memref<4x1296xf32, #tpu.memory_space<vmem>>, vector<4x34xf32>
    tpu.vector_store %arg14[%c0_13, %c104], %22 {strides = array<i32>} : memref<4x1296xf32, #tpu.memory_space<vmem>>, vector<4x34xf32>,
    %24 = vector.extract_strided_slice %20 {offsets = [0, 1, 0], sizes = [4, 1, 34], strides = [1, 1, 1]} : vector<4x32x34xf32> to vector<4x1x34xf32>
    %25 = vector.shape_cast %24 : vector<4x1x34xf32> to vector<4x34xf32>
    %c0_14 = arith.constant 0 : index
    %c138 = arith.constant 138 : index
    %26 = vector.load %arg14[%c0_14, %c138] : memref<4x1296xf32, #tpu.memory_space<vmem>>, vector<4x34xf32>
    tpu.vector_store %arg14[%c0_14, %c138], %25 {strides = array<i32>} : memref<4x1296xf32, #tpu.memory_space<vmem>>, vector<4x34xf32>,
    %27 = vector.extract_strided_slice %20 {offsets = [0, 2, 0], sizes = [4, 1, 34], strides = [1, 1, 1]} : vector<4x32x34xf32> to vector<4x1x34xf32>
    %28 = vector.shape_cast %27 : vector<4x1x34xf32> to vector<4x34xf32>
    %c0_15 = arith.constant 0 : index
    %c172 = arith.constant 172 : index
    %29 = vector.load %arg14[%c0_15, %c172] : memref<4x1296xf32, #tpu.memory_space<vmem>>, vector<4x34xf32>
    tpu.vector_store %arg14[%c0_15, %c172], %28 {strides = array<i32>} : memref<4x1296xf32, #tpu.memory_space<vmem>>, vector<4x34xf32>,
    %30 = vector.extract_strided_slice %20 {offsets = [0, 3, 0], sizes = [4, 1, 34], strides = [1, 1, 1]} : vector<4x32x34xf32> to vector<4x1x34xf32>
    %31 = vector.shape_cast %30 : vector<4x1x34xf32> to vector<4x34xf32>
    %c0_16 = arith.constant 0 : index
    %c206 = arith.constant 206 : index
    %32 = vector.load %arg14[%c0_16, %c206] : memref<4x1296xf32, #tpu.memory_space<vmem>>, vector<4x34xf32>
    tpu.vector_store %arg14[%c0_16, %c206], %31 {strides = array<i32>} : memref<4x1296xf32, #tpu.memory_space<vmem>>, vector<4x34xf32>,
    %33 = vector.extract_strided_slice %20 {offsets = [0, 4, 0], sizes = [4, 1, 34], strides = [1, 1, 1]} : vector<4x32x34xf32> to vector<4x1x34xf32>
    %34 = vector.shape_cast %33 : vector<4x1x34xf32> to vector<4x34xf32>
    %c0_17 = arith.constant 0 : index
    %c240 = arith.constant 240 : index
    %35 = vector.load %arg14[%c0_17, %c240] : memref<4x1296xf32, #tpu.memory_space<vmem>>, vector<4x34xf32>
    tpu.vector_store %arg14[%c0_17, %c240], %34 {strides = array<i32>} : memref<4x1296xf32, #tpu.memory_space<vmem>>, vector<4x34xf32>,
    %36 = vector.extract_strided_slice %20 {offsets = [0, 5, 0], sizes = [4, 1, 34], strides = [1, 1, 1]} : vector<4x32x34xf32> to vector<4x1x34xf32>
    %37 = vector.shape_cast %36 : vector<4x1x34xf32> to vector<4x34xf32>
    %c0_18 = arith.constant 0 : index
    %c274 = arith.constant 274 : index
    %38 = vector.load %arg14[%c0_18, %c274] : memref<4x1296xf32, #tpu.memory_space<vmem>>, vector<4x34xf32>
    tpu.vector_store %arg14[%c0_18, %c274], %37 {strides = array<i32>} : memref<4x1296xf32, #tpu.memory_space<vmem>>, vector<4x34xf32>,
    %39 = vector.extract_strided_slice %20 {offsets = [0, 6, 0], sizes = [4, 1, 34], strides = [1, 1, 1]} : vector<4x32x34xf32> to vector<4x1x34xf32>
    %40 = vector.shape_cast %39 : vector<4x1x34xf32> to vector<4x34xf32>
    %c0_19 = arith.constant 0 : index
    %c308 = arith.constant 308 : index
    %41 = vector.load %arg14[%c0_19, %c308] : memref<4x1296xf32, #tpu.memory_space<vmem>>, vector<4x34xf32>
    tpu.vector_store %arg14[%c0_19, %c308], %40 {strides = array<i32>} : memref<4x1296xf32, #tpu.memory_space<vmem>>, vector<4x34xf32>,
    %42 = vector.extract_strided_slice %20 {offsets = [0, 7, 0], sizes = [4, 1, 34], strides = [1, 1, 1]} : vector<4x32x34xf32> to vector<4x1x34xf32>
    %43 = vector.shape_cast %42 : vector<4x1x34xf32> to vector<4x34xf32>
    %c0_20 = arith.constant 0 : index
    %c342 = arith.constant 342 : index
    %44 = vector.load %arg14[%c0_20, %c342] : memref<4x1296xf32, #tpu.memory_space<vmem>>, vector<4x34xf32>
    tpu.vector_store %arg14[%c0_20, %c342], %43 {strides = array<i32>} : memref<4x1296xf32, #tpu.memory_space<vmem>>, vector<4x34xf32>,
    %45 = vector.extract_strided_slice %20 {offsets = [0, 8, 0], sizes = [4, 1, 34], strides = [1, 1, 1]} : vector<4x32x34xf32> to vector<4x1x34xf32>
    %46 = vector.shape_cast %45 : vector<4x1x34xf32> to vector<4x34xf32>
    %c0_21 = arith.constant 0 : index
    %c376 = arith.constant 376 : index
    %47 = vector.load %arg14[%c0_21, %c376] : memref<4x1296xf32, #tpu.memory_space<vmem>>, vector<4x34xf32>
    tpu.vector_store %arg14[%c0_21, %c376], %46 {strides = array<i32>} : memref<4x1296xf32, #tpu.memory_space<vmem>>, vector<4x34xf32>,
    %48 = vector.extract_strided_slice %20 {offsets = [0, 9, 0], sizes = [4, 1, 34], strides = [1, 1, 1]} : vector<4x32x34xf32> to vector<4x1x34xf32>
    %49 = vector.shape_cast %48 : vector<4x1x34xf32> to vector<4x34xf32>
    %c0_22 = arith.constant 0 : index
    %c410 = arith.constant 410 : index
    %50 = vector.load %arg14[%c0_22, %c410] : memref<4x1296xf32, #tpu.memory_space<vmem>>, vector<4x34xf32>
    tpu.vector_store %arg14[%c0_22, %c410], %49 {strides = array<i32>} : memref<4x1296xf32, #tpu.memory_space<vmem>>, vector<4x34xf32>,
    %51 = vector.extract_strided_slice %20 {offsets = [0, 10, 0], sizes = [4, 1, 34], strides = [1, 1, 1]} : vector<4x32x34xf32> to vector<4x1x34xf32>
    %52 = vector.shape_cast %51 : vector<4x1x34xf32> to vector<4x34xf32>
    %c0_23 = arith.constant 0 : index
    %c444 = arith.constant 444 : index
    %53 = vector.load %arg14[%c0_23, %c444] : memref<4x1296xf32, #tpu.memory_space<vmem>>, vector<4x34xf32>
    tpu.vector_store %arg14[%c0_23, %c444], %52 {strides = array<i32>} : memref<4x1296xf32, #tpu.memory_space<vmem>>, vector<4x34xf32>,
    %54 = vector.extract_strided_slice %20 {offsets = [0, 11, 0], sizes = [4, 1, 34], strides = [1, 1, 1]} : vector<4x32x34xf32> to vector<4x1x34xf32>
    %55 = vector.shape_cast %54 : vector<4x1x34xf32> to vector<4x34xf32>
    %c0_24 = arith.constant 0 : index
    %c478 = arith.constant 478 : index
    %56 = vector.load %arg14[%c0_24, %c478] : memref<4x1296xf32, #tpu.memory_space<vmem>>, vector<4x34xf32>
    tpu.vector_store %arg14[%c0_24, %c478], %55 {strides = array<i32>} : memref<4x1296xf32, #tpu.memory_space<vmem>>, vector<4x34xf32>,
    %57 = vector.extract_strided_slice %20 {offsets = [0, 12, 0], sizes = [4, 1, 34], strides = [1, 1, 1]} : vector<4x32x34xf32> to vector<4x1x34xf32>
    %58 = vector.shape_cast %57 : vector<4x1x34xf32> to vector<4x34xf32>
    %c0_25 = arith.constant 0 : index
    %c512 = arith.constant 512 : index
    %59 = vector.load %arg14[%c0_25, %c512] : memref<4x1296xf32, #tpu.memory_space<vmem>>, vector<4x34xf32>
    tpu.vector_store %arg14[%c0_25, %c512], %58 {strides = array<i32>} : memref<4x1296xf32, #tpu.memory_space<vmem>>, vector<4x34xf32>,
    %60 = vector.extract_strided_slice %20 {offsets = [0, 13, 0], sizes = [4, 1, 34], strides = [1, 1, 1]} : vector<4x32x34xf32> to vector<4x1x34xf32>
    %61 = vector.shape_cast %60 : vector<4x1x34xf32> to vector<4x34xf32>
    %c0_26 = arith.constant 0 : index
    %c546 = arith.constant 546 : index
    %62 = vector.load %arg14[%c0_26, %c546] : memref<4x1296xf32, #tpu.memory_space<vmem>>, vector<4x34xf32>
    tpu.vector_store %arg14[%c0_26, %c546], %61 {strides = array<i32>} : memref<4x1296xf32, #tpu.memory_space<vmem>>, vector<4x34xf32>,
    %63 = vector.extract_strided_slice %20 {offsets = [0, 14, 0], sizes = [4, 1, 34], strides = [1, 1, 1]} : vector<4x32x34xf32> to vector<4x1x34xf32>
    %64 = vector.shape_cast %63 : vector<4x1x34xf32> to vector<4x34xf32>
    %c0_27 = arith.constant 0 : index
    %c580 = arith.constant 580 : index
    %65 = vector.load %arg14[%c0_27, %c580] : memref<4x1296xf32, #tpu.memory_space<vmem>>, vector<4x34xf32>
    tpu.vector_store %arg14[%c0_27, %c580], %64 {strides = array<i32>} : memref<4x1296xf32, #tpu.memory_space<vmem>>, vector<4x34xf32>,
    %66 = vector.extract_strided_slice %20 {offsets = [0, 15, 0], sizes = [4, 1, 34], strides = [1, 1, 1]} : vector<4x32x34xf32> to vector<4x1x34xf32>
    %67 = vector.shape_cast %66 : vector<4x1x34xf32> to vector<4x34xf32>
    %c0_28 = arith.constant 0 : index
    %c614 = arith.constant 614 : index
    %68 = vector.load %arg14[%c0_28, %c614] : memref<4x1296xf32, #tpu.memory_space<vmem>>, vector<4x34xf32>
    tpu.vector_store %arg14[%c0_28, %c614], %67 {strides = array<i32>} : memref<4x1296xf32, #tpu.memory_space<vmem>>, vector<4x34xf32>,
    %69 = vector.extract_strided_slice %20 {offsets = [0, 16, 0], sizes = [4, 1, 34], strides = [1, 1, 1]} : vector<4x32x34xf32> to vector<4x1x34xf32>
    %70 = vector.shape_cast %69 : vector<4x1x34xf32> to vector<4x34xf32>
    %c0_29 = arith.constant 0 : index
    %c648 = arith.constant 648 : index
    %71 = vector.load %arg14[%c0_29, %c648] : memref<4x1296xf32, #tpu.memory_space<vmem>>, vector<4x34xf32>
    tpu.vector_store %arg14[%c0_29, %c648], %70 {strides = array<i32>} : memref<4x1296xf32, #tpu.memory_space<vmem>>, vector<4x34xf32>,
    %72 = vector.extract_strided_slice %20 {offsets = [0, 17, 0], sizes = [4, 1, 34], strides = [1, 1, 1]} : vector<4x32x34xf32> to vector<4x1x34xf32>
    %73 = vector.shape_cast %72 : vector<4x1x34xf32> to vector<4x34xf32>
    %c0_30 = arith.constant 0 : index
    %c682 = arith.constant 682 : index
    %74 = vector.load %arg14[%c0_30, %c682] : memref<4x1296xf32, #tpu.memory_space<vmem>>, vector<4x34xf32>
    tpu.vector_store %arg14[%c0_30, %c682], %73 {strides = array<i32>} : memref<4x1296xf32, #tpu.memory_space<vmem>>, vector<4x34xf32>,
    %75 = vector.extract_strided_slice %20 {offsets = [0, 18, 0], sizes = [4, 1, 34], strides = [1, 1, 1]} : vector<4x32x34xf32> to vector<4x1x34xf32>
    %76 = vector.shape_cast %75 : vector<4x1x34xf32> to vector<4x34xf32>
    %c0_31 = arith.constant 0 : index
    %c716 = arith.constant 716 : index
    %77 = vector.load %arg14[%c0_31, %c716] : memref<4x1296xf32, #tpu.memory_space<vmem>>, vector<4x34xf32>
    tpu.vector_store %arg14[%c0_31, %c716], %76 {strides = array<i32>} : memref<4x1296xf32, #tpu.memory_space<vmem>>, vector<4x34xf32>,
    %78 = vector.extract_strided_slice %20 {offsets = [0, 19, 0], sizes = [4, 1, 34], strides = [1, 1, 1]} : vector<4x32x34xf32> to vector<4x1x34xf32>
    %79 = vector.shape_cast %78 : vector<4x1x34xf32> to vector<4x34xf32>
    %c0_32 = arith.constant 0 : index
    %c750 = arith.constant 750 : index
    %80 = vector.load %arg14[%c0_32, %c750] : memref<4x1296xf32, #tpu.memory_space<vmem>>, vector<4x34xf32>
    tpu.vector_store %arg14[%c0_32, %c750], %79 {strides = array<i32>} : memref<4x1296xf32, #tpu.memory_space<vmem>>, vector<4x34xf32>,
    %81 = vector.extract_strided_slice %20 {offsets = [0, 20, 0], sizes = [4, 1, 34], strides = [1, 1, 1]} : vector<4x32x34xf32> to vector<4x1x34xf32>
    %82 = vector.shape_cast %81 : vector<4x1x34xf32> to vector<4x34xf32>
    %c0_33 = arith.constant 0 : index
    %c784 = arith.constant 784 : index
    %83 = vector.load %arg14[%c0_33, %c784] : memref<4x1296xf32, #tpu.memory_space<vmem>>, vector<4x34xf32>
    tpu.vector_store %arg14[%c0_33, %c784], %82 {strides = array<i32>} : memref<4x1296xf32, #tpu.memory_space<vmem>>, vector<4x34xf32>,
    %84 = vector.extract_strided_slice %20 {offsets = [0, 21, 0], sizes = [4, 1, 34], strides = [1, 1, 1]} : vector<4x32x34xf32> to vector<4x1x34xf32>
    %85 = vector.shape_cast %84 : vector<4x1x34xf32> to vector<4x34xf32>
    %c0_34 = arith.constant 0 : index
    %c818 = arith.constant 818 : index
    %86 = vector.load %arg14[%c0_34, %c818] : memref<4x1296xf32, #tpu.memory_space<vmem>>, vector<4x34xf32>
    tpu.vector_store %arg14[%c0_34, %c818], %85 {strides = array<i32>} : memref<4x1296xf32, #tpu.memory_space<vmem>>, vector<4x34xf32>,
    %87 = vector.extract_strided_slice %20 {offsets = [0, 22, 0], sizes = [4, 1, 34], strides = [1, 1, 1]} : vector<4x32x34xf32> to vector<4x1x34xf32>
    %88 = vector.shape_cast %87 : vector<4x1x34xf32> to vector<4x34xf32>
    %c0_35 = arith.constant 0 : index
    %c852 = arith.constant 852 : index
    %89 = vector.load %arg14[%c0_35, %c852] : memref<4x1296xf32, #tpu.memory_space<vmem>>, vector<4x34xf32>
    tpu.vector_store %arg14[%c0_35, %c852], %88 {strides = array<i32>} : memref<4x1296xf32, #tpu.memory_space<vmem>>, vector<4x34xf32>,
    %90 = vector.extract_strided_slice %20 {offsets = [0, 23, 0], sizes = [4, 1, 34], strides = [1, 1, 1]} : vector<4x32x34xf32> to vector<4x1x34xf32>
    %91 = vector.shape_cast %90 : vector<4x1x34xf32> to vector<4x34xf32>
    %c0_36 = arith.constant 0 : index
    %c886 = arith.constant 886 : index
    %92 = vector.load %arg14[%c0_36, %c886] : memref<4x1296xf32, #tpu.memory_space<vmem>>, vector<4x34xf32>
    tpu.vector_store %arg14[%c0_36, %c886], %91 {strides = array<i32>} : memref<4x1296xf32, #tpu.memory_space<vmem>>, vector<4x34xf32>,
    %93 = vector.extract_strided_slice %20 {offsets = [0, 24, 0], sizes = [4, 1, 34], strides = [1, 1, 1]} : vector<4x32x34xf32> to vector<4x1x34xf32>
    %94 = vector.shape_cast %93 : vector<4x1x34xf32> to vector<4x34xf32>
    %c0_37 = arith.constant 0 : index
    %c920 = arith.constant 920 : index
    %95 = vector.load %arg14[%c0_37, %c920] : memref<4x1296xf32, #tpu.memory_space<vmem>>, vector<4x34xf32>
    tpu.vector_store %arg14[%c0_37, %c920], %94 {strides = array<i32>} : memref<4x1296xf32, #tpu.memory_space<vmem>>, vector<4x34xf32>,
    %96 = vector.extract_strided_slice %20 {offsets = [0, 25, 0], sizes = [4, 1, 34], strides = [1, 1, 1]} : vector<4x32x34xf32> to vector<4x1x34xf32>
    %97 = vector.shape_cast %96 : vector<4x1x34xf32> to vector<4x34xf32>
    %c0_38 = arith.constant 0 : index
    %c954 = arith.constant 954 : index
    %98 = vector.load %arg14[%c0_38, %c954] : memref<4x1296xf32, #tpu.memory_space<vmem>>, vector<4x34xf32>
    tpu.vector_store %arg14[%c0_38, %c954], %97 {strides = array<i32>} : memref<4x1296xf32, #tpu.memory_space<vmem>>, vector<4x34xf32>,
    %99 = vector.extract_strided_slice %20 {offsets = [0, 26, 0], sizes = [4, 1, 34], strides = [1, 1, 1]} : vector<4x32x34xf32> to vector<4x1x34xf32>
    %100 = vector.shape_cast %99 : vector<4x1x34xf32> to vector<4x34xf32>
    %c0_39 = arith.constant 0 : index
    %c988 = arith.constant 988 : index
    %101 = vector.load %arg14[%c0_39, %c988] : memref<4x1296xf32, #tpu.memory_space<vmem>>, vector<4x34xf32>
    tpu.vector_store %arg14[%c0_39, %c988], %100 {strides = array<i32>} : memref<4x1296xf32, #tpu.memory_space<vmem>>, vector<4x34xf32>,
    %102 = vector.extract_strided_slice %20 {offsets = [0, 27, 0], sizes = [4, 1, 34], strides = [1, 1, 1]} : vector<4x32x34xf32> to vector<4x1x34xf32>
    %103 = vector.shape_cast %102 : vector<4x1x34xf32> to vector<4x34xf32>
    %c0_40 = arith.constant 0 : index
    %c1022 = arith.constant 1022 : index
    %104 = vector.load %arg14[%c0_40, %c1022] : memref<4x1296xf32, #tpu.memory_space<vmem>>, vector<4x34xf32>
    tpu.vector_store %arg14[%c0_40, %c1022], %103 {strides = array<i32>} : memref<4x1296xf32, #tpu.memory_space<vmem>>, vector<4x34xf32>,
    %105 = vector.extract_strided_slice %20 {offsets = [0, 28, 0], sizes = [4, 1, 34], strides = [1, 1, 1]} : vector<4x32x34xf32> to vector<4x1x34xf32>
    %106 = vector.shape_cast %105 : vector<4x1x34xf32> to vector<4x34xf32>
    %c0_41 = arith.constant 0 : index
    %c1056 = arith.constant 1056 : index
    %107 = vector.load %arg14[%c0_41, %c1056] : memref<4x1296xf32, #tpu.memory_space<vmem>>, vector<4x34xf32>
    tpu.vector_store %arg14[%c0_41, %c1056], %106 {strides = array<i32>} : memref<4x1296xf32, #tpu.memory_space<vmem>>, vector<4x34xf32>,
    %108 = vector.extract_strided_slice %20 {offsets = [0, 29, 0], sizes = [4, 1, 34], strides = [1, 1, 1]} : vector<4x32x34xf32> to vector<4x1x34xf32>
    %109 = vector.shape_cast %108 : vector<4x1x34xf32> to vector<4x34xf32>
    %c0_42 = arith.constant 0 : index
    %c1090 = arith.constant 1090 : index
    %110 = vector.load %arg14[%c0_42, %c1090] : memref<4x1296xf32, #tpu.memory_space<vmem>>, vector<4x34xf32>
    tpu.vector_store %arg14[%c0_42, %c1090], %109 {strides = array<i32>} : memref<4x1296xf32, #tpu.memory_space<vmem>>, vector<4x34xf32>,
    %111 = vector.extract_strided_slice %20 {offsets = [0, 30, 0], sizes = [4, 1, 34], strides = [1, 1, 1]} : vector<4x32x34xf32> to vector<4x1x34xf32>
    %112 = vector.shape_cast %111 : vector<4x1x34xf32> to vector<4x34xf32>
    %c0_43 = arith.constant 0 : index
    %c1124 = arith.constant 1124 : index
    %113 = vector.load %arg14[%c0_43, %c1124] : memref<4x1296xf32, #tpu.memory_space<vmem>>, vector<4x34xf32>
    tpu.vector_store %arg14[%c0_43, %c1124], %112 {strides = array<i32>} : memref<4x1296xf32, #tpu.memory_space<vmem>>, vector<4x34xf32>,
    %114 = vector.extract_strided_slice %20 {offsets = [0, 31, 0], sizes = [4, 1, 34], strides = [1, 1, 1]} : vector<4x32x34xf32> to vector<4x1x34xf32>
    %115 = vector.shape_cast %114 : vector<4x1x34xf32> to vector<4x34xf32>
    %c0_44 = arith.constant 0 : index
    %c1158 = arith.constant 1158 : index
    %116 = vector.load %arg14[%c0_44, %c1158] : memref<4x1296xf32, #tpu.memory_space<vmem>>, vector<4x34xf32>
    tpu.vector_store %arg14[%c0_44, %c1158], %115 {strides = array<i32>} : memref<4x1296xf32, #tpu.memory_space<vmem>>, vector<4x34xf32>,
    %c0_45 = arith.constant 0 : index
    %c0_46 = arith.constant 0 : index
    %117 = vector.load %arg14[%c0_45, %c0_46] : memref<4x1296xf32, #tpu.memory_space<vmem>>, vector<4x1296xf32>
    %118 = arith.truncf %117 : vector<4x1296xf32> to vector<4x1296xbf16>
    %c0_47 = arith.constant 0 : index
    %c0_48 = arith.constant 0 : index
    %119 = vector.load %arg4[%c0_47, %c0_48] : memref<8x36xbf16, #tpu.memory_space<vmem>>, vector<8x36xbf16>
    %c0_49 = arith.constant 0 : index
    %c0_50 = arith.constant 0 : index
    %120 = vector.load %arg5[%c0_49, %c0_50] : memref<8x1xf32, #tpu.memory_space<vmem>>, vector<8x1xf32>
    %c0_51 = arith.constant 0 : index
    %c0_52 = arith.constant 0 : index
    %121 = vector.load %arg6[%c0_51, %c0_52] : memref<8x1xf32, #tpu.memory_space<vmem>>, vector<8x1xf32>
    %c0_53 = arith.constant 0 : index
    %c0_54 = arith.constant 0 : index
    %122 = vector.load %arg7[%c0_53, %c0_54] : memref<8x1xf32, #tpu.memory_space<vmem>>, vector<8x1xf32>
    %c0_55 = arith.constant 0 : index
    %c0_56 = arith.constant 0 : index
    %123 = vector.load %arg12[%c0_55, %c0_56] : memref<1x1226xf32, #tpu.memory_space<vmem>>, vector<1x1226xf32>
    %124 = vector.extract_strided_slice %118 {offsets = [0, 0], sizes = [4, 1226], strides = [1, 1]} : vector<4x1296xbf16> to vector<4x1226xbf16>
    %125 = vector.extract_strided_slice %118 {offsets = [0, 1], sizes = [4, 1226], strides = [1, 1]} : vector<4x1296xbf16> to vector<4x1226xbf16>
    %126 = vector.extract_strided_slice %118 {offsets = [0, 2], sizes = [4, 1226], strides = [1, 1]} : vector<4x1296xbf16> to vector<4x1226xbf16>
    %127 = vector.extract_strided_slice %118 {offsets = [0, 34], sizes = [4, 1226], strides = [1, 1]} : vector<4x1296xbf16> to vector<4x1226xbf16>
    %128 = vector.extract_strided_slice %118 {offsets = [0, 35], sizes = [4, 1226], strides = [1, 1]} : vector<4x1296xbf16> to vector<4x1226xbf16>
    %129 = vector.extract_strided_slice %118 {offsets = [0, 36], sizes = [4, 1226], strides = [1, 1]} : vector<4x1296xbf16> to vector<4x1226xbf16>
    %130 = vector.extract_strided_slice %118 {offsets = [0, 68], sizes = [4, 1226], strides = [1, 1]} : vector<4x1296xbf16> to vector<4x1226xbf16>
    %131 = vector.extract_strided_slice %118 {offsets = [0, 69], sizes = [4, 1226], strides = [1, 1]} : vector<4x1296xbf16> to vector<4x1226xbf16>
    %132 = vector.extract_strided_slice %118 {offsets = [0, 70], sizes = [4, 1226], strides = [1, 1]} : vector<4x1296xbf16> to vector<4x1226xbf16>
    %133 = tpu.concatenate %124, %125, %126, %127, %128, %129, %130, %131, %132 in 0 : vector<4x1226xbf16>, vector<4x1226xbf16>, vector<4x1226xbf16>, vector<4x1226xbf16>, vector<4x1226xbf16>, vector<4x1226xbf16>, vector<4x1226xbf16>, vector<4x1226xbf16>, vector<4x1226xbf16> -> vector<36x1226xbf16>
    %cst_57 = arith.constant dense<0.000000e+00> : vector<8x1226xf32>
    %134 = tpu.matmul %119, %133, %cst_57 {dimension_numbers = #tpu.dot_dimension_numbers<[1], [0], [0], [1], [0, 0, 1, 1], [], []>} : vector<8x36xbf16>, vector<36x1226xbf16>, vector<8x1226xf32> -> vector<8x1226xf32>
    %135 = vector.broadcast %120 : vector<8x1xf32> to vector<8x1226xf32>
    %136 = arith.addf %134, %135 : vector<8x1226xf32>
    %cst_58 = arith.constant 0.000000e+00 : f32
    %137 = vector.broadcast %cst_58 : f32 to vector<8x1226xf32>
    %138 = arith.maximumf %136, %137 : vector<8x1226xf32>
    %139 = vector.broadcast %121 : vector<8x1xf32> to vector<8x1226xf32>
    %140 = arith.mulf %138, %139 : vector<8x1226xf32>
    %141 = vector.broadcast %122 : vector<8x1xf32> to vector<8x1226xf32>
    %142 = arith.addf %140, %141 : vector<8x1226xf32>
    %143 = vector.broadcast %123 : vector<1x1226xf32> to vector<8x1226xf32>
    %144 = arith.mulf %142, %143 : vector<8x1226xf32>
    %145 = arith.truncf %144 : vector<8x1226xf32> to vector<8x1226xbf16>
    %c0_59 = arith.constant 0 : index
    %c0_60 = arith.constant 0 : index
    %146 = vector.load %arg8[%c0_59, %c0_60] : memref<4x72xbf16, #tpu.memory_space<vmem>>, vector<4x72xbf16>
    %c0_61 = arith.constant 0 : index
    %c0_62 = arith.constant 0 : index
    %147 = vector.load %arg9[%c0_61, %c0_62] : memref<4x1xf32, #tpu.memory_space<vmem>>, vector<4x1xf32>
    %c0_63 = arith.constant 0 : index
    %c0_64 = arith.constant 0 : index
    %148 = vector.load %arg10[%c0_63, %c0_64] : memref<4x1xf32, #tpu.memory_space<vmem>>, vector<4x1xf32>
    %c0_65 = arith.constant 0 : index
    %c0_66 = arith.constant 0 : index
    %149 = vector.load %arg11[%c0_65, %c0_66] : memref<4x1xf32, #tpu.memory_space<vmem>>, vector<4x1xf32>
    %150 = vector.extract_strided_slice %145 {offsets = [0, 0], sizes = [8, 1156], strides = [1, 1]} : vector<8x1226xbf16> to vector<8x1156xbf16>
    %151 = vector.extract_strided_slice %145 {offsets = [0, 1], sizes = [8, 1156], strides = [1, 1]} : vector<8x1226xbf16> to vector<8x1156xbf16>
    %152 = vector.extract_strided_slice %145 {offsets = [0, 2], sizes = [8, 1156], strides = [1, 1]} : vector<8x1226xbf16> to vector<8x1156xbf16>
    %153 = vector.extract_strided_slice %145 {offsets = [0, 34], sizes = [8, 1156], strides = [1, 1]} : vector<8x1226xbf16> to vector<8x1156xbf16>
    %154 = vector.extract_strided_slice %145 {offsets = [0, 35], sizes = [8, 1156], strides = [1, 1]} : vector<8x1226xbf16> to vector<8x1156xbf16>
    %155 = vector.extract_strided_slice %145 {offsets = [0, 36], sizes = [8, 1156], strides = [1, 1]} : vector<8x1226xbf16> to vector<8x1156xbf16>
    %156 = vector.extract_strided_slice %145 {offsets = [0, 68], sizes = [8, 1156], strides = [1, 1]} : vector<8x1226xbf16> to vector<8x1156xbf16>
    %157 = vector.extract_strided_slice %145 {offsets = [0, 69], sizes = [8, 1156], strides = [1, 1]} : vector<8x1226xbf16> to vector<8x1156xbf16>
    %158 = vector.extract_strided_slice %145 {offsets = [0, 70], sizes = [8, 1156], strides = [1, 1]} : vector<8x1226xbf16> to vector<8x1156xbf16>
    %159 = tpu.concatenate %150, %151, %152, %153, %154, %155, %156, %157, %158 in 0 : vector<8x1156xbf16>, vector<8x1156xbf16>, vector<8x1156xbf16>, vector<8x1156xbf16>, vector<8x1156xbf16>, vector<8x1156xbf16>, vector<8x1156xbf16>, vector<8x1156xbf16>, vector<8x1156xbf16> -> vector<72x1156xbf16>
    %cst_67 = arith.constant dense<0.000000e+00> : vector<4x1156xf32>
    %160 = tpu.matmul %146, %159, %cst_67 {dimension_numbers = #tpu.dot_dimension_numbers<[1], [0], [0], [1], [0, 0, 1, 1], [], []>} : vector<4x72xbf16>, vector<72x1156xbf16>, vector<4x1156xf32> -> vector<4x1156xf32>
    %161 = vector.broadcast %147 : vector<4x1xf32> to vector<4x1156xf32>
    %162 = arith.addf %160, %161 : vector<4x1156xf32>
    %cst_68 = arith.constant 0.000000e+00 : f32
    %163 = vector.broadcast %cst_68 : f32 to vector<4x1156xf32>
    %164 = arith.maximumf %162, %163 : vector<4x1156xf32>
    %165 = vector.broadcast %148 : vector<4x1xf32> to vector<4x1156xf32>
    %166 = arith.mulf %164, %165 : vector<4x1156xf32>
    %167 = vector.broadcast %149 : vector<4x1xf32> to vector<4x1156xf32>
    %168 = arith.addf %166, %167 : vector<4x1156xf32>
    %169 = vector.shape_cast %168 : vector<4x1156xf32> to vector<1x4x1156xf32>
    %c0_69 = arith.constant 0 : index
    %c0_70 = arith.constant 0 : index
    %c0_71 = arith.constant 0 : index
    %170 = vector.load %arg13[%c0_69, %c0_70, %c0_71] : memref<1x4x1156xf32, #tpu.memory_space<vmem>>, vector<1x4x1156xf32>
    tpu.vector_store %arg13[%c0_69, %c0_70, %c0_71], %169 {strides = array<i32>} : memref<1x4x1156xf32, #tpu.memory_space<vmem>>, vector<1x4x1156xf32>,
    return
  }
  func.func @transform_0(%arg0: i32) -> (i32, i32, i32) {
    %c0_i32 = arith.constant 0 : i32
    %c0_i32_0 = arith.constant 0 : i32
    %c0_i32_1 = arith.constant 0 : i32
    return %arg0, %c0_i32, %c0_i32_0 : i32, i32, i32
  }
  func.func @transform_1(%arg0: i32) -> (i32, i32) {
    %c0_i32 = arith.constant 0 : i32
    %c0_i32_0 = arith.constant 0 : i32
    %c0_i32_1 = arith.constant 0 : i32
    return %c0_i32, %c0_i32_0 : i32, i32
  }
  func.func @transform_2(%arg0: i32) -> (i32, i32) {
    %c0_i32 = arith.constant 0 : i32
    %c0_i32_0 = arith.constant 0 : i32
    %c0_i32_1 = arith.constant 0 : i32
    return %c0_i32, %c0_i32_0 : i32, i32
  }
  func.func @transform_3(%arg0: i32) -> (i32, i32) {
    %c0_i32 = arith.constant 0 : i32
    %c0_i32_0 = arith.constant 0 : i32
    %c0_i32_1 = arith.constant 0 : i32
    return %c0_i32, %c0_i32_0 : i32, i32
  }
  func.func @transform_4(%arg0: i32) -> (i32, i32) {
    %c0_i32 = arith.constant 0 : i32
    %c0_i32_0 = arith.constant 0 : i32
    %c0_i32_1 = arith.constant 0 : i32
    return %c0_i32, %c0_i32_0 : i32, i32
  }
  func.func @transform_5(%arg0: i32) -> (i32, i32) {
    %c0_i32 = arith.constant 0 : i32
    %c0_i32_0 = arith.constant 0 : i32
    %c0_i32_1 = arith.constant 0 : i32
    return %c0_i32, %c0_i32_0 : i32, i32
  }
  func.func @transform_6(%arg0: i32) -> (i32, i32) {
    %c0_i32 = arith.constant 0 : i32
    %c0_i32_0 = arith.constant 0 : i32
    %c0_i32_1 = arith.constant 0 : i32
    return %c0_i32, %c0_i32_0 : i32, i32
  }
  func.func @transform_7(%arg0: i32) -> (i32, i32) {
    %c0_i32 = arith.constant 0 : i32
    %c0_i32_0 = arith.constant 0 : i32
    %c0_i32_1 = arith.constant 0 : i32
    return %c0_i32, %c0_i32_0 : i32, i32
  }
  func.func @transform_8(%arg0: i32) -> (i32, i32) {
    %c0_i32 = arith.constant 0 : i32
    %c0_i32_0 = arith.constant 0 : i32
    %c0_i32_1 = arith.constant 0 : i32
    return %c0_i32, %c0_i32_0 : i32, i32
  }
  func.func @transform_9(%arg0: i32) -> (i32, i32) {
    %c0_i32 = arith.constant 0 : i32
    %c0_i32_0 = arith.constant 0 : i32
    %c0_i32_1 = arith.constant 0 : i32
    return %c0_i32, %c0_i32_0 : i32, i32
  }
  func.func @transform_10(%arg0: i32) -> (i32, i32) {
    %c0_i32 = arith.constant 0 : i32
    %c0_i32_0 = arith.constant 0 : i32
    %c0_i32_1 = arith.constant 0 : i32
    return %c0_i32, %c0_i32_0 : i32, i32
  }
  func.func @transform_11(%arg0: i32) -> (i32, i32) {
    %c0_i32 = arith.constant 0 : i32
    %c0_i32_0 = arith.constant 0 : i32
    %c0_i32_1 = arith.constant 0 : i32
    return %c0_i32, %c0_i32_0 : i32, i32
  }
  func.func @transform_12(%arg0: i32) -> (i32, i32, i32) {
    %c0_i32 = arith.constant 0 : i32
    %c0_i32_0 = arith.constant 0 : i32
    %c0_i32_1 = arith.constant 0 : i32
    return %arg0, %c0_i32, %c0_i32_0 : i32, i32, i32
  }
}

</mosaic_0001>

<llo_original>
// kernel: tpu_custom_call.1
$region0: #{tpu_custom_call.1}
  #allocation0 [shape = 'u32[]', space=smem, size = 0x4, offset = 0x4, fixed_abs, tag = 'smem constant byte address 0x4 - core index']
  #allocation1 [shape = 'u32[144,128]{1,0:T(1,128)}', space=vmem, size = 0x12000, scoped, tag = 'internal scratch']
  #allocation2 [shape = 'f32[4,1296]{1,0:T(4,128)}', space=vmem, size = 0x5800, scoped, tag = 'scratch operand']
  %s0 = inlined_call_operand.vmem [shape: bf16[2,64,16], index: 0, kind: input, shape index: {}]
  %s1 = inlined_call_operand.vmem [shape: bf16[16,34], index: 1, kind: input, shape index: {}]
  %s2 = inlined_call_operand.vmem [shape: bf16[32,16], index: 2, kind: input, shape index: {}]
  %s3 = inlined_call_operand.vmem [shape: bf16[8,36], index: 3, kind: input, shape index: {}]
  %s4 = inlined_call_operand.vmem [shape: f32[8,1], index: 4, kind: input, shape index: {}]
  %s5 = inlined_call_operand.vmem [shape: f32[8,1], index: 5, kind: input, shape index: {}]
  %s6 = inlined_call_operand.vmem [shape: f32[8,1], index: 6, kind: input, shape index: {}]
  %s7 = inlined_call_operand.vmem [shape: bf16[4,72], index: 7, kind: input, shape index: {}]
  %s8 = inlined_call_operand.vmem [shape: f32[4,1], index: 8, kind: input, shape index: {}]
  %s9 = inlined_call_operand.vmem [shape: f32[4,1], index: 9, kind: input, shape index: {}]
  %s10 = inlined_call_operand.vmem [shape: f32[4,1], index: 10, kind: input, shape index: {}]
  %s11 = inlined_call_operand.vmem [shape: f32[1,1226], index: 11, kind: input, shape index: {}]
  %s12 = inlined_call_operand.hbm [shape: f32[2,4,1156], index: 12, kind: output, shape index: {}]
  %s13 = sld [smem:[#allocation0]]
  $region81: #{tpu_custom_call.1} parent=0
    _
  %s15 = ssub.s32 1, %s13
  %s16 = scalar_select 0, %s15, %s13
  $region1: #{tpu_custom_call.1} parent=0
    #allocation3 [shape = 'u8[40960]{0}', space=vmem, size = 0xa000, scoped, tag = 'output window, operand 0']
    #allocation4 [shape = 's32[2]{0}', space=sflag, size = 0x8, scoped, tag = 'scoped memory for tpu_custom_call.1']
    %17 = vsyncpa [#allocation4], 0
    %s18 = scalar_lea.sflag [#allocation4], 1
    %19 = vsyncpa %s18, 0
    loop: start=0, step=1, limit=4
    $region2: #{tpu_custom_call.1} parent=1 // loop_pre_header
      _
    $region3: #{tpu_custom_call.1} parent=1 // loop_header
      %s21 = sphi 0, %s25
      %p22 = scmp.ge.s32.totalorder %s21, 4
      %s31 = sphi 0, %s33
      %s34 = sphi 0, %s31
      %s35 = sphi 0, %s34
      %s51 = sphi 0, %s35
      %s55 = sphi 0, %s55
      %s57 = sphi 0, %s55
      %s58 = sphi 0, %s57
      %s72 = sphi 0, %s58
      %s76 = sphi 0, %s76
      %s78 = sphi 0, %s76
      %s79 = sphi 0, %s78
      %s93 = sphi 0, %s79
      %s97 = sphi 0, %s97
      %s99 = sphi 0, %s97
      %s100 = sphi 0, %s99
      %s114 = sphi 0, %s100
      %s118 = sphi 0, %s118
      %s120 = sphi 0, %s118
      %s121 = sphi 0, %s120
      %s135 = sphi 0, %s121
      %s139 = sphi 0, %s139
      %s141 = sphi 0, %s139
      %s142 = sphi 0, %s141
      %s156 = sphi 0, %s142
      %s160 = sphi 0, %s160
      %s162 = sphi 0, %s160
      %s163 = sphi 0, %s162
      %s177 = sphi 0, %s163
      %s181 = sphi 0, %s181
      %s183 = sphi 0, %s181
      %s184 = sphi 0, %s183
      %s198 = sphi 0, %s184
      %s202 = sphi 0, %s202
      %s204 = sphi 0, %s202
      %s205 = sphi 0, %s204
      %s219 = sphi 0, %s205
      %s223 = sphi 0, %s223
      %s225 = sphi 0, %s223
      %s226 = sphi 0, %s225
      %s240 = sphi 0, %s226
      %s244 = sphi 0, %s244
      %s246 = sphi 0, %s244
      %s247 = sphi 0, %s246
      %s261 = sphi 0, %s247
      %s265 = sphi 0, %s265
      %s267 = sphi 0, %s265
      %s268 = sphi 0, %s267
      %s282 = sphi 0, %s268
      %s288 = sphi 0, %s290
      %s291 = sphi 0, %s288
      %s292 = sphi 0, %s291
      %s308 = sphi 0, %s292
    $region4: #{tpu_custom_call.1} parent=1 // loop_header_branch
      %24 = sbr.rel (%p22) target = $region8
    $region5: #{tpu_custom_call.1} parent=1 // loop_body
      %s26 = ssub.s32 %s21, 1
      %s27 = ssub.s32 %s21, 2
      %s28 = sadd.s32 %s21, 1
      %s29 = ssub.s32 %s21, %s28
      %p30 = scmp.eq.s32.totalorder %s29, 0
      %s32 = sadd.s32 %s31, 1
      %s33 = scalar_select %p30, %s31, %s32
      %p36 = pneg %p30
      %p37 = scmp.eq.s32.totalorder %s21, 1
      %p38 = por %p36, %p37
      %p39 = scmp.ne.s32.totalorder %s31, %s34
      %p40 = scmp.eq.s32.totalorder %s21, 0
      %p41 = por %p39, %p40
      %p42 = scmp.ne.s32.totalorder %s31, %s34
      %p43 = scmp.eq.s32.totalorder %s26, 1
      %p44 = por %p42, %p43
      %p45 = scmp.ne.s32.totalorder %s34, %s35
      %p46 = scmp.eq.s32.totalorder %s26, 0
      %p47 = por %p45, %p46
      %p48 = scmp.ne.s32.totalorder %s34, %s35
      %p49 = scmp.eq.s32.totalorder %s27, 1
      %p50 = por %p48, %p49
      %p52 = scmp.ne.s32.totalorder %s35, %s51
      %p53 = scmp.eq.s32.totalorder %s27, 0
      %p54 = por %p52, %p53
      %s56 = sadd.s32 %s55, 1
      %p59 = scmp.eq.s32.totalorder %s21, 1
      %p60 = scmp.ne.s32.totalorder %s55, %s57
      %p61 = scmp.eq.s32.totalorder %s21, 0
      %p62 = por %p60, %p61
      %p63 = scmp.ne.s32.totalorder %s55, %s57
      %p64 = scmp.eq.s32.totalorder %s26, 1
      %p65 = por %p63, %p64
      %p66 = scmp.ne.s32.totalorder %s57, %s58
      %p67 = scmp.eq.s32.totalorder %s26, 0
      %p68 = por %p66, %p67
      %p69 = scmp.ne.s32.totalorder %s57, %s58
      %p70 = scmp.eq.s32.totalorder %s27, 1
      %p71 = por %p69, %p70
      %p73 = scmp.ne.s32.totalorder %s58, %s72
      %p74 = scmp.eq.s32.totalorder %s27, 0
      %p75 = por %p73, %p74
      %s77 = sadd.s32 %s76, 1
      %p80 = scmp.eq.s32.totalorder %s21, 1
      %p81 = scmp.ne.s32.totalorder %s76, %s78
      %p82 = scmp.eq.s32.totalorder %s21, 0
      %p83 = por %p81, %p82
      %p84 = scmp.ne.s32.totalorder %s76, %s78
      %p85 = scmp.eq.s32.totalorder %s26, 1
      %p86 = por %p84, %p85
      %p87 = scmp.ne.s32.totalorder %s78, %s79
      %p88 = scmp.eq.s32.totalorder %s26, 0
      %p89 = por %p87, %p88
      %p90 = scmp.ne.s32.totalorder %s78, %s79
      %p91 = scmp.eq.s32.totalorder %s27, 1
      %p92 = por %p90, %p91
      %p94 = scmp.ne.s32.totalorder %s79, %s93
      %p95 = scmp.eq.s32.totalorder %s27, 0
      %p96 = por %p94, %p95
      %s98 = sadd.s32 %s97, 1
      %p101 = scmp.eq.s32.totalorder %s21, 1
      %p102 = scmp.ne.s32.totalorder %s97, %s99
      %p103 = scmp.eq.s32.totalorder %s21, 0
      %p104 = por %p102, %p103
      %p105 = scmp.ne.s32.totalorder %s97, %s99
      %p106 = scmp.eq.s32.totalorder %s26, 1
      %p107 = por %p105, %p106
      %p108 = scmp.ne.s32.totalorder %s99, %s100
      %p109 = scmp.eq.s32.totalorder %s26, 0
      %p110 = por %p108, %p109
      %p111 = scmp.ne.s32.totalorder %s99, %s100
      %p112 = scmp.eq.s32.totalorder %s27, 1
      %p113 = por %p111, %p112
      %p115 = scmp.ne.s32.totalorder %s100, %s114
      %p116 = scmp.eq.s32.totalorder %s27, 0
      %p117 = por %p115, %p116
      %s119 = sadd.s32 %s118, 1
      %p122 = scmp.eq.s32.totalorder %s21, 1
      %p123 = scmp.ne.s32.totalorder %s118, %s120
      %p124 = scmp.eq.s32.totalorder %s21, 0
      %p125 = por %p123, %p124
      %p126 = scmp.ne.s32.totalorder %s118, %s120
      %p127 = scmp.eq.s32.totalorder %s26, 1
      %p128 = por %p126, %p127
      %p129 = scmp.ne.s32.totalorder %s120, %s121
      %p130 = scmp.eq.s32.totalorder %s26, 0
      %p131 = por %p129, %p130
      %p132 = scmp.ne.s32.totalorder %s120, %s121
      %p133 = scmp.eq.s32.totalorder %s27, 1
      %p134 = por %p132, %p133
      %p136 = scmp.ne.s32.totalorder %s121, %s135
      %p137 = scmp.eq.s32.totalorder %s27, 0
      %p138 = por %p136, %p137
      %s140 = sadd.s32 %s139, 1
      %p143 = scmp.eq.s32.totalorder %s21, 1
      %p144 = scmp.ne.s32.totalorder %s139, %s141
      %p145 = scmp.eq.s32.totalorder %s21, 0
      %p146 = por %p144, %p145
      %p147 = scmp.ne.s32.totalorder %s139, %s141
      %p148 = scmp.eq.s32.totalorder %s26, 1
      %p149 = por %p147, %p148
      %p150 = scmp.ne.s32.totalorder %s141, %s142
      %p151 = scmp.eq.s32.totalorder %s26, 0
      %p152 = por %p150, %p151
      %p153 = scmp.ne.s32.totalorder %s141, %s142
      %p154 = scmp.eq.s32.totalorder %s27, 1
      %p155 = por %p153, %p154
      %p157 = scmp.ne.s32.totalorder %s142, %s156
      %p158 = scmp.eq.s32.totalorder %s27, 0
      %p159 = por %p157, %p158
      %s161 = sadd.s32 %s160, 1
      %p164 = scmp.eq.s32.totalorder %s21, 1
      %p165 = scmp.ne.s32.totalorder %s160, %s162
      %p166 = scmp.eq.s32.totalorder %s21, 0
      %p167 = por %p165, %p166
      %p168 = scmp.ne.s32.totalorder %s160, %s162
      %p169 = scmp.eq.s32.totalorder %s26, 1
      %p170 = por %p168, %p169
      %p171 = scmp.ne.s32.totalorder %s162, %s163
      %p172 = scmp.eq.s32.totalorder %s26, 0
      %p173 = por %p171, %p172
      %p174 = scmp.ne.s32.totalorder %s162, %s163
      %p175 = scmp.eq.s32.totalorder %s27, 1
      %p176 = por %p174, %p175
      %p178 = scmp.ne.s32.totalorder %s163, %s177
      %p179 = scmp.eq.s32.totalorder %s27, 0
      %p180 = por %p178, %p179
      %s182 = sadd.s32 %s181, 1
      %p185 = scmp.eq.s32.totalorder %s21, 1
      %p186 = scmp.ne.s32.totalorder %s181, %s183
      %p187 = scmp.eq.s32.totalorder %s21, 0
      %p188 = por %p186, %p187
      %p189 = scmp.ne.s32.totalorder %s181, %s183
      %p190 = scmp.eq.s32.totalorder %s26, 1
      %p191 = por %p189, %p190
      %p192 = scmp.ne.s32.totalorder %s183, %s184
      %p193 = scmp.eq.s32.totalorder %s26, 0
      %p194 = por %p192, %p193
      %p195 = scmp.ne.s32.totalorder %s183, %s184
      %p196 = scmp.eq.s32.totalorder %s27, 1
      %p197 = por %p195, %p196
      %p199 = scmp.ne.s32.totalorder %s184, %s198
      %p200 = scmp.eq.s32.totalorder %s27, 0
      %p201 = por %p199, %p200
      %s203 = sadd.s32 %s202, 1
      %p206 = scmp.eq.s32.totalorder %s21, 1
      %p207 = scmp.ne.s32.totalorder %s202, %s204
      %p208 = scmp.eq.s32.totalorder %s21, 0
      %p209 = por %p207, %p208
      %p210 = scmp.ne.s32.totalorder %s202, %s204
      %p211 = scmp.eq.s32.totalorder %s26, 1
      %p212 = por %p210, %p211
      %p213 = scmp.ne.s32.totalorder %s204, %s205
      %p214 = scmp.eq.s32.totalorder %s26, 0
      %p215 = por %p213, %p214
      %p216 = scmp.ne.s32.totalorder %s204, %s205
      %p217 = scmp.eq.s32.totalorder %s27, 1
      %p218 = por %p216, %p217
      %p220 = scmp.ne.s32.totalorder %s205, %s219
      %p221 = scmp.eq.s32.totalorder %s27, 0
      %p222 = por %p220, %p221
      %s224 = sadd.s32 %s223, 1
      %p227 = scmp.eq.s32.totalorder %s21, 1
      %p228 = scmp.ne.s32.totalorder %s223, %s225
      %p229 = scmp.eq.s32.totalorder %s21, 0
      %p230 = por %p228, %p229
      %p231 = scmp.ne.s32.totalorder %s223, %s225
      %p232 = scmp.eq.s32.totalorder %s26, 1
      %p233 = por %p231, %p232
      %p234 = scmp.ne.s32.totalorder %s225, %s226
      %p235 = scmp.eq.s32.totalorder %s26, 0
      %p236 = por %p234, %p235
      %p237 = scmp.ne.s32.totalorder %s225, %s226
      %p238 = scmp.eq.s32.totalorder %s27, 1
      %p239 = por %p237, %p238
      %p241 = scmp.ne.s32.totalorder %s226, %s240
      %p242 = scmp.eq.s32.totalorder %s27, 0
      %p243 = por %p241, %p242
      %s245 = sadd.s32 %s244, 1
      %p248 = scmp.eq.s32.totalorder %s21, 1
      %p249 = scmp.ne.s32.totalorder %s244, %s246
      %p250 = scmp.eq.s32.totalorder %s21, 0
      %p251 = por %p249, %p250
      %p252 = scmp.ne.s32.totalorder %s244, %s246
      %p253 = scmp.eq.s32.totalorder %s26, 1
      %p254 = por %p252, %p253
      %p255 = scmp.ne.s32.totalorder %s246, %s247
      %p256 = scmp.eq.s32.totalorder %s26, 0
      %p257 = por %p255, %p256
      %p258 = scmp.ne.s32.totalorder %s246, %s247
      %p259 = scmp.eq.s32.totalorder %s27, 1
      %p260 = por %p258, %p259
      %p262 = scmp.ne.s32.totalorder %s247, %s261
      %p263 = scmp.eq.s32.totalorder %s27, 0
      %p264 = por %p262, %p263
      %s266 = sadd.s32 %s265, 1
      %p269 = scmp.eq.s32.totalorder %s21, 1
      %p270 = scmp.ne.s32.totalorder %s265, %s267
      %p271 = scmp.eq.s32.totalorder %s21, 0
      %p272 = por %p270, %p271
      %p273 = scmp.ne.s32.totalorder %s265, %s267
      %p274 = scmp.eq.s32.totalorder %s26, 1
      %p275 = por %p273, %p274
      %p276 = scmp.ne.s32.totalorder %s267, %s268
      %p277 = scmp.eq.s32.totalorder %s26, 0
      %p278 = por %p276, %p277
      %p279 = scmp.ne.s32.totalorder %s267, %s268
      %p280 = scmp.eq.s32.totalorder %s27, 1
      %p281 = por %p279, %p280
      %p283 = scmp.ne.s32.totalorder %s268, %s282
      %p284 = scmp.eq.s32.totalorder %s27, 0
      %p285 = por %p283, %p284
      %s286 = ssub.s32 %s21, %s28
      %p287 = scmp.eq.s32.totalorder %s286, 0
      %s289 = sadd.s32 %s288, 1
      %s290 = scalar_select %p287, %s288, %s289
      %p293 = pneg %p287
      %p294 = scmp.eq.s32.totalorder %s21, 1
      %p295 = por %p293, %p294
      %p296 = scmp.ne.s32.totalorder %s288, %s291
      %p297 = scmp.eq.s32.totalorder %s21, 0
      %p298 = por %p296, %p297
      %p299 = scmp.ne.s32.totalorder %s288, %s291
      %p300 = scmp.eq.s32.totalorder %s26, 1
      %p301 = por %p299, %p300
      %p302 = scmp.ne.s32.totalorder %s291, %s292
      %p303 = scmp.eq.s32.totalorder %s26, 0
      %p304 = por %p302, %p303
      %p305 = scmp.ne.s32.totalorder %s291, %s292
      %p306 = scmp.eq.s32.totalorder %s27, 1
      %p307 = por %p305, %p306
      %p309 = scmp.ne.s32.totalorder %s292, %s308
      %p310 = scmp.eq.s32.totalorder %s27, 0
      %p311 = por %p309, %p310
      %p312 = scmp.le.s32.totalorder 1, %s21
      %p313 = scmp.lt.s32.totalorder %s21, 3
      %p314 = pnand %p312, %p313
      %p315 = pneg %p314
      // Predicated region
      $region9: #{tpu_custom_call.1} parent=5 // pred_check
        _
      $region10: #{tpu_custom_call.1} parent=5 // pred_check_branch
        %317 = sbr.rel (%p314) target = $region12
      $region11: #{tpu_custom_call.1} parent=5 // pred_region
        %s318 = ssub.s32 %s21, 1
        // Predicated region
        $region13: #{tpu_custom_call.1} parent=11 // pred_check
          %p319 = pneg %p68
        $region14: #{tpu_custom_call.1} parent=11 // pred_check_branch
          %321 = sbr.rel (%p319) target = $region16
        $region15: #{tpu_custom_call.1} parent=11 // pred_region
          _
        $region16: #{tpu_custom_call.1} parent=11 // pred_fallthru
          _
        // Predicated region
        $region17: #{tpu_custom_call.1} parent=11 // pred_check
          %p322 = pneg %p89
        $region18: #{tpu_custom_call.1} parent=11 // pred_check_branch
          %324 = sbr.rel (%p322) target = $region20
        $region19: #{tpu_custom_call.1} parent=11 // pred_region
          _
        $region20: #{tpu_custom_call.1} parent=11 // pred_fallthru
          _
        // Predicated region
        $region21: #{tpu_custom_call.1} parent=11 // pred_check
          %p325 = pneg %p110
        $region22: #{tpu_custom_call.1} parent=11 // pred_check_branch
          %327 = sbr.rel (%p325) target = $region24
        $region23: #{tpu_custom_call.1} parent=11 // pred_region
          _
        $region24: #{tpu_custom_call.1} parent=11 // pred_fallthru
          _
        // Predicated region
        $region25: #{tpu_custom_call.1} parent=11 // pred_check
          %p328 = pneg %p131
        $region26: #{tpu_custom_call.1} parent=11 // pred_check_branch
          %330 = sbr.rel (%p328) target = $region28
        $region27: #{tpu_custom_call.1} parent=11 // pred_region
          _
        $region28: #{tpu_custom_call.1} parent=11 // pred_fallthru
          _
        // Predicated region
        $region29: #{tpu_custom_call.1} parent=11 // pred_check
          %p331 = pneg %p152
        $region30: #{tpu_custom_call.1} parent=11 // pred_check_branch
          %333 = sbr.rel (%p331) target = $region32
        $region31: #{tpu_custom_call.1} parent=11 // pred_region
          _
        $region32: #{tpu_custom_call.1} parent=11 // pred_fallthru
          _
        // Predicated region
        $region33: #{tpu_custom_call.1} parent=11 // pred_check
          %p334 = pneg %p173
        $region34: #{tpu_custom_call.1} parent=11 // pred_check_branch
          %336 = sbr.rel (%p334) target = $region36
        $region35: #{tpu_custom_call.1} parent=11 // pred_region
          _
        $region36: #{tpu_custom_call.1} parent=11 // pred_fallthru
          _
        // Predicated region
        $region37: #{tpu_custom_call.1} parent=11 // pred_check
          %p337 = pneg %p194
        $region38: #{tpu_custom_call.1} parent=11 // pred_check_branch
          %339 = sbr.rel (%p337) target = $region40
        $region39: #{tpu_custom_call.1} parent=11 // pred_region
          _
        $region40: #{tpu_custom_call.1} parent=11 // pred_fallthru
          _
        // Predicated region
        $region41: #{tpu_custom_call.1} parent=11 // pred_check
          %p340 = pneg %p215
        $region42: #{tpu_custom_call.1} parent=11 // pred_check_branch
          %342 = sbr.rel (%p340) target = $region44
        $region43: #{tpu_custom_call.1} parent=11 // pred_region
          _
        $region44: #{tpu_custom_call.1} parent=11 // pred_fallthru
          _
        // Predicated region
        $region45: #{tpu_custom_call.1} parent=11 // pred_check
          %p343 = pneg %p236
        $region46: #{tpu_custom_call.1} parent=11 // pred_check_branch
          %345 = sbr.rel (%p343) target = $region48
        $region47: #{tpu_custom_call.1} parent=11 // pred_region
          _
        $region48: #{tpu_custom_call.1} parent=11 // pred_fallthru
          _
        // Predicated region
        $region49: #{tpu_custom_call.1} parent=11 // pred_check
          %p346 = pneg %p257
        $region50: #{tpu_custom_call.1} parent=11 // pred_check_branch
          %348 = sbr.rel (%p346) target = $region52
        $region51: #{tpu_custom_call.1} parent=11 // pred_region
          _
        $region52: #{tpu_custom_call.1} parent=11 // pred_fallthru
          _
        // Predicated region
        $region53: #{tpu_custom_call.1} parent=11 // pred_check
          %p349 = pneg %p278
        $region54: #{tpu_custom_call.1} parent=11 // pred_check_branch
          %351 = sbr.rel (%p349) target = $region56
        $region55: #{tpu_custom_call.1} parent=11 // pred_region
          _
        $region56: #{tpu_custom_call.1} parent=11 // pred_fallthru
          _
      $region12: #{tpu_custom_call.1} parent=5 // pred_fallthru
        _
      %p352 = scmp.lt.s32.totalorder %s21, 2
      // Predicated region
      $region57: #{tpu_custom_call.1} parent=5 // pred_check
        %p353 = pneg %p352
      $region58: #{tpu_custom_call.1} parent=5 // pred_check_branch
        %355 = sbr.rel (%p353) target = $region60
      $region59: #{tpu_custom_call.1} parent=5 // pred_region
        // Predicated region
        $region61: #{tpu_custom_call.1} parent=59 // pred_check
          %p356 = pneg %p41
        $region62: #{tpu_custom_call.1} parent=59 // pred_check_branch
          %358 = sbr.rel (%p356) target = $region64
        $region63: #{tpu_custom_call.1} parent=59 // pred_region
          %p359 = scmp.lt.s32.totalorder %s21, 1
          %s360 = scalar_select %p359, %s21, 1
          %s361 = smul.addr %s360, 8
          %s362 = smul.addr %s361, 4
          %s363 = scalar_lea.vmem %s0, %s362
        $region64: #{tpu_custom_call.1} parent=59 // pred_fallthru
          _
      $region60: #{tpu_custom_call.1} parent=5 // pred_fallthru
        _
      %p364 = scmp.le.s32.totalorder 1, %s21
      %p365 = scmp.lt.s32.totalorder %s21, 3
      %p366 = pnand %p364, %p365
      %p367 = pneg %p366
      // Predicated region
      $region65: #{tpu_custom_call.1} parent=5 // pred_check
        _
      $region66: #{tpu_custom_call.1} parent=5 // pred_check_branch
        %369 = sbr.rel (%p366) target = $region68
      $region67: #{tpu_custom_call.1} parent=5 // pred_region
        %s370 = ssub.s32 %s21, 1
        %p371 = scmp.lt.s32.totalorder %s26, 1
        %s372 = scalar_select %p371, %s26, 1
        %s373 = smul.addr %s372, 8
        %s374 = smul.addr %s373, 4
        %s375 = scalar_lea.vmem %s0, %s374
        %p376 = pneg %p47
        %p377 = pneg %p44
        %p378 = pneg %p68
        %p379 = pneg %p65
        %p380 = pneg %p89
        %p381 = pneg %p86
        %p382 = pneg %p110
        %p383 = pneg %p107
        %p384 = pneg %p131
        %p385 = pneg %p128
        %p386 = pneg %p152
        %p387 = pneg %p149
        %p388 = pneg %p173
        %p389 = pneg %p170
        %p390 = pneg %p194
        %p391 = pneg %p191
        %p392 = pneg %p215
        %p393 = pneg %p212
        %p394 = pneg %p236
        %p395 = pneg %p233
        %p396 = pneg %p257
        %p397 = pneg %p254
        %p398 = pneg %p278
        %p399 = pneg %p275
        %p400 = pneg %p304
        %p401 = pneg %p301
        %s402 = sand.u32 %s291, 1
        %s403 = scalar_lea.sflag [#allocation4], %s402
        %s404 = sand.u32 %s291, 1
        %s405 = smul.addr %s404, 40
        %s406 = scalar_lea.vmem [#allocation3], %s405
        %p407 = scmp.lt.s32.totalorder %s26, 1
        %s408 = scalar_select %p407, %s26, 1
        %s409 = smul.addr %s408, 8
        %s410 = smul.addr %s409, 4
        %s411 = scalar_lea.vmem %s0, %s410
        %413 = vst [vmem:[#allocation2] sm:$0xff] 0.0
        %414 = vst [vmem:[#allocation2 + $0x8] sm:$0xff] 0.0
        %415 = vst [vmem:[#allocation2 + $0x10] sm:$0xff] 0.0
        %416 = vst [vmem:[#allocation2 + $0x18] sm:$0xff] 0.0
        %417 = vst [vmem:[#allocation2 + $0x20] sm:$0xff] 0.0
        %vm418 = vcmask 125952
        %419 = vst.msk [vmem:[#allocation2 + $0x28] sm:$0xf] %vm418, 0.0
        %v420 = vld [vmem:[%s411] sm:$0xf]
        %v421 = vld [vmem:[%s411 + $0x4] sm:$0xf]
        %v422 = vld [vmem:[%s411 + $0x8] sm:$0xf]
        %v423 = vld [vmem:[%s411 + $0xc] sm:$0xf]
        %v424 = vld [vmem:[%s411 + $0x10] sm:$0xf]
        %v425 = vld [vmem:[%s411 + $0x14] sm:$0xf]
        %v426 = vld [vmem:[%s411 + $0x18] sm:$0xf]
        %v427 = vld [vmem:[%s411 + $0x1c] sm:$0xf]
        %v428 = vld [vmem:[%s1] sm:$0xf]
        %v429 = vld [vmem:[%s1 + $0x4] sm:$0xf]
        %v438 = vunpack.c.l.b16 %v420
        %v439 = vunpack.c.l.b16 %v421
        %v440 = vunpack.c.l.b16 %v422
        %v441 = vunpack.c.l.b16 %v423
        %v442 = vunpack.c.l.b16 %v424
        %v443 = vunpack.c.l.b16 %v425
        %v444 = vunpack.c.l.b16 %v426
        %v445 = vunpack.c.l.b16 %v427
        %v446 = vpack.c.b16 %v439, %v438
        %v447 = vpack.c.b16 %v441, %v440
        %v448 = vpack.c.b16 %v443, %v442
        %v449 = vpack.c.b16 %v445, %v444
        %v452 = vunpack.c.l.b16 %v428
        %v453 = vunpack.c.l.b16 %v429
        %v454 = vpack.c.b16 %v453, %v452
        %vm456 = vcmask 130048
        %v458 = vsel %vm456, %v446, 0
        %v461 = vsel %vm456, %v447, 0
        %v464 = vsel %vm456, %v448, 0
        %v467 = vsel %vm456, %v449, 0
        %469 = vmatprep.subr.bf16.mxu0 0
        %470 = vmatpush1.bf16.msra.mxu0 %v454
        %471 = vmatprep.subr.bf16.mxu0 0
        %472 = vmatpush1.bf16.msra.mxu0 0
        %473 = vmatprep.subr.bf16.mxu0 0
        %474 = vmatpush1.bf16.msra.mxu0 0
        %475 = vmatprep.subr.bf16.mxu0 0
        %476 = vmatpush1.bf16.msra.mxu0 0
        %477 = vmatprep.subr.bf16.mxu0 0
        %478 = vmatpush1.bf16.msra.mxu0 0
        %479 = vmatprep.subr.bf16.mxu0 0
        %480 = vmatpush1.bf16.msra.mxu0 0
        %481 = vmatprep.subr.bf16.mxu0 0
        %482 = vmatpush1.bf16.msra.mxu0 0
        %483 = vmatprep.subr.bf16.mxu0 0
        %484 = vmatpush1.bf16.msra.mxu0 0
        %485 = vmatprep.subr.bf16.mxu0 0
        %486 = vmatpush1.bf16.msra.mxu0 0
        %487 = vmatprep.subr.bf16.mxu0 0
        %488 = vmatpush1.bf16.msra.mxu0 0
        %489 = vmatprep.subr.bf16.mxu0 0
        %490 = vmatpush1.bf16.msra.mxu0 0
        %491 = vmatprep.subr.bf16.mxu0 0
        %492 = vmatpush1.bf16.msra.mxu0 0
        %493 = vmatprep.subr.bf16.mxu0 0
        %494 = vmatpush1.bf16.msra.mxu0 0
        %495 = vmatprep.subr.bf16.mxu0 0
        %496 = vmatpush1.bf16.msra.mxu0 0
        %497 = vmatprep.subr.bf16.mxu0 0
        %498 = vmatpush1.bf16.msra.mxu0 0
        %499 = vmatprep.subr.bf16.mxu0 0
        %500 = vmatpush1.bf16.msra.mxu0 0
        %501 = vmatprep.mubr.bf16.mxu0 0
        %502 = vmatmul.mubr.bf16.gmra.mrb[0].mxu0 %v458
        %v503 = vpop.f32.mrb[0].mxu0
        %v504 = vadd.f32 0.0, %v503
        %v505 = vpop.f32.mrb[0].mxu0
        %v506 = vpop.f32.mrb[0].mxu0
        %v507 = vadd.f32 0.0, %v506
        %v508 = vpop.f32.mrb[0].mxu0
        %509 = vmatprep.mubr.bf16.mxu0 0
        %510 = vmatmul.mubr.bf16.gmra.mrb[0].mxu0 %v461
        %v511 = vpop.f32.mrb[0].mxu0
        %v512 = vadd.f32 0.0, %v511
        %v513 = vpop.f32.mrb[0].mxu0
        %v514 = vpop.f32.mrb[0].mxu0
        %v515 = vadd.f32 0.0, %v514
        %v516 = vpop.f32.mrb[0].mxu0
        %517 = vmatprep.mubr.bf16.mxu0 0
        %518 = vmatmul.mubr.bf16.gmra.mrb[0].mxu0 %v464
        %v519 = vpop.f32.mrb[0].mxu0
        %v520 = vadd.f32 0.0, %v519
        %v521 = vpop.f32.mrb[0].mxu0
        %v522 = vpop.f32.mrb[0].mxu0
        %v523 = vadd.f32 0.0, %v522
        %v524 = vpop.f32.mrb[0].mxu0
        %525 = vmatprep.mubr.bf16.mxu0 0
        %526 = vmatmul.mubr.bf16.gmra.mrb[0].mxu0 %v467
        %v527 = vpop.f32.mrb[0].mxu0
        %v528 = vadd.f32 0.0, %v527
        %v529 = vpop.f32.mrb[0].mxu0
        %v530 = vpop.f32.mrb[0].mxu0
        %v531 = vadd.f32 0.0, %v530
        %v532 = vpop.f32.mrb[0].mxu0
        %533 = vdwg.mxu0
        %v534 = vpack.c.bf16 %v507, %v504
        %v535 = vpack.c.bf16 %v515, %v512
        %v536 = vpack.c.bf16 %v523, %v520
        %v537 = vpack.c.bf16 %v531, %v528
        %v538 = vld [vmem:[%s2] sm:$0xf]
        %v539 = vld [vmem:[%s2 + $0x4] sm:$0xf]
        %v540 = vld [vmem:[%s2 + $0x8] sm:$0xf]
        %v541 = vld [vmem:[%s2 + $0xc] sm:$0xf]
        %v546 = vunpack.c.l.b16 %v538
        %v547 = vunpack.c.l.b16 %v539
        %v548 = vunpack.c.l.b16 %v540
        %v549 = vunpack.c.l.b16 %v541
        %v550 = vpack.c.b16 %v547, %v546
        %v551 = vpack.c.b16 %v549, %v548
        %v553 = vsel %vm456, %v550, 0
        %v556 = vsel %vm456, %v551, 0
        %558 = vmatprep.subr.bf16.mxu0 0
        %559 = vmatpush1.bf16.msra.mxu0 %v534
        %560 = vmatprep.subr.bf16.mxu0 0
        %561 = vmatpush1.bf16.msra.mxu0 0
        %562 = vmatprep.subr.bf16.mxu0 0
        %563 = vmatpush1.bf16.msra.mxu0 0
        %564 = vmatprep.subr.bf16.mxu0 0
        %565 = vmatpush1.bf16.msra.mxu0 0
        %566 = vmatprep.subr.bf16.mxu0 0
        %567 = vmatpush1.bf16.msra.mxu0 0
        %568 = vmatprep.subr.bf16.mxu0 0
        %569 = vmatpush1.bf16.msra.mxu0 0
        %570 = vmatprep.subr.bf16.mxu0 0
        %571 = vmatpush1.bf16.msra.mxu0 0
        %572 = vmatprep.subr.bf16.mxu0 0
        %573 = vmatpush1.bf16.msra.mxu0 0
        %574 = vmatprep.subr.bf16.mxu0 0
        %575 = vmatpush1.bf16.msra.mxu0 0
        %576 = vmatprep.subr.bf16.mxu0 0
        %577 = vmatpush1.bf16.msra.mxu0 0
        %578 = vmatprep.subr.bf16.mxu0 0
        %579 = vmatpush1.bf16.msra.mxu0 0
        %580 = vmatprep.subr.bf16.mxu0 0
        %581 = vmatpush1.bf16.msra.mxu0 0
        %582 = vmatprep.subr.bf16.mxu0 0
        %583 = vmatpush1.bf16.msra.mxu0 0
        %584 = vmatprep.subr.bf16.mxu0 0
        %585 = vmatpush1.bf16.msra.mxu0 0
        %586 = vmatprep.subr.bf16.mxu0 0
        %587 = vmatpush1.bf16.msra.mxu0 0
        %588 = vmatprep.subr.bf16.mxu0 0
        %589 = vmatpush1.bf16.msra.mxu0 0
        %590 = vmatprep.mubr.bf16.mxu0 0
        %591 = vmatmul.mubr.bf16.gmra.mrb[0].mxu0 %v553
        %v592 = vpop.f32.mrb[0].mxu0
        %v593 = vadd.f32 0.0, %v592
        %v594 = vpop.f32.mrb[0].mxu0
        %v595 = vpop.f32.mrb[0].mxu0
        %v596 = vadd.f32 0.0, %v595
        %v597 = vpop.f32.mrb[0].mxu0
        %598 = vmatprep.mubr.bf16.mxu0 0
        %599 = vmatmul.mubr.bf16.gmra.mrb[0].mxu0 %v556
        %v600 = vpop.f32.mrb[0].mxu0
        %v601 = vadd.f32 0.0, %v600
        %v602 = vpop.f32.mrb[0].mxu0
        %v603 = vpop.f32.mrb[0].mxu0
        %v604 = vadd.f32 0.0, %v603
        %v605 = vpop.f32.mrb[0].mxu0
        %606 = vdwg.mxu0
        %607 = vmatprep.subr.bf16.mxu0 0
        %608 = vmatpush1.bf16.msra.mxu0 %v535
        %609 = vmatprep.subr.bf16.mxu0 0
        %610 = vmatpush1.bf16.msra.mxu0 0
        %611 = vmatprep.subr.bf16.mxu0 0
        %612 = vmatpush1.bf16.msra.mxu0 0
        %613 = vmatprep.subr.bf16.mxu0 0
        %614 = vmatpush1.bf16.msra.mxu0 0
        %615 = vmatprep.subr.bf16.mxu0 0
        %616 = vmatpush1.bf16.msra.mxu0 0
        %617 = vmatprep.subr.bf16.mxu0 0
        %618 = vmatpush1.bf16.msra.mxu0 0
        %619 = vmatprep.subr.bf16.mxu0 0
        %620 = vmatpush1.bf16.msra.mxu0 0
        %621 = vmatprep.subr.bf16.mxu0 0
        %622 = vmatpush1.bf16.msra.mxu0 0
        %623 = vmatprep.subr.bf16.mxu0 0
        %624 = vmatpush1.bf16.msra.mxu0 0
        %625 = vmatprep.subr.bf16.mxu0 0
        %626 = vmatpush1.bf16.msra.mxu0 0
        %627 = vmatprep.subr.bf16.mxu0 0
        %628 = vmatpush1.bf16.msra.mxu0 0
        %629 = vmatprep.subr.bf16.mxu0 0
        %630 = vmatpush1.bf16.msra.mxu0 0
        %631 = vmatprep.subr.bf16.mxu0 0
        %632 = vmatpush1.bf16.msra.mxu0 0
        %633 = vmatprep.subr.bf16.mxu0 0
        %634 = vmatpush1.bf16.msra.mxu0 0
        %635 = vmatprep.subr.bf16.mxu0 0
        %636 = vmatpush1.bf16.msra.mxu0 0
        %637 = vmatprep.subr.bf16.mxu0 0
        %638 = vmatpush1.bf16.msra.mxu0 0
        %639 = vmatprep.mubr.bf16.mxu0 0
        %640 = vmatmul.mubr.bf16.gmra.mrb[0].mxu0 %v553
        %v641 = vpop.f32.mrb[0].mxu0
        %v642 = vadd.f32 0.0, %v641
        %v643 = vpop.f32.mrb[0].mxu0
        %v644 = vpop.f32.mrb[0].mxu0
        %v645 = vadd.f32 0.0, %v644
        %v646 = vpop.f32.mrb[0].mxu0
        %647 = vmatprep.mubr.bf16.mxu0 0
        %648 = vmatmul.mubr.bf16.gmra.mrb[0].mxu0 %v556
        %v649 = vpop.f32.mrb[0].mxu0
        %v650 = vadd.f32 0.0, %v649
        %v651 = vpop.f32.mrb[0].mxu0
        %v652 = vpop.f32.mrb[0].mxu0
        %v653 = vadd.f32 0.0, %v652
        %v654 = vpop.f32.mrb[0].mxu0
        %655 = vdwg.mxu0
        %656 = vmatprep.subr.bf16.mxu0 0
        %657 = vmatpush1.bf16.msra.mxu0 %v536
        %658 = vmatprep.subr.bf16.mxu0 0
        %659 = vmatpush1.bf16.msra.mxu0 0
        %660 = vmatprep.subr.bf16.mxu0 0
        %661 = vmatpush1.bf16.msra.mxu0 0
        %662 = vmatprep.subr.bf16.mxu0 0
        %663 = vmatpush1.bf16.msra.mxu0 0
        %664 = vmatprep.subr.bf16.mxu0 0
        %665 = vmatpush1.bf16.msra.mxu0 0
        %666 = vmatprep.subr.bf16.mxu0 0
        %667 = vmatpush1.bf16.msra.mxu0 0
        %668 = vmatprep.subr.bf16.mxu0 0
        %669 = vmatpush1.bf16.msra.mxu0 0
        %670 = vmatprep.subr.bf16.mxu0 0
        %671 = vmatpush1.bf16.msra.mxu0 0
        %672 = vmatprep.subr.bf16.mxu0 0
        %673 = vmatpush1.bf16.msra.mxu0 0
        %674 = vmatprep.subr.bf16.mxu0 0
        %675 = vmatpush1.bf16.msra.mxu0 0
        %676 = vmatprep.subr.bf16.mxu0 0
        %677 = vmatpush1.bf16.msra.mxu0 0
        %678 = vmatprep.subr.bf16.mxu0 0
        %679 = vmatpush1.bf16.msra.mxu0 0
        %680 = vmatprep.subr.bf16.mxu0 0
        %681 = vmatpush1.bf16.msra.mxu0 0
        %682 = vmatprep.subr.bf16.mxu0 0
        %683 = vmatpush1.bf16.msra.mxu0 0
        %684 = vmatprep.subr.bf16.mxu0 0
        %685 = vmatpush1.bf16.msra.mxu0 0
        %686 = vmatprep.subr.bf16.mxu0 0
        %687 = vmatpush1.bf16.msra.mxu0 0
        %688 = vmatprep.mubr.bf16.mxu0 0
        %689 = vmatmul.mubr.bf16.gmra.mrb[0].mxu0 %v553
        %v690 = vpop.f32.mrb[0].mxu0
        %v691 = vadd.f32 0.0, %v690
        %v692 = vpop.f32.mrb[0].mxu0
        %v693 = vpop.f32.mrb[0].mxu0
        %v694 = vadd.f32 0.0, %v693
        %v695 = vpop.f32.mrb[0].mxu0
        %696 = vmatprep.mubr.bf16.mxu0 0
        %697 = vmatmul.mubr.bf16.gmra.mrb[0].mxu0 %v556
        %v698 = vpop.f32.mrb[0].mxu0
        %v699 = vadd.f32 0.0, %v698
        %v700 = vpop.f32.mrb[0].mxu0
        %v701 = vpop.f32.mrb[0].mxu0
        %v702 = vadd.f32 0.0, %v701
        %v703 = vpop.f32.mrb[0].mxu0
        %704 = vdwg.mxu0
        %705 = vmatprep.subr.bf16.mxu0 0
        %706 = vmatpush1.bf16.msra.mxu0 %v537
        %707 = vmatprep.subr.bf16.mxu0 0
        %708 = vmatpush1.bf16.msra.mxu0 0
        %709 = vmatprep.subr.bf16.mxu0 0
        %710 = vmatpush1.bf16.msra.mxu0 0
        %711 = vmatprep.subr.bf16.mxu0 0
        %712 = vmatpush1.bf16.msra.mxu0 0
        %713 = vmatprep.subr.bf16.mxu0 0
        %714 = vmatpush1.bf16.msra.mxu0 0
        %715 = vmatprep.subr.bf16.mxu0 0
        %716 = vmatpush1.bf16.msra.mxu0 0
        %717 = vmatprep.subr.bf16.mxu0 0
        %718 = vmatpush1.bf16.msra.mxu0 0
        %719 = vmatprep.subr.bf16.mxu0 0
        %720 = vmatpush1.bf16.msra.mxu0 0
        %721 = vmatprep.subr.bf16.mxu0 0
        %722 = vmatpush1.bf16.msra.mxu0 0
        %723 = vmatprep.subr.bf16.mxu0 0
        %724 = vmatpush1.bf16.msra.mxu0 0
        %725 = vmatprep.subr.bf16.mxu0 0
        %726 = vmatpush1.bf16.msra.mxu0 0
        %727 = vmatprep.subr.bf16.mxu0 0
        %728 = vmatpush1.bf16.msra.mxu0 0
        %729 = vmatprep.subr.bf16.mxu0 0
        %730 = vmatpush1.bf16.msra.mxu0 0
        %731 = vmatprep.subr.bf16.mxu0 0
        %732 = vmatpush1.bf16.msra.mxu0 0
        %733 = vmatprep.subr.bf16.mxu0 0
        %734 = vmatpush1.bf16.msra.mxu0 0
        %735 = vmatprep.subr.bf16.mxu0 0
        %736 = vmatpush1.bf16.msra.mxu0 0
        %737 = vmatprep.mubr.bf16.mxu0 0
        %738 = vmatmul.mubr.bf16.gmra.mrb[0].mxu0 %v553
        %v739 = vpop.f32.mrb[0].mxu0
        %v740 = vadd.f32 0.0, %v739
        %v741 = vpop.f32.mrb[0].mxu0
        %v742 = vpop.f32.mrb[0].mxu0
        %v743 = vadd.f32 0.0, %v742
        %v744 = vpop.f32.mrb[0].mxu0
        %745 = vmatprep.mubr.bf16.mxu0 0
        %746 = vmatmul.mubr.bf16.gmra.mrb[0].mxu0 %v556
        %v747 = vpop.f32.mrb[0].mxu0
        %v748 = vadd.f32 0.0, %v747
        %v749 = vpop.f32.mrb[0].mxu0
        %v750 = vpop.f32.mrb[0].mxu0
        %v751 = vadd.f32 0.0, %v750
        %v752 = vpop.f32.mrb[0].mxu0
        %753 = vdwg.mxu0
        %v758 = vrot.slane %v642, 7
        %vm759 = vcmask 1041409
        %v760 = vsel %vm759, %v758, %v593
        %vm761 = vcmask 1045509
        %v762 = vsel %vm761, %v758, %v760
        %v763 = vrot.slane %v691, 6
        %vm764 = vcmask 1042434
        %v765 = vsel %vm764, %v763, %v762
        %vm766 = vcmask 1046534
        %v767 = vsel %vm766, %v763, %v765
        %v768 = vrot.slane %v740, 5
        %vm769 = vcmask 1043459
        %v770 = vsel %vm769, %v768, %v767
        %vm771 = vcmask 1047559
        %v772 = vsel %vm771, %v768, %v770
        %773 = vrot.lane.b32.xlu0 %v772, 104
        %v774 = vpop.permute.xlu0 %773
        %v775 = vrot.slane %v774, 4
        %vm776 = vcmask 850944
        %v777 = vsel %vm776, %v775, %v774
        %vm779 = vcmask 1044288
        %vm780 = vcmask 80900
        %vm781 = vmor %vm780, %vm779
        %782 = vst.msk [vmem:[#allocation2] sm:$0xff] %vm781, %v777
        %v783 = vrot.slane %v593, 1
        %v784 = vsel %vm759, %v642, %v783
        %v785 = vsel %vm761, %v642, %v784
        %v786 = vrot.slane %v691, 7
        %v787 = vsel %vm764, %v786, %v785
        %v788 = vsel %vm766, %v786, %v787
        %v789 = vrot.slane %v740, 6
        %v790 = vsel %vm769, %v789, %v788
        %v791 = vsel %vm771, %v789, %v790
        %792 = vrot.lane.b32.xlu0 %v791, 10
        %v793 = vpop.permute.xlu0 %792
        %vm795 = vcmask 355408
        %796 = vst.msk [vmem:[#allocation2 + $0x4] sm:$0xf] %vm795, %v793
        %v797 = vrot.slane %v593, 2
        %v798 = vrot.slane %v642, 1
        %v799 = vsel %vm759, %v798, %v797
        %v800 = vsel %vm761, %v798, %v799
        %v801 = vsel %vm764, %v691, %v800
        %v802 = vsel %vm766, %v691, %v801
        %v803 = vrot.slane %v740, 7
        %v804 = vsel %vm769, %v803, %v802
        %v805 = vsel %vm771, %v803, %v804
        %806 = vrot.lane.b32.xlu0 %v805, 44
        %v807 = vpop.permute.xlu0 %806
        %vm809 = vcmask 634208
        %810 = vst.msk [vmem:[#allocation2 + $0x4] sm:$0xf] %vm809, %v807
        %v811 = vrot.slane %v593, 3
        %v812 = vrot.slane %v642, 2
        %v813 = vsel %vm759, %v812, %v811
        %v814 = vsel %vm761, %v812, %v813
        %v815 = vrot.slane %v691, 1
        %v816 = vsel %vm764, %v815, %v814
        %v817 = vsel %vm766, %v815, %v816
        %v818 = vsel %vm769, %v740, %v817
        %v819 = vsel %vm771, %v740, %v818
        %820 = vrot.lane.b32.xlu0 %v819, 78
        %v821 = vpop.permute.xlu0 %820
        %vm823 = vcmask 913008
        %824 = vst.msk [vmem:[#allocation2 + $0x4] sm:$0xf] %vm823, %v821
        %v825 = vcombine.high %v593, %v593
        %v826 = vcombine.high %v642, %v642
        %v827 = vcombine.high %v691, %v691
        %v828 = vcombine.high %v740, %v740
        %v829 = vrot.slane %v826, 7
        %v830 = vsel %vm759, %v829, %v825
        %v831 = vsel %vm761, %v829, %v830
        %v832 = vrot.slane %v827, 6
        %v833 = vsel %vm764, %v832, %v831
        %v834 = vsel %vm766, %v832, %v833
        %v835 = vrot.slane %v828, 5
        %v836 = vsel %vm769, %v835, %v834
        %v837 = vsel %vm771, %v835, %v836
        %838 = vrot.lane.b32.xlu0 %v837, 112
        %v839 = vpop.permute.xlu0 %838
        %v840 = vrot.slane %v839, 4
        %vm841 = vcmask 916480
        %v842 = vsel %vm841, %v840, %v839
        %vm844 = vcmask 1044352
        %vm845 = vcmask 146436
        %vm846 = vmor %vm845, %vm844
        %847 = vst.msk [vmem:[#allocation2 + $0x4] sm:$0xff] %vm846, %v842
        %v848 = vrot.slane %v825, 1
        %v849 = vsel %vm759, %v826, %v848
        %v850 = vsel %vm761, %v826, %v849
        %v851 = vrot.slane %v827, 7
        %v852 = vsel %vm764, %v851, %v850
        %v853 = vsel %vm766, %v851, %v852
        %v854 = vrot.slane %v828, 6
        %v855 = vsel %vm769, %v854, %v853
        %v856 = vsel %vm771, %v854, %v855
        %857 = vrot.lane.b32.xlu0 %v856, 18
        %v858 = vpop.permute.xlu0 %857
        %vm860 = vcmask 421008
        %861 = vst.msk [vmem:[#allocation2 + $0x8] sm:$0xf] %vm860, %v858
        %v862 = vrot.slane %v825, 2
        %v863 = vrot.slane %v826, 1
        %v864 = vsel %vm759, %v863, %v862
        %v865 = vsel %vm761, %v863, %v864
        %v866 = vsel %vm764, %v827, %v865
        %v867 = vsel %vm766, %v827, %v866
        %v868 = vrot.slane %v828, 7
        %v869 = vsel %vm769, %v868, %v867
        %v870 = vsel %vm771, %v868, %v869
        %871 = vrot.lane.b32.xlu0 %v870, 52
        %v872 = vpop.permute.xlu0 %871
        %vm874 = vcmask 699808
        %875 = vst.msk [vmem:[#allocation2 + $0x8] sm:$0xf] %vm874, %v872
        %v876 = vrot.slane %v825, 3
        %v877 = vrot.slane %v826, 2
        %v878 = vsel %vm759, %v877, %v876
        %v879 = vsel %vm761, %v877, %v878
        %v880 = vrot.slane %v827, 1
        %v881 = vsel %vm764, %v880, %v879
        %v882 = vsel %vm766, %v880, %v881
        %v883 = vsel %vm769, %v828, %v882
        %v884 = vsel %vm771, %v828, %v883
        %885 = vrot.lane.b32.xlu0 %v884, 86
        %v886 = vpop.permute.xlu0 %885
        %vm888 = vcmask 978608
        %889 = vst.msk [vmem:[#allocation2 + $0x8] sm:$0xf] %vm888, %v886
        %v894 = vrot.slane %v645, 7
        %v895 = vsel %vm759, %v894, %v596
        %v896 = vsel %vm761, %v894, %v895
        %v897 = vrot.slane %v694, 6
        %v898 = vsel %vm764, %v897, %v896
        %v899 = vsel %vm766, %v897, %v898
        %v900 = vrot.slane %v743, 5
        %v901 = vsel %vm769, %v900, %v899
        %v902 = vsel %vm771, %v900, %v901
        %903 = vrot.lane.b32.xlu0 %v902, 120
        %v904 = vpop.permute.xlu0 %903
        %v905 = vrot.slane %v904, 4
        %vm906 = vcmask 982016
        %v907 = vsel %vm906, %v905, %v904
        %vm909 = vcmask 1044416
        %vm910 = vcmask 211972
        %vm911 = vmor %vm910, %vm909
        %912 = vst.msk [vmem:[#allocation2 + $0x8] sm:$0xff] %vm911, %v907
        %v913 = vrot.slane %v596, 1
        %v914 = vsel %vm759, %v645, %v913
        %v915 = vsel %vm761, %v645, %v914
        %v916 = vrot.slane %v694, 7
        %v917 = vsel %vm764, %v916, %v915
        %v918 = vsel %vm766, %v916, %v917
        %v919 = vrot.slane %v743, 6
        %v920 = vsel %vm769, %v919, %v918
        %v921 = vsel %vm771, %v919, %v920
        %922 = vrot.lane.b32.xlu0 %v921, 26
        %v923 = vpop.permute.xlu0 %922
        %vm925 = vcmask 486608
        %926 = vst.msk [vmem:[#allocation2 + $0xc] sm:$0xf] %vm925, %v923
        %v927 = vrot.slane %v596, 2
        %v928 = vrot.slane %v645, 1
        %v929 = vsel %vm759, %v928, %v927
        %v930 = vsel %vm761, %v928, %v929
        %v931 = vsel %vm764, %v694, %v930
        %v932 = vsel %vm766, %v694, %v931
        %v933 = vrot.slane %v743, 7
        %v934 = vsel %vm769, %v933, %v932
        %v935 = vsel %vm771, %v933, %v934
        %936 = vrot.lane.b32.xlu0 %v935, 60
        %v937 = vpop.permute.xlu0 %936
        %vm939 = vcmask 765408
        %940 = vst.msk [vmem:[#allocation2 + $0xc] sm:$0xf] %vm939, %v937
        %v941 = vrot.slane %v596, 3
        %v942 = vrot.slane %v645, 2
        %v943 = vsel %vm759, %v942, %v941
        %v944 = vsel %vm761, %v942, %v943
        %v945 = vrot.slane %v694, 1
        %v946 = vsel %vm764, %v945, %v944
        %v947 = vsel %vm766, %v945, %v946
        %v948 = vsel %vm769, %v743, %v947
        %v949 = vsel %vm771, %v743, %v948
        %950 = vrot.lane.b32.xlu0 %v949, 94
        %v951 = vpop.permute.xlu0 %950
        %vm953 = vcmask 1044208
        %954 = vst.msk [vmem:[#allocation2 + $0xc] sm:$0xf] %vm953, %v951
        %v955 = vcombine.high %v596, %v596
        %v956 = vcombine.high %v645, %v645
        %v957 = vcombine.high %v694, %v694
        %v958 = vcombine.high %v743, %v743
        %v959 = vrot.slane %v956, 7
        %v960 = vsel %vm759, %v959, %v955
        %v961 = vsel %vm761, %v959, %v960
        %v962 = vrot.slane %v957, 6
        %v963 = vsel %vm764, %v962, %v961
        %v964 = vsel %vm766, %v962, %v963
        %v965 = vrot.slane %v958, 5
        %v966 = vsel %vm769, %v965, %v964
        %v967 = vsel %vm771, %v965, %v966
        %vm969 = vcmask 273408
        %970 = vst.msk [vmem:[#allocation2 + $0x10] sm:$0xf] %vm969, %v967
        %v971 = vrot.slane %v955, 1
        %v972 = vsel %vm759, %v956, %v971
        %v973 = vsel %vm761, %v956, %v972
        %v974 = vrot.slane %v957, 7
        %v975 = vsel %vm764, %v974, %v973
        %v976 = vsel %vm766, %v974, %v975
        %v977 = vrot.slane %v958, 6
        %v978 = vsel %vm769, %v977, %v976
        %v979 = vsel %vm771, %v977, %v978
        %980 = vrot.lane.b32.xlu0 %v979, 34
        %v981 = vpop.permute.xlu0 %980
        %vm983 = vcmask 552208
        %984 = vst.msk [vmem:[#allocation2 + $0x10] sm:$0xf] %vm983, %v981
        %v985 = vrot.slane %v955, 2
        %v986 = vrot.slane %v956, 1
        %v987 = vsel %vm759, %v986, %v985
        %v988 = vsel %vm761, %v986, %v987
        %v989 = vsel %vm764, %v957, %v988
        %v990 = vsel %vm766, %v957, %v989
        %v991 = vrot.slane %v958, 7
        %v992 = vsel %vm769, %v991, %v990
        %v993 = vsel %vm771, %v991, %v992
        %994 = vrot.lane.b32.xlu0 %v993, 68
        %v995 = vpop.permute.xlu0 %994
        %vm997 = vcmask 831008
        %998 = vst.msk [vmem:[#allocation2 + $0x10] sm:$0xf] %vm997, %v995
        %v999 = vrot.slane %v955, 3
        %v1000 = vrot.slane %v956, 2
        %v1001 = vsel %vm759, %v1000, %v999
        %v1002 = vsel %vm761, %v1000, %v1001
        %v1003 = vrot.slane %v957, 1
        %v1004 = vsel %vm764, %v1003, %v1002
        %v1005 = vsel %vm766, %v1003, %v1004
        %v1006 = vsel %vm769, %v958, %v1005
        %v1007 = vsel %vm771, %v958, %v1006
        %1008 = vrot.lane.b32.xlu0 %v1007, 102
        %v1009 = vpop.permute.xlu0 %1008
        %v1010 = vrot.slane %v1009, 4
        %vm1011 = vcmask 834560
        %v1012 = vsel %vm1011, %v1010, %v1009
        %vm1014 = vcmask 1044272
        %vm1015 = vcmask 64516
        %vm1016 = vmor %vm1015, %vm1014
        %1017 = vst.msk [vmem:[#allocation2 + $0x10] sm:$0xff] %vm1016, %v1012
        %v1022 = vrot.slane %v650, 7
        %v1023 = vsel %vm759, %v1022, %v601
        %v1024 = vsel %vm761, %v1022, %v1023
        %v1025 = vrot.slane %v699, 6
        %v1026 = vsel %vm764, %v1025, %v1024
        %v1027 = vsel %vm766, %v1025, %v1026
        %v1028 = vrot.slane %v748, 5
        %v1029 = vsel %vm769, %v1028, %v1027
        %v1030 = vsel %vm771, %v1028, %v1029
        %1031 = vrot.lane.b32.xlu0 %v1030, 8
        %v1032 = vpop.permute.xlu0 %1031
        %vm1034 = vcmask 339008
        %1035 = vst.msk [vmem:[#allocation2 + $0x14] sm:$0xf] %vm1034, %v1032
        %v1036 = vrot.slane %v601, 1
        %v1037 = vsel %vm759, %v650, %v1036
        %v1038 = vsel %vm761, %v650, %v1037
        %v1039 = vrot.slane %v699, 7
        %v1040 = vsel %vm764, %v1039, %v1038
        %v1041 = vsel %vm766, %v1039, %v1040
        %v1042 = vrot.slane %v748, 6
        %v1043 = vsel %vm769, %v1042, %v1041
        %v1044 = vsel %vm771, %v1042, %v1043
        %1045 = vrot.lane.b32.xlu0 %v1044, 42
        %v1046 = vpop.permute.xlu0 %1045
        %vm1048 = vcmask 617808
        %1049 = vst.msk [vmem:[#allocation2 + $0x14] sm:$0xf] %vm1048, %v1046
        %v1050 = vrot.slane %v601, 2
        %v1051 = vrot.slane %v650, 1
        %v1052 = vsel %vm759, %v1051, %v1050
        %v1053 = vsel %vm761, %v1051, %v1052
        %v1054 = vsel %vm764, %v699, %v1053
        %v1055 = vsel %vm766, %v699, %v1054
        %v1056 = vrot.slane %v748, 7
        %v1057 = vsel %vm769, %v1056, %v1055
        %v1058 = vsel %vm771, %v1056, %v1057
        %1059 = vrot.lane.b32.xlu0 %v1058, 76
        %v1060 = vpop.permute.xlu0 %1059
        %vm1062 = vcmask 896608
        %1063 = vst.msk [vmem:[#allocation2 + $0x14] sm:$0xf] %vm1062, %v1060
        %v1064 = vrot.slane %v601, 3
        %v1065 = vrot.slane %v650, 2
        %v1066 = vsel %vm759, %v1065, %v1064
        %v1067 = vsel %vm761, %v1065, %v1066
        %v1068 = vrot.slane %v699, 1
        %v1069 = vsel %vm764, %v1068, %v1067
        %v1070 = vsel %vm766, %v1068, %v1069
        %v1071 = vsel %vm769, %v748, %v1070
        %v1072 = vsel %vm771, %v748, %v1071
        %1073 = vrot.lane.b32.xlu0 %v1072, 110
        %v1074 = vpop.permute.xlu0 %1073
        %v1075 = vrot.slane %v1074, 4
        %vm1076 = vcmask 900096
        %v1077 = vsel %vm1076, %v1075, %v1074
        %vm1079 = vcmask 1044336
        %vm1080 = vcmask 130052
        %vm1081 = vmor %vm1080, %vm1079
        %1082 = vst.msk [vmem:[#allocation2 + $0x14] sm:$0xff] %vm1081, %v1077
        %v1083 = vcombine.high %v601, %v601
        %v1084 = vcombine.high %v650, %v650
        %v1085 = vcombine.high %v699, %v699
        %v1086 = vcombine.high %v748, %v748
        %v1087 = vrot.slane %v1084, 7
        %v1088 = vsel %vm759, %v1087, %v1083
        %v1089 = vsel %vm761, %v1087, %v1088
        %v1090 = vrot.slane %v1085, 6
        %v1091 = vsel %vm764, %v1090, %v1089
        %v1092 = vsel %vm766, %v1090, %v1091
        %v1093 = vrot.slane %v1086, 5
        %v1094 = vsel %vm769, %v1093, %v1092
        %v1095 = vsel %vm771, %v1093, %v1094
        %1096 = vrot.lane.b32.xlu0 %v1095, 16
        %v1097 = vpop.permute.xlu0 %1096
        %vm1099 = vcmask 404608
        %1100 = vst.msk [vmem:[#allocation2 + $0x18] sm:$0xf] %vm1099, %v1097
        %v1101 = vrot.slane %v1083, 1
        %v1102 = vsel %vm759, %v1084, %v1101
        %v1103 = vsel %vm761, %v1084, %v1102
        %v1104 = vrot.slane %v1085, 7
        %v1105 = vsel %vm764, %v1104, %v1103
        %v1106 = vsel %vm766, %v1104, %v1105
        %v1107 = vrot.slane %v1086, 6
        %v1108 = vsel %vm769, %v1107, %v1106
        %v1109 = vsel %vm771, %v1107, %v1108
        %1110 = vrot.lane.b32.xlu0 %v1109, 50
        %v1111 = vpop.permute.xlu0 %1110
        %vm1113 = vcmask 683408
        %1114 = vst.msk [vmem:[#allocation2 + $0x18] sm:$0xf] %vm1113, %v1111
        %v1115 = vrot.slane %v1083, 2
        %v1116 = vrot.slane %v1084, 1
        %v1117 = vsel %vm759, %v1116, %v1115
        %v1118 = vsel %vm761, %v1116, %v1117
        %v1119 = vsel %vm764, %v1085, %v1118
        %v1120 = vsel %vm766, %v1085, %v1119
        %v1121 = vrot.slane %v1086, 7
        %v1122 = vsel %vm769, %v1121, %v1120
        %v1123 = vsel %vm771, %v1121, %v1122
        %1124 = vrot.lane.b32.xlu0 %v1123, 84
        %v1125 = vpop.permute.xlu0 %1124
        %vm1127 = vcmask 962208
        %1128 = vst.msk [vmem:[#allocation2 + $0x18] sm:$0xf] %vm1127, %v1125
        %v1129 = vrot.slane %v1083, 3
        %v1130 = vrot.slane %v1084, 2
        %v1131 = vsel %vm759, %v1130, %v1129
        %v1132 = vsel %vm761, %v1130, %v1131
        %v1133 = vrot.slane %v1085, 1
        %v1134 = vsel %vm764, %v1133, %v1132
        %v1135 = vsel %vm766, %v1133, %v1134
        %v1136 = vsel %vm769, %v1086, %v1135
        %v1137 = vsel %vm771, %v1086, %v1136
        %1138 = vrot.lane.b32.xlu0 %v1137, 118
        %v1139 = vpop.permute.xlu0 %1138
        %v1140 = vrot.slane %v1139, 4
        %vm1141 = vcmask 965632
        %v1142 = vsel %vm1141, %v1140, %v1139
        %vm1144 = vcmask 1044400
        %vm1145 = vcmask 195588
        %vm1146 = vmor %vm1145, %vm1144
        %1147 = vst.msk [vmem:[#allocation2 + $0x18] sm:$0xff] %vm1146, %v1142
        %v1152 = vrot.slane %v653, 7
        %v1153 = vsel %vm759, %v1152, %v604
        %v1154 = vsel %vm761, %v1152, %v1153
        %v1155 = vrot.slane %v702, 6
        %v1156 = vsel %vm764, %v1155, %v1154
        %v1157 = vsel %vm766, %v1155, %v1156
        %v1158 = vrot.slane %v751, 5
        %v1159 = vsel %vm769, %v1158, %v1157
        %v1160 = vsel %vm771, %v1158, %v1159
        %1161 = vrot.lane.b32.xlu0 %v1160, 24
        %v1162 = vpop.permute.xlu0 %1161
        %vm1164 = vcmask 470208
        %1165 = vst.msk [vmem:[#allocation2 + $0x1c] sm:$0xf] %vm1164, %v1162
        %v1166 = vrot.slane %v604, 1
        %v1167 = vsel %vm759, %v653, %v1166
        %v1168 = vsel %vm761, %v653, %v1167
        %v1169 = vrot.slane %v702, 7
        %v1170 = vsel %vm764, %v1169, %v1168
        %v1171 = vsel %vm766, %v1169, %v1170
        %v1172 = vrot.slane %v751, 6
        %v1173 = vsel %vm769, %v1172, %v1171
        %v1174 = vsel %vm771, %v1172, %v1173
        %1175 = vrot.lane.b32.xlu0 %v1174, 58
        %v1176 = vpop.permute.xlu0 %1175
        %vm1178 = vcmask 749008
        %1179 = vst.msk [vmem:[#allocation2 + $0x1c] sm:$0xf] %vm1178, %v1176
        %v1180 = vrot.slane %v604, 2
        %v1181 = vrot.slane %v653, 1
        %v1182 = vsel %vm759, %v1181, %v1180
        %v1183 = vsel %vm761, %v1181, %v1182
        %v1184 = vsel %vm764, %v702, %v1183
        %v1185 = vsel %vm766, %v702, %v1184
        %v1186 = vrot.slane %v751, 7
        %v1187 = vsel %vm769, %v1186, %v1185
        %v1188 = vsel %vm771, %v1186, %v1187
        %1189 = vrot.lane.b32.xlu0 %v1188, 92
        %v1190 = vpop.permute.xlu0 %1189
        %vm1192 = vcmask 1027808
        %1193 = vst.msk [vmem:[#allocation2 + $0x1c] sm:$0xf] %vm1192, %v1190
        %v1194 = vrot.slane %v604, 3
        %v1195 = vrot.slane %v653, 2
        %v1196 = vsel %vm759, %v1195, %v1194
        %v1197 = vsel %vm761, %v1195, %v1196
        %v1198 = vrot.slane %v702, 1
        %v1199 = vsel %vm764, %v1198, %v1197
        %v1200 = vsel %vm766, %v1198, %v1199
        %v1201 = vsel %vm769, %v751, %v1200
        %v1202 = vsel %vm771, %v751, %v1201
        %1203 = vrot.lane.b32.xlu0 %v1202, 126
        %v1204 = vpop.permute.xlu0 %1203
        %v1205 = vrot.slane %v1204, 4
        %vm1206 = vcmask 1031168
        %v1207 = vsel %vm1206, %v1205, %v1204
        %vm1209 = vcmask 1044464
        %vm1210 = vcmask 261124
        %vm1211 = vmor %vm1210, %vm1209
        %1212 = vst.msk [vmem:[#allocation2 + $0x1c] sm:$0xff] %vm1211, %v1207
        %v1213 = vcombine.high %v604, %v604
        %v1214 = vcombine.high %v653, %v653
        %v1215 = vcombine.high %v702, %v702
        %v1216 = vcombine.high %v751, %v751
        %v1217 = vrot.slane %v1214, 7
        %v1218 = vsel %vm759, %v1217, %v1213
        %v1219 = vsel %vm761, %v1217, %v1218
        %v1220 = vrot.slane %v1215, 6
        %v1221 = vsel %vm764, %v1220, %v1219
        %v1222 = vsel %vm766, %v1220, %v1221
        %v1223 = vrot.slane %v1216, 5
        %v1224 = vsel %vm769, %v1223, %v1222
        %v1225 = vsel %vm771, %v1223, %v1224
        %1226 = vrot.lane.b32.xlu0 %v1225, 32
        %v1227 = vpop.permute.xlu0 %1226
        %vm1229 = vcmask 535808
        %1230 = vst.msk [vmem:[#allocation2 + $0x20] sm:$0xf] %vm1229, %v1227
        %v1231 = vrot.slane %v1213, 1
        %v1232 = vsel %vm759, %v1214, %v1231
        %v1233 = vsel %vm761, %v1214, %v1232
        %v1234 = vrot.slane %v1215, 7
        %v1235 = vsel %vm764, %v1234, %v1233
        %v1236 = vsel %vm766, %v1234, %v1235
        %v1237 = vrot.slane %v1216, 6
        %v1238 = vsel %vm769, %v1237, %v1236
        %v1239 = vsel %vm771, %v1237, %v1238
        %1240 = vrot.lane.b32.xlu0 %v1239, 66
        %v1241 = vpop.permute.xlu0 %1240
        %vm1243 = vcmask 814608
        %1244 = vst.msk [vmem:[#allocation2 + $0x20] sm:$0xf] %vm1243, %v1241
        %v1245 = vrot.slane %v1213, 2
        %v1246 = vrot.slane %v1214, 1
        %v1247 = vsel %vm759, %v1246, %v1245
        %v1248 = vsel %vm761, %v1246, %v1247
        %v1249 = vsel %vm764, %v1215, %v1248
        %v1250 = vsel %vm766, %v1215, %v1249
        %v1251 = vrot.slane %v1216, 7
        %v1252 = vsel %vm769, %v1251, %v1250
        %v1253 = vsel %vm771, %v1251, %v1252
        %1254 = vrot.lane.b32.xlu0 %v1253, 100
        %v1255 = vpop.permute.xlu0 %1254
        %v1256 = vrot.slane %v1255, 4
        %vm1257 = vcmask 818176
        %v1258 = vsel %vm1257, %v1256, %v1255
        %vm1260 = vcmask 1044256
        %vm1261 = vcmask 48132
        %vm1262 = vmor %vm1261, %vm1260
        %1263 = vst.msk [vmem:[#allocation2 + $0x20] sm:$0xff] %vm1262, %v1258
        %v1264 = vrot.slane %v1213, 3
        %v1265 = vrot.slane %v1214, 2
        %v1266 = vsel %vm759, %v1265, %v1264
        %v1267 = vsel %vm761, %v1265, %v1266
        %v1268 = vrot.slane %v1215, 1
        %v1269 = vsel %vm764, %v1268, %v1267
        %v1270 = vsel %vm766, %v1268, %v1269
        %v1271 = vsel %vm769, %v1216, %v1270
        %v1272 = vsel %vm771, %v1216, %v1271
        %1273 = vrot.lane.b32.xlu0 %v1272, 6
        %v1274 = vpop.permute.xlu0 %1273
        %vm1276 = vcmask 322608
        %1277 = vst.msk [vmem:[#allocation2 + $0x24] sm:$0xf] %vm1276, %v1274
        %v1278 = vld [vmem:[#allocation2] sm:$0xff]
        %v1279 = vld [vmem:[#allocation2 + $0x8] sm:$0xff]
        %v1280 = vld [vmem:[#allocation2 + $0x10] sm:$0xff]
        %v1281 = vld [vmem:[#allocation2 + $0x18] sm:$0xff]
        %v1282 = vld [vmem:[#allocation2 + $0x20] sm:$0xff]
        %v1283 = vld [vmem:[#allocation2 + $0x28] sm:$0xf]
        %v1289 = vcombine.high %v1278, %v1278
        %v1290 = vcombine.high %v1279, %v1279
        %v1291 = vcombine.high %v1280, %v1280
        %v1292 = vcombine.high %v1281, %v1281
        %v1293 = vcombine.high %v1282, %v1282
        %v1299 = vpack.c.bf16 %v1278, %v1278
        %v1300 = vpack.c.bf16 %v1289, %v1289
        %v1301 = vpack.c.bf16 %v1279, %v1279
        %v1302 = vpack.c.bf16 %v1290, %v1290
        %v1303 = vpack.c.bf16 %v1280, %v1280
        %v1304 = vpack.c.bf16 %v1291, %v1291
        %v1305 = vpack.c.bf16 %v1281, %v1281
        %v1306 = vpack.c.bf16 %v1292, %v1292
        %v1307 = vpack.c.bf16 %v1282, %v1282
        %v1308 = vpack.c.bf16 %v1293, %v1293
        %v1309 = vpack.c.bf16 %v1283, %v1283
        %v1310 = vld [vmem:[%s3] sm:$0xf]
        %v1311 = vld [vmem:[%s4] sm:$0xff]
        %v1312 = vld [vmem:[%s5] sm:$0xff]
        %v1313 = vld [vmem:[%s6] sm:$0xff]
        %v1314 = vld [vmem:[%s11] sm:$0xff]
        %v1315 = vld [vmem:[%s11 + $0x8] sm:$0x3]
        %v1326 = vrot.slane %v1299, 6
        %v1327 = vrot.slane %v1300, 6
        %v1328 = vrot.slane %v1301, 6
        %v1329 = vrot.slane %v1302, 6
        %v1330 = vrot.slane %v1303, 6
        %v1331 = vrot.slane %v1304, 6
        %v1332 = vrot.slane %v1305, 6
        %v1333 = vrot.slane %v1306, 6
        %v1334 = vrot.slane %v1307, 6
        %v1335 = vrot.slane %v1308, 6
        %1336 = vrot.lane.b32.xlu0 %v1326, 127
        %v1337 = vpop.permute.xlu0 %1336
        %1338 = vrot.lane.b32.xlu0 %v1327, 127
        %v1339 = vpop.permute.xlu0 %1338
        %1340 = vrot.lane.b32.xlu0 %v1328, 127
        %v1341 = vpop.permute.xlu0 %1340
        %1342 = vrot.lane.b32.xlu0 %v1329, 127
        %v1343 = vpop.permute.xlu0 %1342
        %1344 = vrot.lane.b32.xlu0 %v1330, 127
        %v1345 = vpop.permute.xlu0 %1344
        %1346 = vrot.lane.b32.xlu0 %v1331, 127
        %v1347 = vpop.permute.xlu0 %1346
        %1348 = vrot.lane.b32.xlu0 %v1332, 127
        %v1349 = vpop.permute.xlu0 %1348
        %1350 = vrot.lane.b32.xlu0 %v1333, 127
        %v1351 = vpop.permute.xlu0 %1350
        %1352 = vrot.lane.b32.xlu0 %v1334, 127
        %v1353 = vpop.permute.xlu0 %1352
        %1354 = vrot.lane.b32.xlu0 %v1335, 127
        %v1355 = vpop.permute.xlu0 %1354
        %vm1356 = vcmask 1039360
        %v1357 = vsel %vm1356, %v1337, %v1339
        %v1358 = vsel %vm1356, %v1339, %v1341
        %v1359 = vsel %vm1356, %v1341, %v1343
        %v1360 = vsel %vm1356, %v1343, %v1345
        %v1361 = vsel %vm1356, %v1345, %v1347
        %v1362 = vsel %vm1356, %v1347, %v1349
        %v1363 = vsel %vm1356, %v1349, %v1351
        %v1364 = vsel %vm1356, %v1351, %v1353
        %v1365 = vsel %vm1356, %v1353, %v1355
        %v1366 = vrot.slane %v1299, 4
        %v1367 = vrot.slane %v1300, 4
        %v1368 = vrot.slane %v1301, 4
        %v1369 = vrot.slane %v1302, 4
        %v1370 = vrot.slane %v1303, 4
        %v1371 = vrot.slane %v1304, 4
        %v1372 = vrot.slane %v1305, 4
        %v1373 = vrot.slane %v1306, 4
        %v1374 = vrot.slane %v1307, 4
        %v1375 = vrot.slane %v1308, 4
        %1376 = vrot.lane.b32.xlu0 %v1366, 126
        %v1377 = vpop.permute.xlu0 %1376
        %1378 = vrot.lane.b32.xlu0 %v1367, 126
        %v1379 = vpop.permute.xlu0 %1378
        %1380 = vrot.lane.b32.xlu0 %v1368, 126
        %v1381 = vpop.permute.xlu0 %1380
        %1382 = vrot.lane.b32.xlu0 %v1369, 126
        %v1383 = vpop.permute.xlu0 %1382
        %1384 = vrot.lane.b32.xlu0 %v1370, 126
        %v1385 = vpop.permute.xlu0 %1384
        %1386 = vrot.lane.b32.xlu0 %v1371, 126
        %v1387 = vpop.permute.xlu0 %1386
        %1388 = vrot.lane.b32.xlu0 %v1372, 126
        %v1389 = vpop.permute.xlu0 %1388
        %1390 = vrot.lane.b32.xlu0 %v1373, 126
        %v1391 = vpop.permute.xlu0 %1390
        %1392 = vrot.lane.b32.xlu0 %v1374, 126
        %v1393 = vpop.permute.xlu0 %1392
        %1394 = vrot.lane.b32.xlu0 %v1375, 126
        %v1395 = vpop.permute.xlu0 %1394
        %vm1396 = vcmask 1031168
        %v1397 = vsel %vm1396, %v1377, %v1379
        %v1398 = vsel %vm1396, %v1379, %v1381
        %v1399 = vsel %vm1396, %v1381, %v1383
        %v1400 = vsel %vm1396, %v1383, %v1385
        %v1401 = vsel %vm1396, %v1385, %v1387
        %v1402 = vsel %vm1396, %v1387, %v1389
        %v1403 = vsel %vm1396, %v1389, %v1391
        %v1404 = vsel %vm1396, %v1391, %v1393
        %v1405 = vsel %vm1396, %v1393, %v1395
        %v1406 = vrot.slane %v1299, 2
        %v1407 = vrot.slane %v1300, 2
        %v1408 = vrot.slane %v1301, 2
        %v1409 = vrot.slane %v1302, 2
        %v1410 = vrot.slane %v1303, 2
        %v1411 = vrot.slane %v1304, 2
        %v1412 = vrot.slane %v1305, 2
        %v1413 = vrot.slane %v1306, 2
        %v1414 = vrot.slane %v1307, 2
        %v1415 = vrot.slane %v1308, 2
        %1416 = vrot.lane.b32.xlu0 %v1406, 94
        %v1417 = vpop.permute.xlu0 %1416
        %1418 = vrot.lane.b32.xlu0 %v1407, 94
        %v1419 = vpop.permute.xlu0 %1418
        %1420 = vrot.lane.b32.xlu0 %v1408, 94
        %v1421 = vpop.permute.xlu0 %1420
        %1422 = vrot.lane.b32.xlu0 %v1409, 94
        %v1423 = vpop.permute.xlu0 %1422
        %1424 = vrot.lane.b32.xlu0 %v1410, 94
        %v1425 = vpop.permute.xlu0 %1424
        %1426 = vrot.lane.b32.xlu0 %v1411, 94
        %v1427 = vpop.permute.xlu0 %1426
        %1428 = vrot.lane.b32.xlu0 %v1412, 94
        %v1429 = vpop.permute.xlu0 %1428
        %1430 = vrot.lane.b32.xlu0 %v1413, 94
        %v1431 = vpop.permute.xlu0 %1430
        %1432 = vrot.lane.b32.xlu0 %v1414, 94
        %v1433 = vpop.permute.xlu0 %1432
        %1434 = vrot.lane.b32.xlu0 %v1415, 94
        %v1435 = vpop.permute.xlu0 %1434
        %vm1436 = vcmask 769024
        %v1437 = vsel %vm1436, %v1417, %v1419
        %v1438 = vsel %vm1436, %v1419, %v1421
        %v1439 = vsel %vm1436, %v1421, %v1423
        %v1440 = vsel %vm1436, %v1423, %v1425
        %v1441 = vsel %vm1436, %v1425, %v1427
        %v1442 = vsel %vm1436, %v1427, %v1429
        %v1443 = vsel %vm1436, %v1429, %v1431
        %v1444 = vsel %vm1436, %v1431, %v1433
        %v1445 = vsel %vm1436, %v1433, %v1435
        %1446 = vrot.lane.b32.xlu0 %v1299, 93
        %v1447 = vpop.permute.xlu0 %1446
        %1448 = vrot.lane.b32.xlu0 %v1300, 93
        %v1449 = vpop.permute.xlu0 %1448
        %1450 = vrot.lane.b32.xlu0 %v1301, 93
        %v1451 = vpop.permute.xlu0 %1450
        %1452 = vrot.lane.b32.xlu0 %v1302, 93
        %v1453 = vpop.permute.xlu0 %1452
        %1454 = vrot.lane.b32.xlu0 %v1303, 93
        %v1455 = vpop.permute.xlu0 %1454
        %1456 = vrot.lane.b32.xlu0 %v1304, 93
        %v1457 = vpop.permute.xlu0 %1456
        %1458 = vrot.lane.b32.xlu0 %v1305, 93
        %v1459 = vpop.permute.xlu0 %1458
        %1460 = vrot.lane.b32.xlu0 %v1306, 93
        %v1461 = vpop.permute.xlu0 %1460
        %1462 = vrot.lane.b32.xlu0 %v1307, 93
        %v1463 = vpop.permute.xlu0 %1462
        %1464 = vrot.lane.b32.xlu0 %v1308, 93
        %v1465 = vpop.permute.xlu0 %1464
        %vm1466 = vcmask 760832
        %v1467 = vsel %vm1466, %v1447, %v1449
        %v1468 = vsel %vm1466, %v1449, %v1451
        %v1469 = vsel %vm1466, %v1451, %v1453
        %v1470 = vsel %vm1466, %v1453, %v1455
        %v1471 = vsel %vm1466, %v1455, %v1457
        %v1472 = vsel %vm1466, %v1457, %v1459
        %v1473 = vsel %vm1466, %v1459, %v1461
        %v1474 = vsel %vm1466, %v1461, %v1463
        %v1475 = vsel %vm1466, %v1463, %v1465
        %1476 = vrot.lane.b32.xlu0 %v1326, 92
        %v1477 = vpop.permute.xlu0 %1476
        %1478 = vrot.lane.b32.xlu0 %v1327, 92
        %v1479 = vpop.permute.xlu0 %1478
        %1480 = vrot.lane.b32.xlu0 %v1328, 92
        %v1481 = vpop.permute.xlu0 %1480
        %1482 = vrot.lane.b32.xlu0 %v1329, 92
        %v1483 = vpop.permute.xlu0 %1482
        %1484 = vrot.lane.b32.xlu0 %v1330, 92
        %v1485 = vpop.permute.xlu0 %1484
        %1486 = vrot.lane.b32.xlu0 %v1331, 92
        %v1487 = vpop.permute.xlu0 %1486
        %1488 = vrot.lane.b32.xlu0 %v1332, 92
        %v1489 = vpop.permute.xlu0 %1488
        %1490 = vrot.lane.b32.xlu0 %v1333, 92
        %v1491 = vpop.permute.xlu0 %1490
        %1492 = vrot.lane.b32.xlu0 %v1334, 92
        %v1493 = vpop.permute.xlu0 %1492
        %1494 = vrot.lane.b32.xlu0 %v1335, 92
        %v1495 = vpop.permute.xlu0 %1494
        %vm1496 = vcmask 752640
        %v1497 = vsel %vm1496, %v1477, %v1479
        %v1498 = vsel %vm1496, %v1479, %v1481
        %v1499 = vsel %vm1496, %v1481, %v1483
        %v1500 = vsel %vm1496, %v1483, %v1485
        %v1501 = vsel %vm1496, %v1485, %v1487
        %v1502 = vsel %vm1496, %v1487, %v1489
        %v1503 = vsel %vm1496, %v1489, %v1491
        %v1504 = vsel %vm1496, %v1491, %v1493
        %v1505 = vsel %vm1496, %v1493, %v1495
        %v1507 = vrot.slane %v1309, 4
        %1508 = vrot.lane.b32.xlu0 %v1366, 60
        %v1509 = vpop.permute.xlu0 %1508
        %1510 = vrot.lane.b32.xlu0 %v1367, 60
        %v1511 = vpop.permute.xlu0 %1510
        %1512 = vrot.lane.b32.xlu0 %v1368, 60
        %v1513 = vpop.permute.xlu0 %1512
        %1514 = vrot.lane.b32.xlu0 %v1369, 60
        %v1515 = vpop.permute.xlu0 %1514
        %1516 = vrot.lane.b32.xlu0 %v1370, 60
        %v1517 = vpop.permute.xlu0 %1516
        %1518 = vrot.lane.b32.xlu0 %v1371, 60
        %v1519 = vpop.permute.xlu0 %1518
        %1520 = vrot.lane.b32.xlu0 %v1372, 60
        %v1521 = vpop.permute.xlu0 %1520
        %1522 = vrot.lane.b32.xlu0 %v1373, 60
        %v1523 = vpop.permute.xlu0 %1522
        %1524 = vrot.lane.b32.xlu0 %v1374, 60
        %v1525 = vpop.permute.xlu0 %1524
        %1526 = vrot.lane.b32.xlu0 %v1375, 60
        %v1527 = vpop.permute.xlu0 %1526
        %1528 = vrot.lane.b32.xlu0 %v1507, 60
        %v1529 = vpop.permute.xlu0 %1528
        %vm1530 = vcmask 490496
        %v1531 = vsel %vm1530, %v1509, %v1511
        %v1532 = vsel %vm1530, %v1511, %v1513
        %v1533 = vsel %vm1530, %v1513, %v1515
        %v1534 = vsel %vm1530, %v1515, %v1517
        %v1535 = vsel %vm1530, %v1517, %v1519
        %v1536 = vsel %vm1530, %v1519, %v1521
        %v1537 = vsel %vm1530, %v1521, %v1523
        %v1538 = vsel %vm1530, %v1523, %v1525
        %v1539 = vsel %vm1530, %v1525, %v1527
        %v1540 = vsel %vm1530, %v1527, %v1529
        %v1541 = vrot.slane %v1309, 2
        %1542 = vrot.lane.b32.xlu0 %v1406, 59
        %v1543 = vpop.permute.xlu0 %1542
        %1544 = vrot.lane.b32.xlu0 %v1407, 59
        %v1545 = vpop.permute.xlu0 %1544
        %1546 = vrot.lane.b32.xlu0 %v1408, 59
        %v1547 = vpop.permute.xlu0 %1546
        %1548 = vrot.lane.b32.xlu0 %v1409, 59
        %v1549 = vpop.permute.xlu0 %1548
        %1550 = vrot.lane.b32.xlu0 %v1410, 59
        %v1551 = vpop.permute.xlu0 %1550
        %1552 = vrot.lane.b32.xlu0 %v1411, 59
        %v1553 = vpop.permute.xlu0 %1552
        %1554 = vrot.lane.b32.xlu0 %v1412, 59
        %v1555 = vpop.permute.xlu0 %1554
        %1556 = vrot.lane.b32.xlu0 %v1413, 59
        %v1557 = vpop.permute.xlu0 %1556
        %1558 = vrot.lane.b32.xlu0 %v1414, 59
        %v1559 = vpop.permute.xlu0 %1558
        %1560 = vrot.lane.b32.xlu0 %v1415, 59
        %v1561 = vpop.permute.xlu0 %1560
        %1562 = vrot.lane.b32.xlu0 %v1541, 59
        %v1563 = vpop.permute.xlu0 %1562
        %vm1564 = vcmask 482304
        %v1565 = vsel %vm1564, %v1543, %v1545
        %v1566 = vsel %vm1564, %v1545, %v1547
        %v1567 = vsel %vm1564, %v1547, %v1549
        %v1568 = vsel %vm1564, %v1549, %v1551
        %v1569 = vsel %vm1564, %v1551, %v1553
        %v1570 = vsel %vm1564, %v1553, %v1555
        %v1571 = vsel %vm1564, %v1555, %v1557
        %v1572 = vsel %vm1564, %v1557, %v1559
        %v1573 = vsel %vm1564, %v1559, %v1561
        %v1574 = vsel %vm1564, %v1561, %v1563
        %1575 = vrot.lane.b32.xlu0 %v1299, 58
        %v1576 = vpop.permute.xlu0 %1575
        %1577 = vrot.lane.b32.xlu0 %v1300, 58
        %v1578 = vpop.permute.xlu0 %1577
        %1579 = vrot.lane.b32.xlu0 %v1301, 58
        %v1580 = vpop.permute.xlu0 %1579
        %1581 = vrot.lane.b32.xlu0 %v1302, 58
        %v1582 = vpop.permute.xlu0 %1581
        %1583 = vrot.lane.b32.xlu0 %v1303, 58
        %v1584 = vpop.permute.xlu0 %1583
        %1585 = vrot.lane.b32.xlu0 %v1304, 58
        %v1586 = vpop.permute.xlu0 %1585
        %1587 = vrot.lane.b32.xlu0 %v1305, 58
        %v1588 = vpop.permute.xlu0 %1587
        %1589 = vrot.lane.b32.xlu0 %v1306, 58
        %v1590 = vpop.permute.xlu0 %1589
        %1591 = vrot.lane.b32.xlu0 %v1307, 58
        %v1592 = vpop.permute.xlu0 %1591
        %1593 = vrot.lane.b32.xlu0 %v1308, 58
        %v1594 = vpop.permute.xlu0 %1593
        %1595 = vrot.lane.b32.xlu0 %v1309, 58
        %v1596 = vpop.permute.xlu0 %1595
        %vm1597 = vcmask 474112
        %v1598 = vsel %vm1597, %v1576, %v1578
        %v1599 = vsel %vm1597, %v1578, %v1580
        %v1600 = vsel %vm1597, %v1580, %v1582
        %v1601 = vsel %vm1597, %v1582, %v1584
        %v1602 = vsel %vm1597, %v1584, %v1586
        %v1603 = vsel %vm1597, %v1586, %v1588
        %v1604 = vsel %vm1597, %v1588, %v1590
        %v1605 = vsel %vm1597, %v1590, %v1592
        %v1606 = vsel %vm1597, %v1592, %v1594
        %v1607 = vsel %vm1597, %v1594, %v1596
        %vm1608 = vcmask 1041408
        %v1611 = vsel %vm1608, %v1299, %v1357
        %v1614 = vsel %vm1608, %v1300, %v1358
        %v1617 = vsel %vm1608, %v1301, %v1359
        %v1620 = vsel %vm1608, %v1302, %v1360
        %v1623 = vsel %vm1608, %v1303, %v1361
        %v1626 = vsel %vm1608, %v1304, %v1362
        %v1629 = vsel %vm1608, %v1305, %v1363
        %v1632 = vsel %vm1608, %v1306, %v1364
        %v1635 = vsel %vm1608, %v1307, %v1365
        %v1638 = vsel %vm1608, %v1308, %v1355
        %vm1639 = vcmask 1043456
        %v1641 = vsel %vm1639, %v1611, %v1397
        %v1643 = vsel %vm1639, %v1614, %v1398
        %v1645 = vsel %vm1639, %v1617, %v1399
        %v1647 = vsel %vm1639, %v1620, %v1400
        %v1649 = vsel %vm1639, %v1623, %v1401
        %v1651 = vsel %vm1639, %v1626, %v1402
        %v1653 = vsel %vm1639, %v1629, %v1403
        %v1655 = vsel %vm1639, %v1632, %v1404
        %v1657 = vsel %vm1639, %v1635, %v1405
        %v1659 = vsel %vm1639, %v1638, %v1395
        %vm1660 = vcmask 1045504
        %v1662 = vsel %vm1660, %v1641, %v1437
        %v1665 = vsel %vm1660, %v1643, %v1438
        %v1668 = vsel %vm1660, %v1645, %v1439
        %v1671 = vsel %vm1660, %v1647, %v1440
        %v1674 = vsel %vm1660, %v1649, %v1441
        %v1677 = vsel %vm1660, %v1651, %v1442
        %v1680 = vsel %vm1660, %v1653, %v1443
        %v1683 = vsel %vm1660, %v1655, %v1444
        %v1686 = vsel %vm1660, %v1657, %v1445
        %v1689 = vsel %vm1660, %v1659, %v1435
        %v1693 = vsel %vm1608, %v1467, %v1497
        %v1696 = vsel %vm1608, %v1468, %v1498
        %v1699 = vsel %vm1608, %v1469, %v1499
        %v1702 = vsel %vm1608, %v1470, %v1500
        %v1705 = vsel %vm1608, %v1471, %v1501
        %v1708 = vsel %vm1608, %v1472, %v1502
        %v1711 = vsel %vm1608, %v1473, %v1503
        %v1714 = vsel %vm1608, %v1474, %v1504
        %v1717 = vsel %vm1608, %v1475, %v1505
        %v1720 = vsel %vm1608, %v1465, %v1495
        %v1722 = vsel %vm1639, %v1693, %v1531
        %v1724 = vsel %vm1639, %v1696, %v1532
        %v1726 = vsel %vm1639, %v1699, %v1533
        %v1728 = vsel %vm1639, %v1702, %v1534
        %v1730 = vsel %vm1639, %v1705, %v1535
        %v1732 = vsel %vm1639, %v1708, %v1536
        %v1734 = vsel %vm1639, %v1711, %v1537
        %v1736 = vsel %vm1639, %v1714, %v1538
        %v1738 = vsel %vm1639, %v1717, %v1539
        %v1740 = vsel %vm1639, %v1720, %v1540
        %v1742 = vsel %vm1660, %v1722, %v1565
        %v1745 = vsel %vm1660, %v1724, %v1566
        %v1748 = vsel %vm1660, %v1726, %v1567
        %v1751 = vsel %vm1660, %v1728, %v1568
        %v1754 = vsel %vm1660, %v1730, %v1569
        %v1757 = vsel %vm1660, %v1732, %v1570
        %v1760 = vsel %vm1660, %v1734, %v1571
        %v1763 = vsel %vm1660, %v1736, %v1572
        %v1766 = vsel %vm1660, %v1738, %v1573
        %v1769 = vsel %vm1660, %v1740, %v1574
        %1772 = vset.pattern.permute.xlu0 0
        %1773 = vperm.xlu0 %1772, %v1311
        %v1774 = vpop.permute.xlu0 %1773
        %vm1776 = vcmask 293888
        %v1778 = vsel %vm1776, %v1310, 0
        %v1781 = vsel %vm1608, %v1598, 0
        %v1784 = vsel %vm1608, %v1599, 0
        %v1787 = vsel %vm1608, %v1600, 0
        %v1790 = vsel %vm1608, %v1601, 0
        %v1793 = vsel %vm1608, %v1602, 0
        %v1796 = vsel %vm1608, %v1603, 0
        %v1799 = vsel %vm1608, %v1604, 0
        %v1802 = vsel %vm1608, %v1605, 0
        %v1805 = vsel %vm1608, %v1606, 0
        %v1808 = vsel %vm1608, %v1607, 0
        %1810 = vmatprep.subr.bf16.mxu0 %v1665
        %1811 = vmatpush1.bf16.msra.mxu0 %v1662
        %1812 = vmatprep.subr.bf16.mxu0 %v1745
        %1813 = vmatpush1.bf16.msra.mxu0 %v1742
        %1814 = vmatprep.subr.bf16.mxu0 %v1784
        %1815 = vmatpush1.bf16.msra.mxu0 %v1781
        %1816 = vmatprep.subr.bf16.mxu0 0
        %1817 = vmatpush1.bf16.msra.mxu0 0
        %1818 = vmatprep.subr.bf16.mxu0 0
        %1819 = vmatpush1.bf16.msra.mxu0 0
        %1820 = vmatprep.subr.bf16.mxu0 0
        %1821 = vmatpush1.bf16.msra.mxu0 0
        %1822 = vmatprep.subr.bf16.mxu0 0
        %1823 = vmatpush1.bf16.msra.mxu0 0
        %1824 = vmatprep.subr.bf16.mxu0 0
        %1825 = vmatpush1.bf16.msra.mxu0 0
        %1826 = vmatprep.subr.bf16.mxu0 0
        %1827 = vmatpush1.bf16.msra.mxu0 0
        %1828 = vmatprep.subr.bf16.mxu0 0
        %1829 = vmatpush1.bf16.msra.mxu0 0
        %1830 = vmatprep.subr.bf16.mxu0 0
        %1831 = vmatpush1.bf16.msra.mxu0 0
        %1832 = vmatprep.subr.bf16.mxu0 0
        %1833 = vmatpush1.bf16.msra.mxu0 0
        %1834 = vmatprep.subr.bf16.mxu0 0
        %1835 = vmatpush1.bf16.msra.mxu0 0
        %1836 = vmatprep.subr.bf16.mxu0 0
        %1837 = vmatpush1.bf16.msra.mxu0 0
        %1838 = vmatprep.subr.bf16.mxu0 0
        %1839 = vmatpush1.bf16.msra.mxu0 0
        %1840 = vmatprep.subr.bf16.mxu0 0
        %1841 = vmatpush1.bf16.msra.mxu0 0
        %1842 = vmatprep.mubr.bf16.mxu0 0
        %1843 = vmatmul.mubr.bf16.gmra.mrb[0].mxu0 %v1778
        %v1844 = vpop.f32.mrb[0].mxu0
        %v1845 = vadd.f32 %v1774, %v1844
        %v1846 = vpop.f32.mrb[0].mxu0
        %v1847 = vadd.f32 %v1774, %v1846
        %v1848 = vpop.f32.mrb[0].mxu0
        %v1849 = vpop.f32.mrb[0].mxu0
        %1850 = vdwg.mxu0
        %1851 = vmatprep.subr.bf16.mxu0 %v1671
        %1852 = vmatpush1.bf16.msra.mxu0 %v1668
        %1853 = vmatprep.subr.bf16.mxu0 %v1751
        %1854 = vmatpush1.bf16.msra.mxu0 %v1748
        %1855 = vmatprep.subr.bf16.mxu0 %v1790
        %1856 = vmatpush1.bf16.msra.mxu0 %v1787
        %1857 = vmatprep.subr.bf16.mxu0 0
        %1858 = vmatpush1.bf16.msra.mxu0 0
        %1859 = vmatprep.subr.bf16.mxu0 0
        %1860 = vmatpush1.bf16.msra.mxu0 0
        %1861 = vmatprep.subr.bf16.mxu0 0
        %1862 = vmatpush1.bf16.msra.mxu0 0
        %1863 = vmatprep.subr.bf16.mxu0 0
        %1864 = vmatpush1.bf16.msra.mxu0 0
        %1865 = vmatprep.subr.bf16.mxu0 0
        %1866 = vmatpush1.bf16.msra.mxu0 0
        %1867 = vmatprep.subr.bf16.mxu0 0
        %1868 = vmatpush1.bf16.msra.mxu0 0
        %1869 = vmatprep.subr.bf16.mxu0 0
        %1870 = vmatpush1.bf16.msra.mxu0 0
        %1871 = vmatprep.subr.bf16.mxu0 0
        %1872 = vmatpush1.bf16.msra.mxu0 0
        %1873 = vmatprep.subr.bf16.mxu0 0
        %1874 = vmatpush1.bf16.msra.mxu0 0
        %1875 = vmatprep.subr.bf16.mxu0 0
        %1876 = vmatpush1.bf16.msra.mxu0 0
        %1877 = vmatprep.subr.bf16.mxu0 0
        %1878 = vmatpush1.bf16.msra.mxu0 0
        %1879 = vmatprep.subr.bf16.mxu0 0
        %1880 = vmatpush1.bf16.msra.mxu0 0
        %1881 = vmatprep.subr.bf16.mxu0 0
        %1882 = vmatpush1.bf16.msra.mxu0 0
        %1883 = vmatprep.mubr.bf16.mxu0 0
        %1884 = vmatmul.mubr.bf16.gmra.mrb[0].mxu0 %v1778
        %v1885 = vpop.f32.mrb[0].mxu0
        %v1886 = vadd.f32 %v1774, %v1885
        %v1887 = vpop.f32.mrb[0].mxu0
        %v1888 = vadd.f32 %v1774, %v1887
        %v1889 = vpop.f32.mrb[0].mxu0
        %v1890 = vpop.f32.mrb[0].mxu0
        %1891 = vdwg.mxu0
        %1892 = vmatprep.subr.bf16.mxu0 %v1677
        %1893 = vmatpush1.bf16.msra.mxu0 %v1674
        %1894 = vmatprep.subr.bf16.mxu0 %v1757
        %1895 = vmatpush1.bf16.msra.mxu0 %v1754
        %1896 = vmatprep.subr.bf16.mxu0 %v1796
        %1897 = vmatpush1.bf16.msra.mxu0 %v1793
        %1898 = vmatprep.subr.bf16.mxu0 0
        %1899 = vmatpush1.bf16.msra.mxu0 0
        %1900 = vmatprep.subr.bf16.mxu0 0
        %1901 = vmatpush1.bf16.msra.mxu0 0
        %1902 = vmatprep.subr.bf16.mxu0 0
        %1903 = vmatpush1.bf16.msra.mxu0 0
        %1904 = vmatprep.subr.bf16.mxu0 0
        %1905 = vmatpush1.bf16.msra.mxu0 0
        %1906 = vmatprep.subr.bf16.mxu0 0
        %1907 = vmatpush1.bf16.msra.mxu0 0
        %1908 = vmatprep.subr.bf16.mxu0 0
        %1909 = vmatpush1.bf16.msra.mxu0 0
        %1910 = vmatprep.subr.bf16.mxu0 0
        %1911 = vmatpush1.bf16.msra.mxu0 0
        %1912 = vmatprep.subr.bf16.mxu0 0
        %1913 = vmatpush1.bf16.msra.mxu0 0
        %1914 = vmatprep.subr.bf16.mxu0 0
        %1915 = vmatpush1.bf16.msra.mxu0 0
        %1916 = vmatprep.subr.bf16.mxu0 0
        %1917 = vmatpush1.bf16.msra.mxu0 0
        %1918 = vmatprep.subr.bf16.mxu0 0
        %1919 = vmatpush1.bf16.msra.mxu0 0
        %1920 = vmatprep.subr.bf16.mxu0 0
        %1921 = vmatpush1.bf16.msra.mxu0 0
        %1922 = vmatprep.subr.bf16.mxu0 0
        %1923 = vmatpush1.bf16.msra.mxu0 0
        %1924 = vmatprep.mubr.bf16.mxu0 0
        %1925 = vmatmul.mubr.bf16.gmra.mrb[0].mxu0 %v1778
        %v1926 = vpop.f32.mrb[0].mxu0
        %v1927 = vadd.f32 %v1774, %v1926
        %v1928 = vpop.f32.mrb[0].mxu0
        %v1929 = vadd.f32 %v1774, %v1928
        %v1930 = vpop.f32.mrb[0].mxu0
        %v1931 = vpop.f32.mrb[0].mxu0
        %1932 = vdwg.mxu0
        %1933 = vmatprep.subr.bf16.mxu0 %v1683
        %1934 = vmatpush1.bf16.msra.mxu0 %v1680
        %1935 = vmatprep.subr.bf16.mxu0 %v1763
        %1936 = vmatpush1.bf16.msra.mxu0 %v1760
        %1937 = vmatprep.subr.bf16.mxu0 %v1802
        %1938 = vmatpush1.bf16.msra.mxu0 %v1799
        %1939 = vmatprep.subr.bf16.mxu0 0
        %1940 = vmatpush1.bf16.msra.mxu0 0
        %1941 = vmatprep.subr.bf16.mxu0 0
        %1942 = vmatpush1.bf16.msra.mxu0 0
        %1943 = vmatprep.subr.bf16.mxu0 0
        %1944 = vmatpush1.bf16.msra.mxu0 0
        %1945 = vmatprep.subr.bf16.mxu0 0
        %1946 = vmatpush1.bf16.msra.mxu0 0
        %1947 = vmatprep.subr.bf16.mxu0 0
        %1948 = vmatpush1.bf16.msra.mxu0 0
        %1949 = vmatprep.subr.bf16.mxu0 0
        %1950 = vmatpush1.bf16.msra.mxu0 0
        %1951 = vmatprep.subr.bf16.mxu0 0
        %1952 = vmatpush1.bf16.msra.mxu0 0
        %1953 = vmatprep.subr.bf16.mxu0 0
        %1954 = vmatpush1.bf16.msra.mxu0 0
        %1955 = vmatprep.subr.bf16.mxu0 0
        %1956 = vmatpush1.bf16.msra.mxu0 0
        %1957 = vmatprep.subr.bf16.mxu0 0
        %1958 = vmatpush1.bf16.msra.mxu0 0
        %1959 = vmatprep.subr.bf16.mxu0 0
        %1960 = vmatpush1.bf16.msra.mxu0 0
        %1961 = vmatprep.subr.bf16.mxu0 0
        %1962 = vmatpush1.bf16.msra.mxu0 0
        %1963 = vmatprep.subr.bf16.mxu0 0
        %1964 = vmatpush1.bf16.msra.mxu0 0
        %1965 = vmatprep.mubr.bf16.mxu0 0
        %1966 = vmatmul.mubr.bf16.gmra.mrb[0].mxu0 %v1778
        %v1967 = vpop.f32.mrb[0].mxu0
        %v1968 = vadd.f32 %v1774, %v1967
        %v1969 = vpop.f32.mrb[0].mxu0
        %v1970 = vadd.f32 %v1774, %v1969
        %v1971 = vpop.f32.mrb[0].mxu0
        %v1972 = vpop.f32.mrb[0].mxu0
        %1973 = vdwg.mxu0
        %1974 = vmatprep.subr.bf16.mxu0 %v1689
        %1975 = vmatpush1.bf16.msra.mxu0 %v1686
        %1976 = vmatprep.subr.bf16.mxu0 %v1769
        %1977 = vmatpush1.bf16.msra.mxu0 %v1766
        %1978 = vmatprep.subr.bf16.mxu0 %v1808
        %1979 = vmatpush1.bf16.msra.mxu0 %v1805
        %1980 = vmatprep.subr.bf16.mxu0 0
        %1981 = vmatpush1.bf16.msra.mxu0 0
        %1982 = vmatprep.subr.bf16.mxu0 0
        %1983 = vmatpush1.bf16.msra.mxu0 0
        %1984 = vmatprep.subr.bf16.mxu0 0
        %1985 = vmatpush1.bf16.msra.mxu0 0
        %1986 = vmatprep.subr.bf16.mxu0 0
        %1987 = vmatpush1.bf16.msra.mxu0 0
        %1988 = vmatprep.subr.bf16.mxu0 0
        %1989 = vmatpush1.bf16.msra.mxu0 0
        %1990 = vmatprep.subr.bf16.mxu0 0
        %1991 = vmatpush1.bf16.msra.mxu0 0
        %1992 = vmatprep.subr.bf16.mxu0 0
        %1993 = vmatpush1.bf16.msra.mxu0 0
        %1994 = vmatprep.subr.bf16.mxu0 0
        %1995 = vmatpush1.bf16.msra.mxu0 0
        %1996 = vmatprep.subr.bf16.mxu0 0
        %1997 = vmatpush1.bf16.msra.mxu0 0
        %1998 = vmatprep.subr.bf16.mxu0 0
        %1999 = vmatpush1.bf16.msra.mxu0 0
        %2000 = vmatprep.subr.bf16.mxu0 0
        %2001 = vmatpush1.bf16.msra.mxu0 0
        %2002 = vmatprep.subr.bf16.mxu0 0
        %2003 = vmatpush1.bf16.msra.mxu0 0
        %2004 = vmatprep.subr.bf16.mxu0 0
        %2005 = vmatpush1.bf16.msra.mxu0 0
        %2006 = vmatprep.mubr.bf16.mxu0 0
        %2007 = vmatmul.mubr.bf16.gmra.mrb[0].mxu0 %v1778
        %v2008 = vpop.f32.mrb[0].mxu0
        %v2009 = vadd.f32 %v1774, %v2008
        %v2010 = vpop.f32.mrb[0].mxu0
        %v2011 = vadd.f32 %v1774, %v2010
        %v2012 = vpop.f32.mrb[0].mxu0
        %v2013 = vpop.f32.mrb[0].mxu0
        %2014 = vdwg.mxu0
        %v2015 = vmax.f32 %v1845, 0.0
        %v2016 = vmax.f32 %v1847, 0.0
        %v2017 = vmax.f32 %v1886, 0.0
        %v2018 = vmax.f32 %v1888, 0.0
        %v2019 = vmax.f32 %v1927, 0.0
        %v2020 = vmax.f32 %v1929, 0.0
        %v2021 = vmax.f32 %v1968, 0.0
        %v2022 = vmax.f32 %v1970, 0.0
        %v2023 = vmax.f32 %v2009, 0.0
        %v2024 = vmax.f32 %v2011, 0.0
        %2026 = vset.pattern.permute.xlu0 0
        %2027 = vperm.xlu0 %2026, %v1312
        %v2028 = vpop.permute.xlu0 %2027
        %v2030 = vmul.f32 %v2015, %v2028
        %v2031 = vmul.f32 %v2016, %v2028
        %v2032 = vmul.f32 %v2017, %v2028
        %v2033 = vmul.f32 %v2018, %v2028
        %v2034 = vmul.f32 %v2019, %v2028
        %v2035 = vmul.f32 %v2020, %v2028
        %v2036 = vmul.f32 %v2021, %v2028
        %v2037 = vmul.f32 %v2022, %v2028
        %v2038 = vmul.f32 %v2023, %v2028
        %v2039 = vmul.f32 %v2024, %v2028
        %2041 = vset.pattern.permute.xlu0 0
        %2042 = vperm.xlu0 %2041, %v1313
        %v2043 = vpop.permute.xlu0 %2042
        %v2045 = vadd.f32 %v2030, %v2043
        %v2046 = vadd.f32 %v2031, %v2043
        %v2047 = vadd.f32 %v2032, %v2043
        %v2048 = vadd.f32 %v2033, %v2043
        %v2049 = vadd.f32 %v2034, %v2043
        %v2050 = vadd.f32 %v2035, %v2043
        %v2051 = vadd.f32 %v2036, %v2043
        %v2052 = vadd.f32 %v2037, %v2043
        %v2053 = vadd.f32 %v2038, %v2043
        %v2054 = vadd.f32 %v2039, %v2043
        %v2057 = vlaneseq
        %v2058 = vshrl.u32 %v2057, 7
        %v2059 = vsub.s32 0, %v2058
        %v2060 = vrot.slane %v1314, %v2059
        %v2061 = vlaneseq
        %v2062 = vshrl.u32 %v2061, 7
        %v2063 = vsub.s32 1, %v2062
        %v2064 = vrot.slane %v1314, %v2063
        %v2065 = vlaneseq
        %v2066 = vshrl.u32 %v2065, 7
        %v2067 = vsub.s32 2, %v2066
        %v2068 = vrot.slane %v1314, %v2067
        %v2069 = vlaneseq
        %v2070 = vshrl.u32 %v2069, 7
        %v2071 = vsub.s32 3, %v2070
        %v2072 = vrot.slane %v1314, %v2071
        %v2073 = vlaneseq
        %v2074 = vshrl.u32 %v2073, 7
        %v2075 = vsub.s32 4, %v2074
        %v2076 = vrot.slane %v1314, %v2075
        %v2077 = vlaneseq
        %v2078 = vshrl.u32 %v2077, 7
        %v2079 = vsub.s32 5, %v2078
        %v2080 = vrot.slane %v1314, %v2079
        %v2081 = vlaneseq
        %v2082 = vshrl.u32 %v2081, 7
        %v2083 = vsub.s32 6, %v2082
        %v2084 = vrot.slane %v1314, %v2083
        %v2085 = vlaneseq
        %v2086 = vshrl.u32 %v2085, 7
        %v2087 = vsub.s32 7, %v2086
        %v2088 = vrot.slane %v1314, %v2087
        %v2089 = vlaneseq
        %v2090 = vshrl.u32 %v2089, 7
        %v2091 = vsub.s32 0, %v2090
        %v2092 = vrot.slane %v1315, %v2091
        %v2093 = vlaneseq
        %v2094 = vshrl.u32 %v2093, 7
        %v2095 = vsub.s32 1, %v2094
        %v2096 = vrot.slane %v1315, %v2095
        %v2107 = vmul.f32 %v2045, %v2060
        %v2108 = vmul.f32 %v2046, %v2064
        %v2109 = vmul.f32 %v2047, %v2068
        %v2110 = vmul.f32 %v2048, %v2072
        %v2111 = vmul.f32 %v2049, %v2076
        %v2112 = vmul.f32 %v2050, %v2080
        %v2113 = vmul.f32 %v2051, %v2084
        %v2114 = vmul.f32 %v2052, %v2088
        %v2115 = vmul.f32 %v2053, %v2092
        %v2116 = vmul.f32 %v2054, %v2096
        %v2117 = vpack.c.bf16 %v2107, %v2107
        %v2118 = vpack.c.bf16 %v2108, %v2108
        %v2119 = vpack.c.bf16 %v2109, %v2109
        %v2120 = vpack.c.bf16 %v2110, %v2110
        %v2121 = vpack.c.bf16 %v2111, %v2111
        %v2122 = vpack.c.bf16 %v2112, %v2112
        %v2123 = vpack.c.bf16 %v2113, %v2113
        %v2124 = vpack.c.bf16 %v2114, %v2114
        %v2125 = vpack.c.bf16 %v2115, %v2115
        %v2126 = vpack.c.bf16 %v2116, %v2116
        %v2127 = vld [vmem:[%s7] sm:$0x3]
        %v2128 = vld [vmem:[%s8] sm:$0xf]
        %v2129 = vld [vmem:[%s9] sm:$0xf]
        %v2130 = vld [vmem:[%s10] sm:$0xf]
        %v2141 = vrot.slane %v2117, 4
        %v2142 = vrot.slane %v2118, 4
        %v2143 = vrot.slane %v2119, 4
        %v2144 = vrot.slane %v2120, 4
        %v2145 = vrot.slane %v2121, 4
        %v2146 = vrot.slane %v2122, 4
        %v2147 = vrot.slane %v2123, 4
        %v2148 = vrot.slane %v2124, 4
        %v2149 = vrot.slane %v2125, 4
        %v2150 = vrot.slane %v2126, 4
        %2151 = vrot.lane.b32.xlu0 %v2141, 127
        %v2152 = vpop.permute.xlu0 %2151
        %2153 = vrot.lane.b32.xlu0 %v2142, 127
        %v2154 = vpop.permute.xlu0 %2153
        %2155 = vrot.lane.b32.xlu0 %v2143, 127
        %v2156 = vpop.permute.xlu0 %2155
        %2157 = vrot.lane.b32.xlu0 %v2144, 127
        %v2158 = vpop.permute.xlu0 %2157
        %2159 = vrot.lane.b32.xlu0 %v2145, 127
        %v2160 = vpop.permute.xlu0 %2159
        %2161 = vrot.lane.b32.xlu0 %v2146, 127
        %v2162 = vpop.permute.xlu0 %2161
        %2163 = vrot.lane.b32.xlu0 %v2147, 127
        %v2164 = vpop.permute.xlu0 %2163
        %2165 = vrot.lane.b32.xlu0 %v2148, 127
        %v2166 = vpop.permute.xlu0 %2165
        %2167 = vrot.lane.b32.xlu0 %v2149, 127
        %v2168 = vpop.permute.xlu0 %2167
        %2169 = vrot.lane.b32.xlu0 %v2150, 127
        %v2170 = vpop.permute.xlu0 %2169
        %v2171 = vsel %vm1356, %v2152, %v2154
        %v2172 = vsel %vm1356, %v2154, %v2156
        %v2173 = vsel %vm1356, %v2156, %v2158
        %v2174 = vsel %vm1356, %v2158, %v2160
        %v2175 = vsel %vm1356, %v2160, %v2162
        %v2176 = vsel %vm1356, %v2162, %v2164
        %v2177 = vsel %vm1356, %v2164, %v2166
        %v2178 = vsel %vm1356, %v2166, %v2168
        %v2179 = vsel %vm1356, %v2168, %v2170
        %2180 = vrot.lane.b32.xlu0 %v2117, 126
        %v2181 = vpop.permute.xlu0 %2180
        %2182 = vrot.lane.b32.xlu0 %v2118, 126
        %v2183 = vpop.permute.xlu0 %2182
        %2184 = vrot.lane.b32.xlu0 %v2119, 126
        %v2185 = vpop.permute.xlu0 %2184
        %2186 = vrot.lane.b32.xlu0 %v2120, 126
        %v2187 = vpop.permute.xlu0 %2186
        %2188 = vrot.lane.b32.xlu0 %v2121, 126
        %v2189 = vpop.permute.xlu0 %2188
        %2190 = vrot.lane.b32.xlu0 %v2122, 126
        %v2191 = vpop.permute.xlu0 %2190
        %2192 = vrot.lane.b32.xlu0 %v2123, 126
        %v2193 = vpop.permute.xlu0 %2192
        %2194 = vrot.lane.b32.xlu0 %v2124, 126
        %v2195 = vpop.permute.xlu0 %2194
        %2196 = vrot.lane.b32.xlu0 %v2125, 126
        %v2197 = vpop.permute.xlu0 %2196
        %2198 = vrot.lane.b32.xlu0 %v2126, 126
        %v2199 = vpop.permute.xlu0 %2198
        %v2200 = vsel %vm1396, %v2181, %v2183
        %v2201 = vsel %vm1396, %v2183, %v2185
        %v2202 = vsel %vm1396, %v2185, %v2187
        %v2203 = vsel %vm1396, %v2187, %v2189
        %v2204 = vsel %vm1396, %v2189, %v2191
        %v2205 = vsel %vm1396, %v2191, %v2193
        %v2206 = vsel %vm1396, %v2193, %v2195
        %v2207 = vsel %vm1396, %v2195, %v2197
        %v2208 = vsel %vm1396, %v2197, %v2199
        %2209 = vrot.lane.b32.xlu0 %v2141, 94
        %v2210 = vpop.permute.xlu0 %2209
        %2211 = vrot.lane.b32.xlu0 %v2142, 94
        %v2212 = vpop.permute.xlu0 %2211
        %2213 = vrot.lane.b32.xlu0 %v2143, 94
        %v2214 = vpop.permute.xlu0 %2213
        %2215 = vrot.lane.b32.xlu0 %v2144, 94
        %v2216 = vpop.permute.xlu0 %2215
        %2217 = vrot.lane.b32.xlu0 %v2145, 94
        %v2218 = vpop.permute.xlu0 %2217
        %2219 = vrot.lane.b32.xlu0 %v2146, 94
        %v2220 = vpop.permute.xlu0 %2219
        %2221 = vrot.lane.b32.xlu0 %v2147, 94
        %v2222 = vpop.permute.xlu0 %2221
        %2223 = vrot.lane.b32.xlu0 %v2148, 94
        %v2224 = vpop.permute.xlu0 %2223
        %2225 = vrot.lane.b32.xlu0 %v2149, 94
        %v2226 = vpop.permute.xlu0 %2225
        %2227 = vrot.lane.b32.xlu0 %v2150, 94
        %v2228 = vpop.permute.xlu0 %2227
        %v2229 = vsel %vm1436, %v2210, %v2212
        %v2230 = vsel %vm1436, %v2212, %v2214
        %v2231 = vsel %vm1436, %v2214, %v2216
        %v2232 = vsel %vm1436, %v2216, %v2218
        %v2233 = vsel %vm1436, %v2218, %v2220
        %v2234 = vsel %vm1436, %v2220, %v2222
        %v2235 = vsel %vm1436, %v2222, %v2224
        %v2236 = vsel %vm1436, %v2224, %v2226
        %v2237 = vsel %vm1436, %v2226, %v2228
        %2238 = vrot.lane.b32.xlu0 %v2117, 93
        %v2239 = vpop.permute.xlu0 %2238
        %2240 = vrot.lane.b32.xlu0 %v2118, 93
        %v2241 = vpop.permute.xlu0 %2240
        %2242 = vrot.lane.b32.xlu0 %v2119, 93
        %v2243 = vpop.permute.xlu0 %2242
        %2244 = vrot.lane.b32.xlu0 %v2120, 93
        %v2245 = vpop.permute.xlu0 %2244
        %2246 = vrot.lane.b32.xlu0 %v2121, 93
        %v2247 = vpop.permute.xlu0 %2246
        %2248 = vrot.lane.b32.xlu0 %v2122, 93
        %v2249 = vpop.permute.xlu0 %2248
        %2250 = vrot.lane.b32.xlu0 %v2123, 93
        %v2251 = vpop.permute.xlu0 %2250
        %2252 = vrot.lane.b32.xlu0 %v2124, 93
        %v2253 = vpop.permute.xlu0 %2252
        %2254 = vrot.lane.b32.xlu0 %v2125, 93
        %v2255 = vpop.permute.xlu0 %2254
        %2256 = vrot.lane.b32.xlu0 %v2126, 93
        %v2257 = vpop.permute.xlu0 %2256
        %v2258 = vsel %vm1466, %v2239, %v2241
        %v2259 = vsel %vm1466, %v2241, %v2243
        %v2260 = vsel %vm1466, %v2243, %v2245
        %v2261 = vsel %vm1466, %v2245, %v2247
        %v2262 = vsel %vm1466, %v2247, %v2249
        %v2263 = vsel %vm1466, %v2249, %v2251
        %v2264 = vsel %vm1466, %v2251, %v2253
        %v2265 = vsel %vm1466, %v2253, %v2255
        %v2266 = vsel %vm1466, %v2255, %v2257
        %2267 = vrot.lane.b32.xlu0 %v2141, 92
        %v2268 = vpop.permute.xlu0 %2267
        %2269 = vrot.lane.b32.xlu0 %v2142, 92
        %v2270 = vpop.permute.xlu0 %2269
        %2271 = vrot.lane.b32.xlu0 %v2143, 92
        %v2272 = vpop.permute.xlu0 %2271
        %2273 = vrot.lane.b32.xlu0 %v2144, 92
        %v2274 = vpop.permute.xlu0 %2273
        %2275 = vrot.lane.b32.xlu0 %v2145, 92
        %v2276 = vpop.permute.xlu0 %2275
        %2277 = vrot.lane.b32.xlu0 %v2146, 92
        %v2278 = vpop.permute.xlu0 %2277
        %2279 = vrot.lane.b32.xlu0 %v2147, 92
        %v2280 = vpop.permute.xlu0 %2279
        %2281 = vrot.lane.b32.xlu0 %v2148, 92
        %v2282 = vpop.permute.xlu0 %2281
        %2283 = vrot.lane.b32.xlu0 %v2149, 92
        %v2284 = vpop.permute.xlu0 %2283
        %2285 = vrot.lane.b32.xlu0 %v2150, 92
        %v2286 = vpop.permute.xlu0 %2285
        %v2287 = vsel %vm1496, %v2268, %v2270
        %v2288 = vsel %vm1496, %v2270, %v2272
        %v2289 = vsel %vm1496, %v2272, %v2274
        %v2290 = vsel %vm1496, %v2274, %v2276
        %v2291 = vsel %vm1496, %v2276, %v2278
        %v2292 = vsel %vm1496, %v2278, %v2280
        %v2293 = vsel %vm1496, %v2280, %v2282
        %v2294 = vsel %vm1496, %v2282, %v2284
        %v2295 = vsel %vm1496, %v2284, %v2286
        %2296 = vrot.lane.b32.xlu0 %v2117, 60
        %v2297 = vpop.permute.xlu0 %2296
        %2298 = vrot.lane.b32.xlu0 %v2118, 60
        %v2299 = vpop.permute.xlu0 %2298
        %2300 = vrot.lane.b32.xlu0 %v2119, 60
        %v2301 = vpop.permute.xlu0 %2300
        %2302 = vrot.lane.b32.xlu0 %v2120, 60
        %v2303 = vpop.permute.xlu0 %2302
        %2304 = vrot.lane.b32.xlu0 %v2121, 60
        %v2305 = vpop.permute.xlu0 %2304
        %2306 = vrot.lane.b32.xlu0 %v2122, 60
        %v2307 = vpop.permute.xlu0 %2306
        %2308 = vrot.lane.b32.xlu0 %v2123, 60
        %v2309 = vpop.permute.xlu0 %2308
        %2310 = vrot.lane.b32.xlu0 %v2124, 60
        %v2311 = vpop.permute.xlu0 %2310
        %2312 = vrot.lane.b32.xlu0 %v2125, 60
        %v2313 = vpop.permute.xlu0 %2312
        %2314 = vrot.lane.b32.xlu0 %v2126, 60
        %v2315 = vpop.permute.xlu0 %2314
        %v2316 = vsel %vm1530, %v2297, %v2299
        %v2317 = vsel %vm1530, %v2299, %v2301
        %v2318 = vsel %vm1530, %v2301, %v2303
        %v2319 = vsel %vm1530, %v2303, %v2305
        %v2320 = vsel %vm1530, %v2305, %v2307
        %v2321 = vsel %vm1530, %v2307, %v2309
        %v2322 = vsel %vm1530, %v2309, %v2311
        %v2323 = vsel %vm1530, %v2311, %v2313
        %v2324 = vsel %vm1530, %v2313, %v2315
        %2325 = vrot.lane.b32.xlu0 %v2141, 59
        %v2326 = vpop.permute.xlu0 %2325
        %2327 = vrot.lane.b32.xlu0 %v2142, 59
        %v2328 = vpop.permute.xlu0 %2327
        %2329 = vrot.lane.b32.xlu0 %v2143, 59
        %v2330 = vpop.permute.xlu0 %2329
        %2331 = vrot.lane.b32.xlu0 %v2144, 59
        %v2332 = vpop.permute.xlu0 %2331
        %2333 = vrot.lane.b32.xlu0 %v2145, 59
        %v2334 = vpop.permute.xlu0 %2333
        %2335 = vrot.lane.b32.xlu0 %v2146, 59
        %v2336 = vpop.permute.xlu0 %2335
        %2337 = vrot.lane.b32.xlu0 %v2147, 59
        %v2338 = vpop.permute.xlu0 %2337
        %2339 = vrot.lane.b32.xlu0 %v2148, 59
        %v2340 = vpop.permute.xlu0 %2339
        %2341 = vrot.lane.b32.xlu0 %v2149, 59
        %v2342 = vpop.permute.xlu0 %2341
        %2343 = vrot.lane.b32.xlu0 %v2150, 59
        %v2344 = vpop.permute.xlu0 %2343
        %v2345 = vsel %vm1564, %v2326, %v2328
        %v2346 = vsel %vm1564, %v2328, %v2330
        %v2347 = vsel %vm1564, %v2330, %v2332
        %v2348 = vsel %vm1564, %v2332, %v2334
        %v2349 = vsel %vm1564, %v2334, %v2336
        %v2350 = vsel %vm1564, %v2336, %v2338
        %v2351 = vsel %vm1564, %v2338, %v2340
        %v2352 = vsel %vm1564, %v2340, %v2342
        %v2353 = vsel %vm1564, %v2342, %v2344
        %2354 = vrot.lane.b32.xlu0 %v2117, 58
        %v2355 = vpop.permute.xlu0 %2354
        %2356 = vrot.lane.b32.xlu0 %v2118, 58
        %v2357 = vpop.permute.xlu0 %2356
        %2358 = vrot.lane.b32.xlu0 %v2119, 58
        %v2359 = vpop.permute.xlu0 %2358
        %2360 = vrot.lane.b32.xlu0 %v2120, 58
        %v2361 = vpop.permute.xlu0 %2360
        %2362 = vrot.lane.b32.xlu0 %v2121, 58
        %v2363 = vpop.permute.xlu0 %2362
        %2364 = vrot.lane.b32.xlu0 %v2122, 58
        %v2365 = vpop.permute.xlu0 %2364
        %2366 = vrot.lane.b32.xlu0 %v2123, 58
        %v2367 = vpop.permute.xlu0 %2366
        %2368 = vrot.lane.b32.xlu0 %v2124, 58
        %v2369 = vpop.permute.xlu0 %2368
        %2370 = vrot.lane.b32.xlu0 %v2125, 58
        %v2371 = vpop.permute.xlu0 %2370
        %2372 = vrot.lane.b32.xlu0 %v2126, 58
        %v2373 = vpop.permute.xlu0 %2372
        %v2374 = vsel %vm1597, %v2355, %v2357
        %v2375 = vsel %vm1597, %v2357, %v2359
        %v2376 = vsel %vm1597, %v2359, %v2361
        %v2377 = vsel %vm1597, %v2361, %v2363
        %v2378 = vsel %vm1597, %v2363, %v2365
        %v2379 = vsel %vm1597, %v2365, %v2367
        %v2380 = vsel %vm1597, %v2367, %v2369
        %v2381 = vsel %vm1597, %v2369, %v2371
        %v2382 = vsel %vm1597, %v2371, %v2373
        %v2385 = vsel %vm1639, %v2117, %v2171
        %v2389 = vsel %vm1639, %v2118, %v2172
        %v2393 = vsel %vm1639, %v2119, %v2173
        %v2397 = vsel %vm1639, %v2120, %v2174
        %v2401 = vsel %vm1639, %v2121, %v2175
        %v2405 = vsel %vm1639, %v2122, %v2176
        %v2409 = vsel %vm1639, %v2123, %v2177
        %v2413 = vsel %vm1639, %v2124, %v2178
        %v2417 = vsel %vm1639, %v2125, %v2179
        %v2421 = vsel %vm1639, %v2126, %v2170
        %v2425 = vsel %vm1639, %v2200, %v2229
        %v2429 = vsel %vm1639, %v2201, %v2230
        %v2433 = vsel %vm1639, %v2202, %v2231
        %v2437 = vsel %vm1639, %v2203, %v2232
        %v2441 = vsel %vm1639, %v2204, %v2233
        %v2445 = vsel %vm1639, %v2205, %v2234
        %v2449 = vsel %vm1639, %v2206, %v2235
        %v2453 = vsel %vm1639, %v2207, %v2236
        %v2457 = vsel %vm1639, %v2208, %v2237
        %v2461 = vsel %vm1639, %v2199, %v2228
        %v2465 = vsel %vm1639, %v2258, %v2287
        %v2469 = vsel %vm1639, %v2259, %v2288
        %v2473 = vsel %vm1639, %v2260, %v2289
        %v2477 = vsel %vm1639, %v2261, %v2290
        %v2481 = vsel %vm1639, %v2262, %v2291
        %v2485 = vsel %vm1639, %v2263, %v2292
        %v2489 = vsel %vm1639, %v2264, %v2293
        %v2493 = vsel %vm1639, %v2265, %v2294
        %v2497 = vsel %vm1639, %v2266, %v2295
        %v2501 = vsel %vm1639, %v2257, %v2286
        %v2505 = vsel %vm1639, %v2316, %v2345
        %v2509 = vsel %vm1639, %v2317, %v2346
        %v2513 = vsel %vm1639, %v2318, %v2347
        %v2517 = vsel %vm1639, %v2319, %v2348
        %v2521 = vsel %vm1639, %v2320, %v2349
        %v2525 = vsel %vm1639, %v2321, %v2350
        %v2529 = vsel %vm1639, %v2322, %v2351
        %v2533 = vsel %vm1639, %v2323, %v2352
        %v2537 = vsel %vm1639, %v2324, %v2353
        %v2541 = vsel %vm1639, %v2315, %v2344
        %2544 = vset.pattern.permute.xlu0 0
        %2545 = vperm.xlu0 %2544, %v2128
        %v2546 = vpop.permute.xlu0 %2545
        %vm2548 = vcmask 588800
        %v2550 = vsel %vm2548, %v2127, 0
        %v2553 = vsel %vm1639, %v2374, 0
        %v2556 = vsel %vm1639, %v2375, 0
        %v2559 = vsel %vm1639, %v2376, 0
        %v2562 = vsel %vm1639, %v2377, 0
        %v2565 = vsel %vm1639, %v2378, 0
        %v2568 = vsel %vm1639, %v2379, 0
        %v2571 = vsel %vm1639, %v2380, 0
        %v2574 = vsel %vm1639, %v2381, 0
        %v2577 = vsel %vm1639, %v2382, 0
        %v2580 = vsel %vm1639, %v2373, 0
        %2582 = vmatprep.subr.bf16.mxu0 %v2389
        %2583 = vmatpush1.bf16.msra.mxu0 %v2385
        %2584 = vmatprep.subr.bf16.mxu0 %v2429
        %2585 = vmatpush1.bf16.msra.mxu0 %v2425
        %2586 = vmatprep.subr.bf16.mxu0 %v2469
        %2587 = vmatpush1.bf16.msra.mxu0 %v2465
        %2588 = vmatprep.subr.bf16.mxu0 %v2509
        %2589 = vmatpush1.bf16.msra.mxu0 %v2505
        %2590 = vmatprep.subr.bf16.mxu0 %v2556
        %2591 = vmatpush1.bf16.msra.mxu0 %v2553
        %2592 = vmatprep.subr.bf16.mxu0 0
        %2593 = vmatpush1.bf16.msra.mxu0 0
        %2594 = vmatprep.subr.bf16.mxu0 0
        %2595 = vmatpush1.bf16.msra.mxu0 0
        %2596 = vmatprep.subr.bf16.mxu0 0
        %2597 = vmatpush1.bf16.msra.mxu0 0
        %2598 = vmatprep.subr.bf16.mxu0 0
        %2599 = vmatpush1.bf16.msra.mxu0 0
        %2600 = vmatprep.subr.bf16.mxu0 0
        %2601 = vmatpush1.bf16.msra.mxu0 0
        %2602 = vmatprep.subr.bf16.mxu0 0
        %2603 = vmatpush1.bf16.msra.mxu0 0
        %2604 = vmatprep.subr.bf16.mxu0 0
        %2605 = vmatpush1.bf16.msra.mxu0 0
        %2606 = vmatprep.subr.bf16.mxu0 0
        %2607 = vmatpush1.bf16.msra.mxu0 0
        %2608 = vmatprep.subr.bf16.mxu0 0
        %2609 = vmatpush1.bf16.msra.mxu0 0
        %2610 = vmatprep.subr.bf16.mxu0 0
        %2611 = vmatpush1.bf16.msra.mxu0 0
        %2612 = vmatprep.subr.bf16.mxu0 0
        %2613 = vmatpush1.bf16.msra.mxu0 0
        %2614 = vmatprep.mubr.bf16.mxu0 0
        %2615 = vmatmul.mubr.bf16.gmra.mrb[0].mxu0 %v2550
        %v2616 = vpop.f32.mrb[0].mxu0
        %v2617 = vadd.f32 %v2546, %v2616
        %v2618 = vpop.f32.mrb[0].mxu0
        %v2619 = vadd.f32 %v2546, %v2618
        %v2620 = vpop.f32.mrb[0].mxu0
        %v2621 = vpop.f32.mrb[0].mxu0
        %2622 = vdwg.mxu0
        %2623 = vmatprep.subr.bf16.mxu0 %v2397
        %2624 = vmatpush1.bf16.msra.mxu0 %v2393
        %2625 = vmatprep.subr.bf16.mxu0 %v2437
        %2626 = vmatpush1.bf16.msra.mxu0 %v2433
        %2627 = vmatprep.subr.bf16.mxu0 %v2477
        %2628 = vmatpush1.bf16.msra.mxu0 %v2473
        %2629 = vmatprep.subr.bf16.mxu0 %v2517
        %2630 = vmatpush1.bf16.msra.mxu0 %v2513
        %2631 = vmatprep.subr.bf16.mxu0 %v2562
        %2632 = vmatpush1.bf16.msra.mxu0 %v2559
        %2633 = vmatprep.subr.bf16.mxu0 0
        %2634 = vmatpush1.bf16.msra.mxu0 0
        %2635 = vmatprep.subr.bf16.mxu0 0
        %2636 = vmatpush1.bf16.msra.mxu0 0
        %2637 = vmatprep.subr.bf16.mxu0 0
        %2638 = vmatpush1.bf16.msra.mxu0 0
        %2639 = vmatprep.subr.bf16.mxu0 0
        %2640 = vmatpush1.bf16.msra.mxu0 0
        %2641 = vmatprep.subr.bf16.mxu0 0
        %2642 = vmatpush1.bf16.msra.mxu0 0
        %2643 = vmatprep.subr.bf16.mxu0 0
        %2644 = vmatpush1.bf16.msra.mxu0 0
        %2645 = vmatprep.subr.bf16.mxu0 0
        %2646 = vmatpush1.bf16.msra.mxu0 0
        %2647 = vmatprep.subr.bf16.mxu0 0
        %2648 = vmatpush1.bf16.msra.mxu0 0
        %2649 = vmatprep.subr.bf16.mxu0 0
        %2650 = vmatpush1.bf16.msra.mxu0 0
        %2651 = vmatprep.subr.bf16.mxu0 0
        %2652 = vmatpush1.bf16.msra.mxu0 0
        %2653 = vmatprep.subr.bf16.mxu0 0
        %2654 = vmatpush1.bf16.msra.mxu0 0
        %2655 = vmatprep.mubr.bf16.mxu0 0
        %2656 = vmatmul.mubr.bf16.gmra.mrb[0].mxu0 %v2550
        %v2657 = vpop.f32.mrb[0].mxu0
        %v2658 = vadd.f32 %v2546, %v2657
        %v2659 = vpop.f32.mrb[0].mxu0
        %v2660 = vadd.f32 %v2546, %v2659
        %v2661 = vpop.f32.mrb[0].mxu0
        %v2662 = vpop.f32.mrb[0].mxu0
        %2663 = vdwg.mxu0
        %2664 = vmatprep.subr.bf16.mxu0 %v2405
        %2665 = vmatpush1.bf16.msra.mxu0 %v2401
        %2666 = vmatprep.subr.bf16.mxu0 %v2445
        %2667 = vmatpush1.bf16.msra.mxu0 %v2441
        %2668 = vmatprep.subr.bf16.mxu0 %v2485
        %2669 = vmatpush1.bf16.msra.mxu0 %v2481
        %2670 = vmatprep.subr.bf16.mxu0 %v2525
        %2671 = vmatpush1.bf16.msra.mxu0 %v2521
        %2672 = vmatprep.subr.bf16.mxu0 %v2568
        %2673 = vmatpush1.bf16.msra.mxu0 %v2565
        %2674 = vmatprep.subr.bf16.mxu0 0
        %2675 = vmatpush1.bf16.msra.mxu0 0
        %2676 = vmatprep.subr.bf16.mxu0 0
        %2677 = vmatpush1.bf16.msra.mxu0 0
        %2678 = vmatprep.subr.bf16.mxu0 0
        %2679 = vmatpush1.bf16.msra.mxu0 0
        %2680 = vmatprep.subr.bf16.mxu0 0
        %2681 = vmatpush1.bf16.msra.mxu0 0
        %2682 = vmatprep.subr.bf16.mxu0 0
        %2683 = vmatpush1.bf16.msra.mxu0 0
        %2684 = vmatprep.subr.bf16.mxu0 0
        %2685 = vmatpush1.bf16.msra.mxu0 0
        %2686 = vmatprep.subr.bf16.mxu0 0
        %2687 = vmatpush1.bf16.msra.mxu0 0
        %2688 = vmatprep.subr.bf16.mxu0 0
        %2689 = vmatpush1.bf16.msra.mxu0 0
        %2690 = vmatprep.subr.bf16.mxu0 0
        %2691 = vmatpush1.bf16.msra.mxu0 0
        %2692 = vmatprep.subr.bf16.mxu0 0
        %2693 = vmatpush1.bf16.msra.mxu0 0
        %2694 = vmatprep.subr.bf16.mxu0 0
        %2695 = vmatpush1.bf16.msra.mxu0 0
        %2696 = vmatprep.mubr.bf16.mxu0 0
        %2697 = vmatmul.mubr.bf16.gmra.mrb[0].mxu0 %v2550
        %v2698 = vpop.f32.mrb[0].mxu0
        %v2699 = vadd.f32 %v2546, %v2698
        %v2700 = vpop.f32.mrb[0].mxu0
        %v2701 = vadd.f32 %v2546, %v2700
        %v2702 = vpop.f32.mrb[0].mxu0
        %v2703 = vpop.f32.mrb[0].mxu0
        %2704 = vdwg.mxu0
        %2705 = vmatprep.subr.bf16.mxu0 %v2413
        %2706 = vmatpush1.bf16.msra.mxu0 %v2409
        %2707 = vmatprep.subr.bf16.mxu0 %v2453
        %2708 = vmatpush1.bf16.msra.mxu0 %v2449
        %2709 = vmatprep.subr.bf16.mxu0 %v2493
        %2710 = vmatpush1.bf16.msra.mxu0 %v2489
        %2711 = vmatprep.subr.bf16.mxu0 %v2533
        %2712 = vmatpush1.bf16.msra.mxu0 %v2529
        %2713 = vmatprep.subr.bf16.mxu0 %v2574
        %2714 = vmatpush1.bf16.msra.mxu0 %v2571
        %2715 = vmatprep.subr.bf16.mxu0 0
        %2716 = vmatpush1.bf16.msra.mxu0 0
        %2717 = vmatprep.subr.bf16.mxu0 0
        %2718 = vmatpush1.bf16.msra.mxu0 0
        %2719 = vmatprep.subr.bf16.mxu0 0
        %2720 = vmatpush1.bf16.msra.mxu0 0
        %2721 = vmatprep.subr.bf16.mxu0 0
        %2722 = vmatpush1.bf16.msra.mxu0 0
        %2723 = vmatprep.subr.bf16.mxu0 0
        %2724 = vmatpush1.bf16.msra.mxu0 0
        %2725 = vmatprep.subr.bf16.mxu0 0
        %2726 = vmatpush1.bf16.msra.mxu0 0
        %2727 = vmatprep.subr.bf16.mxu0 0
        %2728 = vmatpush1.bf16.msra.mxu0 0
        %2729 = vmatprep.subr.bf16.mxu0 0
        %2730 = vmatpush1.bf16.msra.mxu0 0
        %2731 = vmatprep.subr.bf16.mxu0 0
        %2732 = vmatpush1.bf16.msra.mxu0 0
        %2733 = vmatprep.subr.bf16.mxu0 0
        %2734 = vmatpush1.bf16.msra.mxu0 0
        %2735 = vmatprep.subr.bf16.mxu0 0
        %2736 = vmatpush1.bf16.msra.mxu0 0
        %2737 = vmatprep.mubr.bf16.mxu0 0
        %2738 = vmatmul.mubr.bf16.gmra.mrb[0].mxu0 %v2550
        %v2739 = vpop.f32.mrb[0].mxu0
        %v2740 = vadd.f32 %v2546, %v2739
        %v2741 = vpop.f32.mrb[0].mxu0
        %v2742 = vadd.f32 %v2546, %v2741
        %v2743 = vpop.f32.mrb[0].mxu0
        %v2744 = vpop.f32.mrb[0].mxu0
        %2745 = vdwg.mxu0
        %2746 = vmatprep.subr.bf16.mxu0 %v2421
        %2747 = vmatpush1.bf16.msra.mxu0 %v2417
        %2748 = vmatprep.subr.bf16.mxu0 %v2461
        %2749 = vmatpush1.bf16.msra.mxu0 %v2457
        %2750 = vmatprep.subr.bf16.mxu0 %v2501
        %2751 = vmatpush1.bf16.msra.mxu0 %v2497
        %2752 = vmatprep.subr.bf16.mxu0 %v2541
        %2753 = vmatpush1.bf16.msra.mxu0 %v2537
        %2754 = vmatprep.subr.bf16.mxu0 %v2580
        %2755 = vmatpush1.bf16.msra.mxu0 %v2577
        %2756 = vmatprep.subr.bf16.mxu0 0
        %2757 = vmatpush1.bf16.msra.mxu0 0
        %2758 = vmatprep.subr.bf16.mxu0 0
        %2759 = vmatpush1.bf16.msra.mxu0 0
        %2760 = vmatprep.subr.bf16.mxu0 0
        %2761 = vmatpush1.bf16.msra.mxu0 0
        %2762 = vmatprep.subr.bf16.mxu0 0
        %2763 = vmatpush1.bf16.msra.mxu0 0
        %2764 = vmatprep.subr.bf16.mxu0 0
        %2765 = vmatpush1.bf16.msra.mxu0 0
        %2766 = vmatprep.subr.bf16.mxu0 0
        %2767 = vmatpush1.bf16.msra.mxu0 0
        %2768 = vmatprep.subr.bf16.mxu0 0
        %2769 = vmatpush1.bf16.msra.mxu0 0
        %2770 = vmatprep.subr.bf16.mxu0 0
        %2771 = vmatpush1.bf16.msra.mxu0 0
        %2772 = vmatprep.subr.bf16.mxu0 0
        %2773 = vmatpush1.bf16.msra.mxu0 0
        %2774 = vmatprep.subr.bf16.mxu0 0
        %2775 = vmatpush1.bf16.msra.mxu0 0
        %2776 = vmatprep.subr.bf16.mxu0 0
        %2777 = vmatpush1.bf16.msra.mxu0 0
        %2778 = vmatprep.mubr.bf16.mxu0 0
        %2779 = vmatmul.mubr.bf16.gmra.mrb[0].mxu0 %v2550
        %v2780 = vpop.f32.mrb[0].mxu0
        %v2781 = vadd.f32 %v2546, %v2780
        %v2782 = vpop.f32.mrb[0].mxu0
        %v2783 = vadd.f32 %v2546, %v2782
        %v2784 = vpop.f32.mrb[0].mxu0
        %v2785 = vpop.f32.mrb[0].mxu0
        %2786 = vdwg.mxu0
        %v2787 = vmax.f32 %v2617, 0.0
        %v2788 = vmax.f32 %v2619, 0.0
        %v2789 = vmax.f32 %v2658, 0.0
        %v2790 = vmax.f32 %v2660, 0.0
        %v2791 = vmax.f32 %v2699, 0.0
        %v2792 = vmax.f32 %v2701, 0.0
        %v2793 = vmax.f32 %v2740, 0.0
        %v2794 = vmax.f32 %v2742, 0.0
        %v2795 = vmax.f32 %v2781, 0.0
        %v2796 = vmax.f32 %v2783, 0.0
        %2798 = vset.pattern.permute.xlu0 0
        %2799 = vperm.xlu0 %2798, %v2129
        %v2800 = vpop.permute.xlu0 %2799
        %v2802 = vmul.f32 %v2787, %v2800
        %v2803 = vmul.f32 %v2788, %v2800
        %v2804 = vmul.f32 %v2789, %v2800
        %v2805 = vmul.f32 %v2790, %v2800
        %v2806 = vmul.f32 %v2791, %v2800
        %v2807 = vmul.f32 %v2792, %v2800
        %v2808 = vmul.f32 %v2793, %v2800
        %v2809 = vmul.f32 %v2794, %v2800
        %v2810 = vmul.f32 %v2795, %v2800
        %v2811 = vmul.f32 %v2796, %v2800
        %2813 = vset.pattern.permute.xlu0 0
        %2814 = vperm.xlu0 %2813, %v2130
        %v2815 = vpop.permute.xlu0 %2814
        %v2817 = vadd.f32 %v2802, %v2815
        %v2818 = vadd.f32 %v2803, %v2815
        %v2819 = vadd.f32 %v2804, %v2815
        %v2820 = vadd.f32 %v2805, %v2815
        %v2821 = vadd.f32 %v2806, %v2815
        %v2822 = vadd.f32 %v2807, %v2815
        %v2823 = vadd.f32 %v2808, %v2815
        %v2824 = vadd.f32 %v2809, %v2815
        %v2825 = vadd.f32 %v2810, %v2815
        %v2826 = vadd.f32 %v2811, %v2815
        %v2837 = vcombine.low %v2817, %v2818
        %v2838 = vcombine.low %v2819, %v2820
        %v2839 = vcombine.low %v2821, %v2822
        %v2840 = vcombine.low %v2823, %v2824
        %v2841 = vcombine.low %v2825, %v2826
        %2847 = vst [vmem:[%s406] sm:$0xff] %v2837
        %2848 = vst [vmem:[%s406 + $0x8] sm:$0xff] %v2838
        %2849 = vst [vmem:[%s406 + $0x10] sm:$0xff] %v2839
        %2850 = vst [vmem:[%s406 + $0x18] sm:$0xff] %v2840
        %vm2851 = vcmask 31748
        %vm2852 = vmor %vm2851, %vm1639
        %2853 = vst.msk [vmem:[%s406 + $0x20] sm:$0xff] %vm2852, %v2841
        %s2854 = sand.u32 %s291, 1
        %s2855 = scalar_lea.sflag [#allocation4], %s2854
        %s2856 = sand.u32 %s291, 1
        %s2857 = smul.addr %s2856, 40
        %s2858 = scalar_lea.vmem [#allocation3], %s2857
        // Predicated region
        $region69: #{tpu_custom_call.1} parent=67 // pred_check
          %p2859 = pneg %p301
        $region70: #{tpu_custom_call.1} parent=67 // pred_check_branch
          %2861 = sbr.rel (%p2859) target = $region72
        $region71: #{tpu_custom_call.1} parent=67 // pred_region
          %s2863 = ssub.s32 640, 640
          %2864 = vsyncadd %s2855, %s2863
          %s2865 = smul.addr %s26, 10
          %s2866 = smul.addr %s2865, 64
          %s2867 = scalar_lea.hbm %s12, %s2866
          %s2869 = sshll.u32 %s2858, 4
          %s2870 = int_to_ptr.vmem [resolvable:$true] %s2869
          %2872 = dma.vmem_to_hbm [thread:$0]  %s2870, 640, %s2867, %s2855
        $region72: #{tpu_custom_call.1} parent=67 // pred_fallthru
          _
      $region68: #{tpu_custom_call.1} parent=5 // pred_fallthru
        _
      %p2873 = scmp.le.s32.totalorder 2, %s21
      // Predicated region
      $region73: #{tpu_custom_call.1} parent=5 // pred_check
        %p2874 = pneg %p2873
      $region74: #{tpu_custom_call.1} parent=5 // pred_check_branch
        %2876 = sbr.rel (%p2874) target = $region76
      $region75: #{tpu_custom_call.1} parent=5 // pred_region
        %s2877 = ssub.s32 %s21, 2
        // Predicated region
        $region77: #{tpu_custom_call.1} parent=75 // pred_check
          %p2878 = pneg %p307
        $region78: #{tpu_custom_call.1} parent=75 // pred_check_branch
          %2880 = sbr.rel (%p2878) target = $region80
        $region79: #{tpu_custom_call.1} parent=75 // pred_region
          %s2881 = sand.u32 %s292, 1
          %s2882 = scalar_lea.sflag [#allocation4], %s2881
          %s2883 = sand.u32 %s292, 1
          %s2884 = smul.addr %s2883, 40
          %s2885 = scalar_lea.vmem [#allocation3], %s2884
          %2886 = dma.done %s2882, 640
        $region80: #{tpu_custom_call.1} parent=75 // pred_fallthru
          _
      $region76: #{tpu_custom_call.1} parent=5 // pred_fallthru
        _
    $region6: #{tpu_custom_call.1} parent=1 // loop_footer
      %s25 = sadd.s32 1, %s21
    $region7: #{tpu_custom_call.1} parent=1 // loop_footer_branch
      %20 = sbr.rel target = $region3
    $region8: #{tpu_custom_call.1} parent=1 // loop_exit
      _
    %2887 = vsyncpa [#allocation4], 1
    %s2888 = scalar_lea.sflag [#allocation4], 1
    %2889 = vsyncpa %s2888, 1

</llo_original>
